<compile_context>
chip_gen: v7x
topology: tpu7x:2x2x1
jax: 0.10.0
libtpu: 0.0.40
codegen_flags: <defaults>
</compile_context>

<pallas_src>
import jax
import jax.numpy as jnp
from jax.experimental import pallas as pl
from jax.experimental.pallas import tpu as pltpu


# ----------------------------------------------------------------------------
# Pallas kernel: grid = (2,)  — program 0 = forward pass, program 1 = backward.
# ----------------------------------------------------------------------------
def _gru_bidir_kernel(len_ref, gi_ref, h0_ref, wh_ref, bhn_ref, out_ref, hid_ref):
    """
    len_ref : (Bp, 1)      int32  valid lengths (0 for padded batch rows)
    gi_ref  : (T, Bp, 3Hp) f32    precomputed x @ [W_ir|W_iz|W_in] + b_i  (per dir)
    h0_ref  : (Bp, Hp)     f32    initial hidden state                    (per dir)
    wh_ref  : (Hp, 3Hp)    f32    fused [W_hr|W_hz|W_hn]                  (per dir)
    bhn_ref : (1, Hp)      f32    b_hn (kept separate: it is gated by r)  (per dir)
    out_ref : (T, Bp, Hp)  f32    summed fwd+bwd outputs (block resident across grid)
    hid_ref : (Bp, Hp)     f32    final hidden state                      (per dir)
    """
    d = pl.program_id(0)
    T = gi_ref.shape[0]
    Hp = h0_ref.shape[-1]

    def run(reverse: bool, accumulate: bool):
        lengths = len_ref[...]                               # (Bp, 1)
        h = h0_ref[...]                                      # (Bp, Hp)
        steps = range(T - 1, -1, -1) if reverse else range(T)
        # Static unroll: T is small; indices are compile-time constants so every
        # load/store is a full-vreg, lane-dense access.  For large T this would
        # become a lax.fori_loop with dynamic indexing instead.
        for t in steps:
            gi = gi_ref[t]                                   # (Bp, 3Hp), b_i folded in
            gh = jnp.dot(h, wh_ref[...],
                         preferred_element_type=jnp.float32)  # one MXU push -> (Bp,3Hp)
            r = jax.nn.sigmoid(gi[:, :Hp] + gh[:, :Hp])
            z = jax.nn.sigmoid(gi[:, Hp:2 * Hp] + gh[:, Hp:2 * Hp])
            n = jnp.tanh(gi[:, 2 * Hp:] + r * (gh[:, 2 * Hp:] + bhn_ref[...]))
            h_new = (1.0 - z) * n + z * h
            valid = lengths > t                              # packed-sequence mask
            h = jnp.where(valid, h_new, h)                   # freeze state on padding
            o = jnp.where(valid, h_new, 0.0)                 # pad_packed padding_value=0
            if accumulate:
                out_ref[t] = out_ref[t] + o                  # bwd adds onto fwd result
            else:
                out_ref[t] = o
        hid_ref[...] = h                                     # single final-state store

    @pl.when(d == 0)
    def _():
        run(reverse=False, accumulate=False)

    @pl.when(d == 1)
    def _():
        run(reverse=True, accumulate=True)


# ----------------------------------------------------------------------------
# Wrapper: Encoder.forward
# ----------------------------------------------------------------------------
def _pad_axis(a, axis, target):
    if a.shape[axis] == target:
        return a
    pads = [(0, 0)] * a.ndim
    pads[axis] = (0, target - a.shape[axis])
    return jnp.pad(a, pads)


def encoder_forward(params, embedded_index_seq, index_seq_length, h0=None):
    """Returns (outputs, hidden):
         outputs : (B, T, H) = forward_out + backward_out  (padded steps are 0)
         hidden  : (2, B, H) = [forward final state, backward final state]
    """
    B, T, E = embedded_index_seq.shape
    H = params["w_ir"].shape[-1]
    Bp = max(8, ((B + 7) // 8) * 8)            # sublane padding
    Hp = max(128, ((H + 127) // 128) * 128)    # lane padding

    f32 = jnp.float32
    x = _pad_axis(embedded_index_seq.astype(f32), 0, Bp)               # (Bp, T, E)
    lengths = _pad_axis(index_seq_length.astype(jnp.int32), 0, Bp)     # (Bp,)
    lengths = lengths.reshape(Bp, 1)

    # Gate-concatenated, lane-padded weights/biases:  [ r | z | n ] along last axis.
    w_i = jnp.concatenate([_pad_axis(params["w_ir"], 2, Hp),
                           _pad_axis(params["w_iz"], 2, Hp),
                           _pad_axis(params["w_in"], 2, Hp)], axis=-1)   # (2, E, 3Hp)
    w_h = jnp.concatenate([_pad_axis(params["w_hr"], 2, Hp),
                           _pad_axis(params["w_hz"], 2, Hp),
                           _pad_axis(params["w_hn"], 2, Hp)], axis=-1)   # (2, H, 3Hp)
    w_h = _pad_axis(w_h, 1, Hp)                                          # (2, Hp, 3Hp)
    b_i = jnp.concatenate([_pad_axis(params["b_r"], 2, Hp),
                           _pad_axis(params["b_z"], 2, Hp),
                           _pad_axis(params["b_in"], 2, Hp)], axis=-1)   # (2, 1, 3Hp)
    b_hn = _pad_axis(params["b_hn"], 2, Hp)                              # (2, 1, Hp)

    # Hoisted input-side projection: one big GEMM over all timesteps & directions,
    # input biases folded in.  (TODO(synk): cast to bf16 for large E/H; kept f32
    # here to stay within the 1e-4 verification tolerance.)
    gi = jnp.einsum("bte,deh->dtbh", x, w_i,
                    precision=jax.lax.Precision.HIGHEST) + b_i[:, None]  # (2,T,Bp,3Hp)

    if h0 is None:
        h0p = jnp.zeros((2, Bp, Hp), f32)
    else:
        h0p = _pad_axis(_pad_axis(h0.astype(f32), 1, Bp), 2, Hp)

    out_pad, hid_pad = pl.pallas_call(
        _gru_bidir_kernel,
        grid=(2,),
        in_specs=[
            pl.BlockSpec((Bp, 1), lambda d: (0, 0)),                       # lengths
            pl.BlockSpec((None, T, Bp, 3 * Hp), lambda d: (d, 0, 0, 0)),   # gi
            pl.BlockSpec((None, Bp, Hp), lambda d: (d, 0, 0)),             # h0
            pl.BlockSpec((None, Hp, 3 * Hp), lambda d: (d, 0, 0)),         # fused W_h
            pl.BlockSpec((None, 1, Hp), lambda d: (d, 0, 0)),              # b_hn
        ],
        out_specs=[
            pl.BlockSpec((T, Bp, Hp), lambda d: (0, 0, 0)),   # summed outputs (resident)
            pl.BlockSpec((None, Bp, Hp), lambda d: (d, 0, 0)),  # per-dir final hidden
        ],
        out_shape=[
            jax.ShapeDtypeStruct((T, Bp, Hp), f32),
            jax.ShapeDtypeStruct((2, Bp, Hp), f32),
        ],
        compiler_params=pltpu.CompilerParams(
            # direction axis revisits (accumulates into) the output block -> arbitrary
            dimension_semantics=("arbitrary",)),
    )(lengths, gi, h0p, w_h, b_hn)

    outputs = jnp.transpose(out_pad[:, :B, :H], (1, 0, 2))   # (B, T, H)
    hidden = hid_pad[:, :B, :H]                              # (2, B, H)
    return outputs, hidden


# ----------------------------------------------------------------------------
# Deterministic synthetic parameters (PyTorch-style U(-1/sqrt(H), 1/sqrt(H)))
# ----------------------------------------------------------------------------
def init_params(key, embedding_dim, hidden_size):
    E, H = embedding_dim, hidden_size
    bound = 1.0 / (H ** 0.5)
    keys = jax.random.split(key, 10)
    u = lambda k, s: jax.random.uniform(k, s, jnp.float32, -bound, bound)
    # leading axis 2 = [forward, backward] direction
    return {
        "w_ir": u(keys[0], (2, E, H)), "w_iz": u(keys[1], (2, E, H)), "w_in": u(keys[2], (2, E, H)),
        "w_hr": u(keys[3], (2, H, H)), "w_hz": u(keys[4], (2, H, H)), "w_hn": u(keys[5], (2, H, H)),
        "b_r":  u(keys[6], (2, 1, H)), "b_z":  u(keys[7], (2, 1, H)),
        "b_in": u(keys[8], (2, 1, H)), "b_hn": u(keys[9], (2, 1, H)),
    }


# ----------------------------------------------------------------------------
# Pure-JAX reference (same packed-GRU semantics) for a correctness check.
# ----------------------------------------------------------------------------
def _reference(params, x_bte, lengths, h0):
    B, T, E = x_bte.shape
    H = params["w_ir"].shape[-1]
    x_tbe = jnp.transpose(x_bte, (1, 0, 2)).astype(jnp.float32)

    def run_dir(d, reverse):
        Wir, Wiz, Win = params["w_ir"][d], params["w_iz"][d], params["w_in"][d]
        Whr, Whz, Whn = params["w_hr"][d], params["w_hz"][d], params["w_hn"][d]
        br, bz, bin_, bhn = (params["b_r"][d], params["b_z"][d],
                             params["b_in"][d], params["b_hn"][d])
        ts = jnp.arange(T)[::-1] if reverse else jnp.arange(T)

        def step(h, t):
            x = x_tbe[t]
            r = jax.nn.sigmoid(x @ Wir + h @ Whr + br)
            z = jax.nn.sigmoid(x @ Wiz + h @ Whz + bz)
            n = jnp.tanh(x @ Win + bin_ + r * (h @ Whn + bhn))
            h_new = (1.0 - z) * n + z * h
            valid = (lengths > t)[:, None]
            h_carry = jnp.where(valid, h_new, h)
            out = jnp.where(valid, h_new, 0.0)
            return h_carry, (t, out)

        h_fin, (tt, outs) = jax.lax.scan(step, h0[d], ts)
        out_time = jnp.zeros((T, B, H), jnp.float32).at[tt].set(outs)
        return out_time, h_fin

    of, hf = run_dir(0, reverse=False)
    ob, hb = run_dir(1, reverse=True)
    outputs = jnp.transpose(of + ob, (1, 0, 2))
    hidden = jnp.stack([hf, hb], axis=0)
    return outputs, hidden


if __name__ == "__main__":
    B, T, E, H = 2, 8, 16, 32

    key = jax.random.PRNGKey(0)
    kx, kp = jax.random.split(key)
    params = init_params(kp, E, H)

    # zero-padded batch; lengths sorted descending with lengths[0] == T
    # (matches pack_padded_sequence(enforce_sorted=True) and keeps T_max == T)
    lengths = jnp.array([T, 5], dtype=jnp.int32)
    x = jax.random.normal(kx, (B, T, E), jnp.float32)
    mask = (jnp.arange(T)[None, :] < lengths[:, None]).astype(jnp.float32)
    x = x * mask[:, :, None]

    outputs, hidden = encoder_forward(params, x, lengths, h0=None)
    jax.block_until_ready((outputs, hidden))

    ref_out, ref_hid = _reference(params, x, lengths, jnp.zeros((2, B, H), jnp.float32))
    assert outputs.shape == (B, T, H) and hidden.shape == (2, B, H)
    assert jnp.allclose(outputs, ref_out, atol=1e-4, rtol=1e-4)
    assert jnp.allclose(hidden, ref_hid, atol=1e-4, rtol=1e-4)

    print("KERNEL_OK")
</pallas_src>

<mosaic_0001>
module attributes {stable_mosaic.version = 11 : i64} {
  func.func @_gru_bidir_kernel(%arg0: i32, %arg1: memref<8x1xi32, #tpu.memory_space<vmem>>, %arg2: memref<1x8x8x384xf32, #tpu.memory_space<vmem>>, %arg3: memref<1x8x128xf32, #tpu.memory_space<vmem>>, %arg4: memref<1x128x384xf32, #tpu.memory_space<vmem>>, %arg5: memref<1x1x128xf32, #tpu.memory_space<vmem>>, %arg6: memref<8x8x128xf32, #tpu.memory_space<vmem>>, %arg7: memref<1x8x128xf32, #tpu.memory_space<vmem>>) attributes {dimension_semantics = [#tpu.dimension_semantics<arbitrary>], iteration_bounds = array<i64: 2>, scalar_prefetch = 0 : i64, scratch_operands = 0 : i64, tpu.core_type = #tpu.core_type<tc>, window_params = [{pipeline_mode = #tpu.pipeline_mode<synchronous>, transform_indices = @transform_0, window_bounds = array<i64: 8, 1>}, {transform_indices = @transform_1, window_bounds = array<i64: 1, 8, 8, 384>}, {transform_indices = @transform_2, window_bounds = array<i64: 1, 8, 128>}, {transform_indices = @transform_3, window_bounds = array<i64: 1, 128, 384>}, {transform_indices = @transform_4, window_bounds = array<i64: 1, 1, 128>}, {pipeline_mode = #tpu.pipeline_mode<synchronous>, transform_indices = @transform_5, window_bounds = array<i64: 8, 8, 128>}, {transform_indices = @transform_6, window_bounds = array<i64: 1, 8, 128>}]} {
    %c0_i32 = arith.constant 0 : i32
    %0 = arith.cmpi eq, %arg0, %c0_i32 : i32
    %1 = arith.extui %0 : i1 to i32
    %c0_i32_0 = arith.constant 0 : i32
    %2 = arith.cmpi ne, %1, %c0_i32_0 : i32
    scf.if %2 {
      %c0 = arith.constant 0 : index
      %c0_2 = arith.constant 0 : index
      %6 = vector.load %arg1[%c0, %c0_2] : memref<8x1xi32, #tpu.memory_space<vmem>>, vector<8x1xi32>
      %c0_3 = arith.constant 0 : index
      %c0_4 = arith.constant 0 : index
      %c0_5 = arith.constant 0 : index
      %7 = vector.load %arg3[%c0_3, %c0_4, %c0_5] : memref<1x8x128xf32, #tpu.memory_space<vmem>>, vector<1x8x128xf32>
      %8 = vector.shape_cast %7 : vector<1x8x128xf32> to vector<8x128xf32>
      %c0_6 = arith.constant 0 : index
      %c0_7 = arith.constant 0 : index
      %c0_8 = arith.constant 0 : index
      %c0_9 = arith.constant 0 : index
      %9 = vector.load %arg2[%c0_6, %c0_7, %c0_8, %c0_9] : memref<1x8x8x384xf32, #tpu.memory_space<vmem>>, vector<1x1x8x384xf32>
      %10 = vector.shape_cast %9 : vector<1x1x8x384xf32> to vector<8x384xf32>
      %c0_10 = arith.constant 0 : index
      %c0_11 = arith.constant 0 : index
      %c0_12 = arith.constant 0 : index
      %11 = vector.load %arg4[%c0_10, %c0_11, %c0_12] : memref<1x128x384xf32, #tpu.memory_space<vmem>>, vector<1x128x384xf32>
      %12 = vector.shape_cast %11 : vector<1x128x384xf32> to vector<128x384xf32>
      %cst = arith.constant dense<0.000000e+00> : vector<8x384xf32>
      %13 = tpu.matmul %8, %12, %cst {dimension_numbers = #tpu.dot_dimension_numbers<[1], [0], [0], [1], [0, 0, 1, 1], [], []>} : vector<8x128xf32>, vector<128x384xf32>, vector<8x384xf32> -> vector<8x384xf32>
      %14 = vector.extract_strided_slice %10 {offsets = [0, 0], sizes = [8, 128], strides = [1, 1]} : vector<8x384xf32> to vector<8x128xf32>
      %15 = vector.extract_strided_slice %13 {offsets = [0, 0], sizes = [8, 128], strides = [1, 1]} : vector<8x384xf32> to vector<8x128xf32>
      %16 = arith.addf %14, %15 : vector<8x128xf32>
      %17 = arith.negf %16 : vector<8x128xf32>
      %18 = math.exp %17 : vector<8x128xf32>
      %cst_13 = arith.constant 1.000000e+00 : f32
      %19 = vector.broadcast %cst_13 : f32 to vector<8x128xf32>
      %20 = arith.addf %19, %18 : vector<8x128xf32>
      %21 = arith.divf %19, %20 : vector<8x128xf32>
      %22 = vector.extract_strided_slice %10 {offsets = [0, 128], sizes = [8, 128], strides = [1, 1]} : vector<8x384xf32> to vector<8x128xf32>
      %23 = vector.extract_strided_slice %13 {offsets = [0, 128], sizes = [8, 128], strides = [1, 1]} : vector<8x384xf32> to vector<8x128xf32>
      %24 = arith.addf %22, %23 : vector<8x128xf32>
      %25 = arith.negf %24 : vector<8x128xf32>
      %26 = math.exp %25 : vector<8x128xf32>
      %cst_14 = arith.constant 1.000000e+00 : f32
      %27 = vector.broadcast %cst_14 : f32 to vector<8x128xf32>
      %28 = arith.addf %27, %26 : vector<8x128xf32>
      %29 = arith.divf %27, %28 : vector<8x128xf32>
      %30 = vector.extract_strided_slice %10 {offsets = [0, 256], sizes = [8, 128], strides = [1, 1]} : vector<8x384xf32> to vector<8x128xf32>
      %31 = vector.extract_strided_slice %13 {offsets = [0, 256], sizes = [8, 128], strides = [1, 1]} : vector<8x384xf32> to vector<8x128xf32>
      %c0_15 = arith.constant 0 : index
      %c0_16 = arith.constant 0 : index
      %c0_17 = arith.constant 0 : index
      %32 = vector.load %arg5[%c0_15, %c0_16, %c0_17] : memref<1x1x128xf32, #tpu.memory_space<vmem>>, vector<1x1x128xf32>
      %33 = vector.shape_cast %32 : vector<1x1x128xf32> to vector<1x128xf32>
      %34 = vector.broadcast %33 : vector<1x128xf32> to vector<8x128xf32>
      %35 = arith.addf %31, %34 : vector<8x128xf32>
      %36 = arith.mulf %21, %35 : vector<8x128xf32>
      %37 = arith.addf %30, %36 : vector<8x128xf32>
      %38 = math.tanh %37 : vector<8x128xf32>
      %cst_18 = arith.constant 1.000000e+00 : f32
      %39 = vector.broadcast %cst_18 : f32 to vector<8x128xf32>
      %40 = arith.subf %39, %29 : vector<8x128xf32>
      %41 = arith.mulf %40, %38 : vector<8x128xf32>
      %42 = arith.mulf %29, %8 : vector<8x128xf32>
      %43 = arith.addf %41, %42 : vector<8x128xf32>
      %c0_i32_19 = arith.constant 0 : i32
      %44 = vector.broadcast %c0_i32_19 : i32 to vector<8x1xi32>
      %45 = arith.cmpi sgt, %6, %44 : vector<8x1xi32>
      %46 = vector.shape_cast %45 : vector<8x1xi1> to vector<8x1xi1>
      %47 = vector.broadcast %46 : vector<8x1xi1> to vector<8x128xi1>
      %48 = arith.select %47, %43, %8 : vector<8x128xi1>, vector<8x128xf32>
      %cst_20 = arith.constant 0.000000e+00 : f32
      %49 = vector.shape_cast %45 : vector<8x1xi1> to vector<8x1xi1>
      %50 = vector.broadcast %49 : vector<8x1xi1> to vector<8x128xi1>
      %51 = vector.broadcast %cst_20 : f32 to vector<8x128xf32>
      %52 = arith.select %50, %43, %51 : vector<8x128xi1>, vector<8x128xf32>
      %c0_21 = arith.constant 0 : index
      %c0_22 = arith.constant 0 : index
      %c0_23 = arith.constant 0 : index
      %53 = vector.load %arg6[%c0_21, %c0_22, %c0_23] : memref<8x8x128xf32, #tpu.memory_space<vmem>>, vector<1x8x128xf32>
      %54 = vector.shape_cast %53 : vector<1x8x128xf32> to vector<8x128xf32>
      %55 = vector.shape_cast %52 : vector<8x128xf32> to vector<1x8x128xf32>
      tpu.vector_store %arg6[%c0_21, %c0_22, %c0_23], %55 {strides = array<i32>} : memref<8x8x128xf32, #tpu.memory_space<vmem>>, vector<1x8x128xf32>,
      %c0_24 = arith.constant 0 : index
      %c1 = arith.constant 1 : index
      %c0_25 = arith.constant 0 : index
      %c0_26 = arith.constant 0 : index
      %56 = vector.load %arg2[%c0_24, %c1, %c0_25, %c0_26] : memref<1x8x8x384xf32, #tpu.memory_space<vmem>>, vector<1x1x8x384xf32>
      %57 = vector.shape_cast %56 : vector<1x1x8x384xf32> to vector<8x384xf32>
      %c0_27 = arith.constant 0 : index
      %c0_28 = arith.constant 0 : index
      %c0_29 = arith.constant 0 : index
      %58 = vector.load %arg4[%c0_27, %c0_28, %c0_29] : memref<1x128x384xf32, #tpu.memory_space<vmem>>, vector<1x128x384xf32>
      %59 = vector.shape_cast %58 : vector<1x128x384xf32> to vector<128x384xf32>
      %cst_30 = arith.constant dense<0.000000e+00> : vector<8x384xf32>
      %60 = tpu.matmul %48, %59, %cst_30 {dimension_numbers = #tpu.dot_dimension_numbers<[1], [0], [0], [1], [0, 0, 1, 1], [], []>} : vector<8x128xf32>, vector<128x384xf32>, vector<8x384xf32> -> vector<8x384xf32>
      %61 = vector.extract_strided_slice %57 {offsets = [0, 0], sizes = [8, 128], strides = [1, 1]} : vector<8x384xf32> to vector<8x128xf32>
      %62 = vector.extract_strided_slice %60 {offsets = [0, 0], sizes = [8, 128], strides = [1, 1]} : vector<8x384xf32> to vector<8x128xf32>
      %63 = arith.addf %61, %62 : vector<8x128xf32>
      %64 = arith.negf %63 : vector<8x128xf32>
      %65 = math.exp %64 : vector<8x128xf32>
      %cst_31 = arith.constant 1.000000e+00 : f32
      %66 = vector.broadcast %cst_31 : f32 to vector<8x128xf32>
      %67 = arith.addf %66, %65 : vector<8x128xf32>
      %68 = arith.divf %66, %67 : vector<8x128xf32>
      %69 = vector.extract_strided_slice %57 {offsets = [0, 128], sizes = [8, 128], strides = [1, 1]} : vector<8x384xf32> to vector<8x128xf32>
      %70 = vector.extract_strided_slice %60 {offsets = [0, 128], sizes = [8, 128], strides = [1, 1]} : vector<8x384xf32> to vector<8x128xf32>
      %71 = arith.addf %69, %70 : vector<8x128xf32>
      %72 = arith.negf %71 : vector<8x128xf32>
      %73 = math.exp %72 : vector<8x128xf32>
      %cst_32 = arith.constant 1.000000e+00 : f32
      %74 = vector.broadcast %cst_32 : f32 to vector<8x128xf32>
      %75 = arith.addf %74, %73 : vector<8x128xf32>
      %76 = arith.divf %74, %75 : vector<8x128xf32>
      %77 = vector.extract_strided_slice %57 {offsets = [0, 256], sizes = [8, 128], strides = [1, 1]} : vector<8x384xf32> to vector<8x128xf32>
      %78 = vector.extract_strided_slice %60 {offsets = [0, 256], sizes = [8, 128], strides = [1, 1]} : vector<8x384xf32> to vector<8x128xf32>
      %c0_33 = arith.constant 0 : index
      %c0_34 = arith.constant 0 : index
      %c0_35 = arith.constant 0 : index
      %79 = vector.load %arg5[%c0_33, %c0_34, %c0_35] : memref<1x1x128xf32, #tpu.memory_space<vmem>>, vector<1x1x128xf32>
      %80 = vector.shape_cast %79 : vector<1x1x128xf32> to vector<1x128xf32>
      %81 = vector.broadcast %80 : vector<1x128xf32> to vector<8x128xf32>
      %82 = arith.addf %78, %81 : vector<8x128xf32>
      %83 = arith.mulf %68, %82 : vector<8x128xf32>
      %84 = arith.addf %77, %83 : vector<8x128xf32>
      %85 = math.tanh %84 : vector<8x128xf32>
      %cst_36 = arith.constant 1.000000e+00 : f32
      %86 = vector.broadcast %cst_36 : f32 to vector<8x128xf32>
      %87 = arith.subf %86, %76 : vector<8x128xf32>
      %88 = arith.mulf %87, %85 : vector<8x128xf32>
      %89 = arith.mulf %76, %48 : vector<8x128xf32>
      %90 = arith.addf %88, %89 : vector<8x128xf32>
      %c1_i32_37 = arith.constant 1 : i32
      %91 = vector.broadcast %c1_i32_37 : i32 to vector<8x1xi32>
      %92 = arith.cmpi sgt, %6, %91 : vector<8x1xi32>
      %93 = vector.shape_cast %92 : vector<8x1xi1> to vector<8x1xi1>
      %94 = vector.broadcast %93 : vector<8x1xi1> to vector<8x128xi1>
      %95 = arith.select %94, %90, %48 : vector<8x128xi1>, vector<8x128xf32>
      %cst_38 = arith.constant 0.000000e+00 : f32
      %96 = vector.shape_cast %92 : vector<8x1xi1> to vector<8x1xi1>
      %97 = vector.broadcast %96 : vector<8x1xi1> to vector<8x128xi1>
      %98 = vector.broadcast %cst_38 : f32 to vector<8x128xf32>
      %99 = arith.select %97, %90, %98 : vector<8x128xi1>, vector<8x128xf32>
      %c1_39 = arith.constant 1 : index
      %c0_40 = arith.constant 0 : index
      %c0_41 = arith.constant 0 : index
      %100 = vector.load %arg6[%c1_39, %c0_40, %c0_41] : memref<8x8x128xf32, #tpu.memory_space<vmem>>, vector<1x8x128xf32>
      %101 = vector.shape_cast %100 : vector<1x8x128xf32> to vector<8x128xf32>
      %102 = vector.shape_cast %99 : vector<8x128xf32> to vector<1x8x128xf32>
      tpu.vector_store %arg6[%c1_39, %c0_40, %c0_41], %102 {strides = array<i32>} : memref<8x8x128xf32, #tpu.memory_space<vmem>>, vector<1x8x128xf32>,
      %c0_42 = arith.constant 0 : index
      %c2 = arith.constant 2 : index
      %c0_43 = arith.constant 0 : index
      %c0_44 = arith.constant 0 : index
      %103 = vector.load %arg2[%c0_42, %c2, %c0_43, %c0_44] : memref<1x8x8x384xf32, #tpu.memory_space<vmem>>, vector<1x1x8x384xf32>
      %104 = vector.shape_cast %103 : vector<1x1x8x384xf32> to vector<8x384xf32>
      %c0_45 = arith.constant 0 : index
      %c0_46 = arith.constant 0 : index
      %c0_47 = arith.constant 0 : index
      %105 = vector.load %arg4[%c0_45, %c0_46, %c0_47] : memref<1x128x384xf32, #tpu.memory_space<vmem>>, vector<1x128x384xf32>
      %106 = vector.shape_cast %105 : vector<1x128x384xf32> to vector<128x384xf32>
      %cst_48 = arith.constant dense<0.000000e+00> : vector<8x384xf32>
      %107 = tpu.matmul %95, %106, %cst_48 {dimension_numbers = #tpu.dot_dimension_numbers<[1], [0], [0], [1], [0, 0, 1, 1], [], []>} : vector<8x128xf32>, vector<128x384xf32>, vector<8x384xf32> -> vector<8x384xf32>
      %108 = vector.extract_strided_slice %104 {offsets = [0, 0], sizes = [8, 128], strides = [1, 1]} : vector<8x384xf32> to vector<8x128xf32>
      %109 = vector.extract_strided_slice %107 {offsets = [0, 0], sizes = [8, 128], strides = [1, 1]} : vector<8x384xf32> to vector<8x128xf32>
      %110 = arith.addf %108, %109 : vector<8x128xf32>
      %111 = arith.negf %110 : vector<8x128xf32>
      %112 = math.exp %111 : vector<8x128xf32>
      %cst_49 = arith.constant 1.000000e+00 : f32
      %113 = vector.broadcast %cst_49 : f32 to vector<8x128xf32>
      %114 = arith.addf %113, %112 : vector<8x128xf32>
      %115 = arith.divf %113, %114 : vector<8x128xf32>
      %116 = vector.extract_strided_slice %104 {offsets = [0, 128], sizes = [8, 128], strides = [1, 1]} : vector<8x384xf32> to vector<8x128xf32>
      %117 = vector.extract_strided_slice %107 {offsets = [0, 128], sizes = [8, 128], strides = [1, 1]} : vector<8x384xf32> to vector<8x128xf32>
      %118 = arith.addf %116, %117 : vector<8x128xf32>
      %119 = arith.negf %118 : vector<8x128xf32>
      %120 = math.exp %119 : vector<8x128xf32>
      %cst_50 = arith.constant 1.000000e+00 : f32
      %121 = vector.broadcast %cst_50 : f32 to vector<8x128xf32>
      %122 = arith.addf %121, %120 : vector<8x128xf32>
      %123 = arith.divf %121, %122 : vector<8x128xf32>
      %124 = vector.extract_strided_slice %104 {offsets = [0, 256], sizes = [8, 128], strides = [1, 1]} : vector<8x384xf32> to vector<8x128xf32>
      %125 = vector.extract_strided_slice %107 {offsets = [0, 256], sizes = [8, 128], strides = [1, 1]} : vector<8x384xf32> to vector<8x128xf32>
      %c0_51 = arith.constant 0 : index
      %c0_52 = arith.constant 0 : index
      %c0_53 = arith.constant 0 : index
      %126 = vector.load %arg5[%c0_51, %c0_52, %c0_53] : memref<1x1x128xf32, #tpu.memory_space<vmem>>, vector<1x1x128xf32>
      %127 = vector.shape_cast %126 : vector<1x1x128xf32> to vector<1x128xf32>
      %128 = vector.broadcast %127 : vector<1x128xf32> to vector<8x128xf32>
      %129 = arith.addf %125, %128 : vector<8x128xf32>
      %130 = arith.mulf %115, %129 : vector<8x128xf32>
      %131 = arith.addf %124, %130 : vector<8x128xf32>
      %132 = math.tanh %131 : vector<8x128xf32>
      %cst_54 = arith.constant 1.000000e+00 : f32
      %133 = vector.broadcast %cst_54 : f32 to vector<8x128xf32>
      %134 = arith.subf %133, %123 : vector<8x128xf32>
      %135 = arith.mulf %134, %132 : vector<8x128xf32>
      %136 = arith.mulf %123, %95 : vector<8x128xf32>
      %137 = arith.addf %135, %136 : vector<8x128xf32>
      %c2_i32 = arith.constant 2 : i32
      %138 = vector.broadcast %c2_i32 : i32 to vector<8x1xi32>
      %139 = arith.cmpi sgt, %6, %138 : vector<8x1xi32>
      %140 = vector.shape_cast %139 : vector<8x1xi1> to vector<8x1xi1>
      %141 = vector.broadcast %140 : vector<8x1xi1> to vector<8x128xi1>
      %142 = arith.select %141, %137, %95 : vector<8x128xi1>, vector<8x128xf32>
      %cst_55 = arith.constant 0.000000e+00 : f32
      %143 = vector.shape_cast %139 : vector<8x1xi1> to vector<8x1xi1>
      %144 = vector.broadcast %143 : vector<8x1xi1> to vector<8x128xi1>
      %145 = vector.broadcast %cst_55 : f32 to vector<8x128xf32>
      %146 = arith.select %144, %137, %145 : vector<8x128xi1>, vector<8x128xf32>
      %c2_56 = arith.constant 2 : index
      %c0_57 = arith.constant 0 : index
      %c0_58 = arith.constant 0 : index
      %147 = vector.load %arg6[%c2_56, %c0_57, %c0_58] : memref<8x8x128xf32, #tpu.memory_space<vmem>>, vector<1x8x128xf32>
      %148 = vector.shape_cast %147 : vector<1x8x128xf32> to vector<8x128xf32>
      %149 = vector.shape_cast %146 : vector<8x128xf32> to vector<1x8x128xf32>
      tpu.vector_store %arg6[%c2_56, %c0_57, %c0_58], %149 {strides = array<i32>} : memref<8x8x128xf32, #tpu.memory_space<vmem>>, vector<1x8x128xf32>,
      %c0_59 = arith.constant 0 : index
      %c3 = arith.constant 3 : index
      %c0_60 = arith.constant 0 : index
      %c0_61 = arith.constant 0 : index
      %150 = vector.load %arg2[%c0_59, %c3, %c0_60, %c0_61] : memref<1x8x8x384xf32, #tpu.memory_space<vmem>>, vector<1x1x8x384xf32>
      %151 = vector.shape_cast %150 : vector<1x1x8x384xf32> to vector<8x384xf32>
      %c0_62 = arith.constant 0 : index
      %c0_63 = arith.constant 0 : index
      %c0_64 = arith.constant 0 : index
      %152 = vector.load %arg4[%c0_62, %c0_63, %c0_64] : memref<1x128x384xf32, #tpu.memory_space<vmem>>, vector<1x128x384xf32>
      %153 = vector.shape_cast %152 : vector<1x128x384xf32> to vector<128x384xf32>
      %cst_65 = arith.constant dense<0.000000e+00> : vector<8x384xf32>
      %154 = tpu.matmul %142, %153, %cst_65 {dimension_numbers = #tpu.dot_dimension_numbers<[1], [0], [0], [1], [0, 0, 1, 1], [], []>} : vector<8x128xf32>, vector<128x384xf32>, vector<8x384xf32> -> vector<8x384xf32>
      %155 = vector.extract_strided_slice %151 {offsets = [0, 0], sizes = [8, 128], strides = [1, 1]} : vector<8x384xf32> to vector<8x128xf32>
      %156 = vector.extract_strided_slice %154 {offsets = [0, 0], sizes = [8, 128], strides = [1, 1]} : vector<8x384xf32> to vector<8x128xf32>
      %157 = arith.addf %155, %156 : vector<8x128xf32>
      %158 = arith.negf %157 : vector<8x128xf32>
      %159 = math.exp %158 : vector<8x128xf32>
      %cst_66 = arith.constant 1.000000e+00 : f32
      %160 = vector.broadcast %cst_66 : f32 to vector<8x128xf32>
      %161 = arith.addf %160, %159 : vector<8x128xf32>
      %162 = arith.divf %160, %161 : vector<8x128xf32>
      %163 = vector.extract_strided_slice %151 {offsets = [0, 128], sizes = [8, 128], strides = [1, 1]} : vector<8x384xf32> to vector<8x128xf32>
      %164 = vector.extract_strided_slice %154 {offsets = [0, 128], sizes = [8, 128], strides = [1, 1]} : vector<8x384xf32> to vector<8x128xf32>
      %165 = arith.addf %163, %164 : vector<8x128xf32>
      %166 = arith.negf %165 : vector<8x128xf32>
      %167 = math.exp %166 : vector<8x128xf32>
      %cst_67 = arith.constant 1.000000e+00 : f32
      %168 = vector.broadcast %cst_67 : f32 to vector<8x128xf32>
      %169 = arith.addf %168, %167 : vector<8x128xf32>
      %170 = arith.divf %168, %169 : vector<8x128xf32>
      %171 = vector.extract_strided_slice %151 {offsets = [0, 256], sizes = [8, 128], strides = [1, 1]} : vector<8x384xf32> to vector<8x128xf32>
      %172 = vector.extract_strided_slice %154 {offsets = [0, 256], sizes = [8, 128], strides = [1, 1]} : vector<8x384xf32> to vector<8x128xf32>
      %c0_68 = arith.constant 0 : index
      %c0_69 = arith.constant 0 : index
      %c0_70 = arith.constant 0 : index
      %173 = vector.load %arg5[%c0_68, %c0_69, %c0_70] : memref<1x1x128xf32, #tpu.memory_space<vmem>>, vector<1x1x128xf32>
      %174 = vector.shape_cast %173 : vector<1x1x128xf32> to vector<1x128xf32>
      %175 = vector.broadcast %174 : vector<1x128xf32> to vector<8x128xf32>
      %176 = arith.addf %172, %175 : vector<8x128xf32>
      %177 = arith.mulf %162, %176 : vector<8x128xf32>
      %178 = arith.addf %171, %177 : vector<8x128xf32>
      %179 = math.tanh %178 : vector<8x128xf32>
      %cst_71 = arith.constant 1.000000e+00 : f32
      %180 = vector.broadcast %cst_71 : f32 to vector<8x128xf32>
      %181 = arith.subf %180, %170 : vector<8x128xf32>
      %182 = arith.mulf %181, %179 : vector<8x128xf32>
      %183 = arith.mulf %170, %142 : vector<8x128xf32>
      %184 = arith.addf %182, %183 : vector<8x128xf32>
      %c3_i32 = arith.constant 3 : i32
      %185 = vector.broadcast %c3_i32 : i32 to vector<8x1xi32>
      %186 = arith.cmpi sgt, %6, %185 : vector<8x1xi32>
      %187 = vector.shape_cast %186 : vector<8x1xi1> to vector<8x1xi1>
      %188 = vector.broadcast %187 : vector<8x1xi1> to vector<8x128xi1>
      %189 = arith.select %188, %184, %142 : vector<8x128xi1>, vector<8x128xf32>
      %cst_72 = arith.constant 0.000000e+00 : f32
      %190 = vector.shape_cast %186 : vector<8x1xi1> to vector<8x1xi1>
      %191 = vector.broadcast %190 : vector<8x1xi1> to vector<8x128xi1>
      %192 = vector.broadcast %cst_72 : f32 to vector<8x128xf32>
      %193 = arith.select %191, %184, %192 : vector<8x128xi1>, vector<8x128xf32>
      %c3_73 = arith.constant 3 : index
      %c0_74 = arith.constant 0 : index
      %c0_75 = arith.constant 0 : index
      %194 = vector.load %arg6[%c3_73, %c0_74, %c0_75] : memref<8x8x128xf32, #tpu.memory_space<vmem>>, vector<1x8x128xf32>
      %195 = vector.shape_cast %194 : vector<1x8x128xf32> to vector<8x128xf32>
      %196 = vector.shape_cast %193 : vector<8x128xf32> to vector<1x8x128xf32>
      tpu.vector_store %arg6[%c3_73, %c0_74, %c0_75], %196 {strides = array<i32>} : memref<8x8x128xf32, #tpu.memory_space<vmem>>, vector<1x8x128xf32>,
      %c0_76 = arith.constant 0 : index
      %c4 = arith.constant 4 : index
      %c0_77 = arith.constant 0 : index
      %c0_78 = arith.constant 0 : index
      %197 = vector.load %arg2[%c0_76, %c4, %c0_77, %c0_78] : memref<1x8x8x384xf32, #tpu.memory_space<vmem>>, vector<1x1x8x384xf32>
      %198 = vector.shape_cast %197 : vector<1x1x8x384xf32> to vector<8x384xf32>
      %c0_79 = arith.constant 0 : index
      %c0_80 = arith.constant 0 : index
      %c0_81 = arith.constant 0 : index
      %199 = vector.load %arg4[%c0_79, %c0_80, %c0_81] : memref<1x128x384xf32, #tpu.memory_space<vmem>>, vector<1x128x384xf32>
      %200 = vector.shape_cast %199 : vector<1x128x384xf32> to vector<128x384xf32>
      %cst_82 = arith.constant dense<0.000000e+00> : vector<8x384xf32>
      %201 = tpu.matmul %189, %200, %cst_82 {dimension_numbers = #tpu.dot_dimension_numbers<[1], [0], [0], [1], [0, 0, 1, 1], [], []>} : vector<8x128xf32>, vector<128x384xf32>, vector<8x384xf32> -> vector<8x384xf32>
      %202 = vector.extract_strided_slice %198 {offsets = [0, 0], sizes = [8, 128], strides = [1, 1]} : vector<8x384xf32> to vector<8x128xf32>
      %203 = vector.extract_strided_slice %201 {offsets = [0, 0], sizes = [8, 128], strides = [1, 1]} : vector<8x384xf32> to vector<8x128xf32>
      %204 = arith.addf %202, %203 : vector<8x128xf32>
      %205 = arith.negf %204 : vector<8x128xf32>
      %206 = math.exp %205 : vector<8x128xf32>
      %cst_83 = arith.constant 1.000000e+00 : f32
      %207 = vector.broadcast %cst_83 : f32 to vector<8x128xf32>
      %208 = arith.addf %207, %206 : vector<8x128xf32>
      %209 = arith.divf %207, %208 : vector<8x128xf32>
      %210 = vector.extract_strided_slice %198 {offsets = [0, 128], sizes = [8, 128], strides = [1, 1]} : vector<8x384xf32> to vector<8x128xf32>
      %211 = vector.extract_strided_slice %201 {offsets = [0, 128], sizes = [8, 128], strides = [1, 1]} : vector<8x384xf32> to vector<8x128xf32>
      %212 = arith.addf %210, %211 : vector<8x128xf32>
      %213 = arith.negf %212 : vector<8x128xf32>
      %214 = math.exp %213 : vector<8x128xf32>
      %cst_84 = arith.constant 1.000000e+00 : f32
      %215 = vector.broadcast %cst_84 : f32 to vector<8x128xf32>
      %216 = arith.addf %215, %214 : vector<8x128xf32>
      %217 = arith.divf %215, %216 : vector<8x128xf32>
      %218 = vector.extract_strided_slice %198 {offsets = [0, 256], sizes = [8, 128], strides = [1, 1]} : vector<8x384xf32> to vector<8x128xf32>
      %219 = vector.extract_strided_slice %201 {offsets = [0, 256], sizes = [8, 128], strides = [1, 1]} : vector<8x384xf32> to vector<8x128xf32>
      %c0_85 = arith.constant 0 : index
      %c0_86 = arith.constant 0 : index
      %c0_87 = arith.constant 0 : index
      %220 = vector.load %arg5[%c0_85, %c0_86, %c0_87] : memref<1x1x128xf32, #tpu.memory_space<vmem>>, vector<1x1x128xf32>
      %221 = vector.shape_cast %220 : vector<1x1x128xf32> to vector<1x128xf32>
      %222 = vector.broadcast %221 : vector<1x128xf32> to vector<8x128xf32>
      %223 = arith.addf %219, %222 : vector<8x128xf32>
      %224 = arith.mulf %209, %223 : vector<8x128xf32>
      %225 = arith.addf %218, %224 : vector<8x128xf32>
      %226 = math.tanh %225 : vector<8x128xf32>
      %cst_88 = arith.constant 1.000000e+00 : f32
      %227 = vector.broadcast %cst_88 : f32 to vector<8x128xf32>
      %228 = arith.subf %227, %217 : vector<8x128xf32>
      %229 = arith.mulf %228, %226 : vector<8x128xf32>
      %230 = arith.mulf %217, %189 : vector<8x128xf32>
      %231 = arith.addf %229, %230 : vector<8x128xf32>
      %c4_i32 = arith.constant 4 : i32
      %232 = vector.broadcast %c4_i32 : i32 to vector<8x1xi32>
      %233 = arith.cmpi sgt, %6, %232 : vector<8x1xi32>
      %234 = vector.shape_cast %233 : vector<8x1xi1> to vector<8x1xi1>
      %235 = vector.broadcast %234 : vector<8x1xi1> to vector<8x128xi1>
      %236 = arith.select %235, %231, %189 : vector<8x128xi1>, vector<8x128xf32>
      %cst_89 = arith.constant 0.000000e+00 : f32
      %237 = vector.shape_cast %233 : vector<8x1xi1> to vector<8x1xi1>
      %238 = vector.broadcast %237 : vector<8x1xi1> to vector<8x128xi1>
      %239 = vector.broadcast %cst_89 : f32 to vector<8x128xf32>
      %240 = arith.select %238, %231, %239 : vector<8x128xi1>, vector<8x128xf32>
      %c4_90 = arith.constant 4 : index
      %c0_91 = arith.constant 0 : index
      %c0_92 = arith.constant 0 : index
      %241 = vector.load %arg6[%c4_90, %c0_91, %c0_92] : memref<8x8x128xf32, #tpu.memory_space<vmem>>, vector<1x8x128xf32>
      %242 = vector.shape_cast %241 : vector<1x8x128xf32> to vector<8x128xf32>
      %243 = vector.shape_cast %240 : vector<8x128xf32> to vector<1x8x128xf32>
      tpu.vector_store %arg6[%c4_90, %c0_91, %c0_92], %243 {strides = array<i32>} : memref<8x8x128xf32, #tpu.memory_space<vmem>>, vector<1x8x128xf32>,
      %c0_93 = arith.constant 0 : index
      %c5 = arith.constant 5 : index
      %c0_94 = arith.constant 0 : index
      %c0_95 = arith.constant 0 : index
      %244 = vector.load %arg2[%c0_93, %c5, %c0_94, %c0_95] : memref<1x8x8x384xf32, #tpu.memory_space<vmem>>, vector<1x1x8x384xf32>
      %245 = vector.shape_cast %244 : vector<1x1x8x384xf32> to vector<8x384xf32>
      %c0_96 = arith.constant 0 : index
      %c0_97 = arith.constant 0 : index
      %c0_98 = arith.constant 0 : index
      %246 = vector.load %arg4[%c0_96, %c0_97, %c0_98] : memref<1x128x384xf32, #tpu.memory_space<vmem>>, vector<1x128x384xf32>
      %247 = vector.shape_cast %246 : vector<1x128x384xf32> to vector<128x384xf32>
      %cst_99 = arith.constant dense<0.000000e+00> : vector<8x384xf32>
      %248 = tpu.matmul %236, %247, %cst_99 {dimension_numbers = #tpu.dot_dimension_numbers<[1], [0], [0], [1], [0, 0, 1, 1], [], []>} : vector<8x128xf32>, vector<128x384xf32>, vector<8x384xf32> -> vector<8x384xf32>
      %249 = vector.extract_strided_slice %245 {offsets = [0, 0], sizes = [8, 128], strides = [1, 1]} : vector<8x384xf32> to vector<8x128xf32>
      %250 = vector.extract_strided_slice %248 {offsets = [0, 0], sizes = [8, 128], strides = [1, 1]} : vector<8x384xf32> to vector<8x128xf32>
      %251 = arith.addf %249, %250 : vector<8x128xf32>
      %252 = arith.negf %251 : vector<8x128xf32>
      %253 = math.exp %252 : vector<8x128xf32>
      %cst_100 = arith.constant 1.000000e+00 : f32
      %254 = vector.broadcast %cst_100 : f32 to vector<8x128xf32>
      %255 = arith.addf %254, %253 : vector<8x128xf32>
      %256 = arith.divf %254, %255 : vector<8x128xf32>
      %257 = vector.extract_strided_slice %245 {offsets = [0, 128], sizes = [8, 128], strides = [1, 1]} : vector<8x384xf32> to vector<8x128xf32>
      %258 = vector.extract_strided_slice %248 {offsets = [0, 128], sizes = [8, 128], strides = [1, 1]} : vector<8x384xf32> to vector<8x128xf32>
      %259 = arith.addf %257, %258 : vector<8x128xf32>
      %260 = arith.negf %259 : vector<8x128xf32>
      %261 = math.exp %260 : vector<8x128xf32>
      %cst_101 = arith.constant 1.000000e+00 : f32
      %262 = vector.broadcast %cst_101 : f32 to vector<8x128xf32>
      %263 = arith.addf %262, %261 : vector<8x128xf32>
      %264 = arith.divf %262, %263 : vector<8x128xf32>
      %265 = vector.extract_strided_slice %245 {offsets = [0, 256], sizes = [8, 128], strides = [1, 1]} : vector<8x384xf32> to vector<8x128xf32>
      %266 = vector.extract_strided_slice %248 {offsets = [0, 256], sizes = [8, 128], strides = [1, 1]} : vector<8x384xf32> to vector<8x128xf32>
      %c0_102 = arith.constant 0 : index
      %c0_103 = arith.constant 0 : index
      %c0_104 = arith.constant 0 : index
      %267 = vector.load %arg5[%c0_102, %c0_103, %c0_104] : memref<1x1x128xf32, #tpu.memory_space<vmem>>, vector<1x1x128xf32>
      %268 = vector.shape_cast %267 : vector<1x1x128xf32> to vector<1x128xf32>
      %269 = vector.broadcast %268 : vector<1x128xf32> to vector<8x128xf32>
      %270 = arith.addf %266, %269 : vector<8x128xf32>
      %271 = arith.mulf %256, %270 : vector<8x128xf32>
      %272 = arith.addf %265, %271 : vector<8x128xf32>
      %273 = math.tanh %272 : vector<8x128xf32>
      %cst_105 = arith.constant 1.000000e+00 : f32
      %274 = vector.broadcast %cst_105 : f32 to vector<8x128xf32>
      %275 = arith.subf %274, %264 : vector<8x128xf32>
      %276 = arith.mulf %275, %273 : vector<8x128xf32>
      %277 = arith.mulf %264, %236 : vector<8x128xf32>
      %278 = arith.addf %276, %277 : vector<8x128xf32>
      %c5_i32 = arith.constant 5 : i32
      %279 = vector.broadcast %c5_i32 : i32 to vector<8x1xi32>
      %280 = arith.cmpi sgt, %6, %279 : vector<8x1xi32>
      %281 = vector.shape_cast %280 : vector<8x1xi1> to vector<8x1xi1>
      %282 = vector.broadcast %281 : vector<8x1xi1> to vector<8x128xi1>
      %283 = arith.select %282, %278, %236 : vector<8x128xi1>, vector<8x128xf32>
      %cst_106 = arith.constant 0.000000e+00 : f32
      %284 = vector.shape_cast %280 : vector<8x1xi1> to vector<8x1xi1>
      %285 = vector.broadcast %284 : vector<8x1xi1> to vector<8x128xi1>
      %286 = vector.broadcast %cst_106 : f32 to vector<8x128xf32>
      %287 = arith.select %285, %278, %286 : vector<8x128xi1>, vector<8x128xf32>
      %c5_107 = arith.constant 5 : index
      %c0_108 = arith.constant 0 : index
      %c0_109 = arith.constant 0 : index
      %288 = vector.load %arg6[%c5_107, %c0_108, %c0_109] : memref<8x8x128xf32, #tpu.memory_space<vmem>>, vector<1x8x128xf32>
      %289 = vector.shape_cast %288 : vector<1x8x128xf32> to vector<8x128xf32>
      %290 = vector.shape_cast %287 : vector<8x128xf32> to vector<1x8x128xf32>
      tpu.vector_store %arg6[%c5_107, %c0_108, %c0_109], %290 {strides = array<i32>} : memref<8x8x128xf32, #tpu.memory_space<vmem>>, vector<1x8x128xf32>,
      %c0_110 = arith.constant 0 : index
      %c6 = arith.constant 6 : index
      %c0_111 = arith.constant 0 : index
      %c0_112 = arith.constant 0 : index
      %291 = vector.load %arg2[%c0_110, %c6, %c0_111, %c0_112] : memref<1x8x8x384xf32, #tpu.memory_space<vmem>>, vector<1x1x8x384xf32>
      %292 = vector.shape_cast %291 : vector<1x1x8x384xf32> to vector<8x384xf32>
      %c0_113 = arith.constant 0 : index
      %c0_114 = arith.constant 0 : index
      %c0_115 = arith.constant 0 : index
      %293 = vector.load %arg4[%c0_113, %c0_114, %c0_115] : memref<1x128x384xf32, #tpu.memory_space<vmem>>, vector<1x128x384xf32>
      %294 = vector.shape_cast %293 : vector<1x128x384xf32> to vector<128x384xf32>
      %cst_116 = arith.constant dense<0.000000e+00> : vector<8x384xf32>
      %295 = tpu.matmul %283, %294, %cst_116 {dimension_numbers = #tpu.dot_dimension_numbers<[1], [0], [0], [1], [0, 0, 1, 1], [], []>} : vector<8x128xf32>, vector<128x384xf32>, vector<8x384xf32> -> vector<8x384xf32>
      %296 = vector.extract_strided_slice %292 {offsets = [0, 0], sizes = [8, 128], strides = [1, 1]} : vector<8x384xf32> to vector<8x128xf32>
      %297 = vector.extract_strided_slice %295 {offsets = [0, 0], sizes = [8, 128], strides = [1, 1]} : vector<8x384xf32> to vector<8x128xf32>
      %298 = arith.addf %296, %297 : vector<8x128xf32>
      %299 = arith.negf %298 : vector<8x128xf32>
      %300 = math.exp %299 : vector<8x128xf32>
      %cst_117 = arith.constant 1.000000e+00 : f32
      %301 = vector.broadcast %cst_117 : f32 to vector<8x128xf32>
      %302 = arith.addf %301, %300 : vector<8x128xf32>
      %303 = arith.divf %301, %302 : vector<8x128xf32>
      %304 = vector.extract_strided_slice %292 {offsets = [0, 128], sizes = [8, 128], strides = [1, 1]} : vector<8x384xf32> to vector<8x128xf32>
      %305 = vector.extract_strided_slice %295 {offsets = [0, 128], sizes = [8, 128], strides = [1, 1]} : vector<8x384xf32> to vector<8x128xf32>
      %306 = arith.addf %304, %305 : vector<8x128xf32>
      %307 = arith.negf %306 : vector<8x128xf32>
      %308 = math.exp %307 : vector<8x128xf32>
      %cst_118 = arith.constant 1.000000e+00 : f32
      %309 = vector.broadcast %cst_118 : f32 to vector<8x128xf32>
      %310 = arith.addf %309, %308 : vector<8x128xf32>
      %311 = arith.divf %309, %310 : vector<8x128xf32>
      %312 = vector.extract_strided_slice %292 {offsets = [0, 256], sizes = [8, 128], strides = [1, 1]} : vector<8x384xf32> to vector<8x128xf32>
      %313 = vector.extract_strided_slice %295 {offsets = [0, 256], sizes = [8, 128], strides = [1, 1]} : vector<8x384xf32> to vector<8x128xf32>
      %c0_119 = arith.constant 0 : index
      %c0_120 = arith.constant 0 : index
      %c0_121 = arith.constant 0 : index
      %314 = vector.load %arg5[%c0_119, %c0_120, %c0_121] : memref<1x1x128xf32, #tpu.memory_space<vmem>>, vector<1x1x128xf32>
      %315 = vector.shape_cast %314 : vector<1x1x128xf32> to vector<1x128xf32>
      %316 = vector.broadcast %315 : vector<1x128xf32> to vector<8x128xf32>
      %317 = arith.addf %313, %316 : vector<8x128xf32>
      %318 = arith.mulf %303, %317 : vector<8x128xf32>
      %319 = arith.addf %312, %318 : vector<8x128xf32>
      %320 = math.tanh %319 : vector<8x128xf32>
      %cst_122 = arith.constant 1.000000e+00 : f32
      %321 = vector.broadcast %cst_122 : f32 to vector<8x128xf32>
      %322 = arith.subf %321, %311 : vector<8x128xf32>
      %323 = arith.mulf %322, %320 : vector<8x128xf32>
      %324 = arith.mulf %311, %283 : vector<8x128xf32>
      %325 = arith.addf %323, %324 : vector<8x128xf32>
      %c6_i32 = arith.constant 6 : i32
      %326 = vector.broadcast %c6_i32 : i32 to vector<8x1xi32>
      %327 = arith.cmpi sgt, %6, %326 : vector<8x1xi32>
      %328 = vector.shape_cast %327 : vector<8x1xi1> to vector<8x1xi1>
      %329 = vector.broadcast %328 : vector<8x1xi1> to vector<8x128xi1>
      %330 = arith.select %329, %325, %283 : vector<8x128xi1>, vector<8x128xf32>
      %cst_123 = arith.constant 0.000000e+00 : f32
      %331 = vector.shape_cast %327 : vector<8x1xi1> to vector<8x1xi1>
      %332 = vector.broadcast %331 : vector<8x1xi1> to vector<8x128xi1>
      %333 = vector.broadcast %cst_123 : f32 to vector<8x128xf32>
      %334 = arith.select %332, %325, %333 : vector<8x128xi1>, vector<8x128xf32>
      %c6_124 = arith.constant 6 : index
      %c0_125 = arith.constant 0 : index
      %c0_126 = arith.constant 0 : index
      %335 = vector.load %arg6[%c6_124, %c0_125, %c0_126] : memref<8x8x128xf32, #tpu.memory_space<vmem>>, vector<1x8x128xf32>
      %336 = vector.shape_cast %335 : vector<1x8x128xf32> to vector<8x128xf32>
      %337 = vector.shape_cast %334 : vector<8x128xf32> to vector<1x8x128xf32>
      tpu.vector_store %arg6[%c6_124, %c0_125, %c0_126], %337 {strides = array<i32>} : memref<8x8x128xf32, #tpu.memory_space<vmem>>, vector<1x8x128xf32>,
      %c0_127 = arith.constant 0 : index
      %c7 = arith.constant 7 : index
      %c0_128 = arith.constant 0 : index
      %c0_129 = arith.constant 0 : index
      %338 = vector.load %arg2[%c0_127, %c7, %c0_128, %c0_129] : memref<1x8x8x384xf32, #tpu.memory_space<vmem>>, vector<1x1x8x384xf32>
      %339 = vector.shape_cast %338 : vector<1x1x8x384xf32> to vector<8x384xf32>
      %c0_130 = arith.constant 0 : index
      %c0_131 = arith.constant 0 : index
      %c0_132 = arith.constant 0 : index
      %340 = vector.load %arg4[%c0_130, %c0_131, %c0_132] : memref<1x128x384xf32, #tpu.memory_space<vmem>>, vector<1x128x384xf32>
      %341 = vector.shape_cast %340 : vector<1x128x384xf32> to vector<128x384xf32>
      %cst_133 = arith.constant dense<0.000000e+00> : vector<8x384xf32>
      %342 = tpu.matmul %330, %341, %cst_133 {dimension_numbers = #tpu.dot_dimension_numbers<[1], [0], [0], [1], [0, 0, 1, 1], [], []>} : vector<8x128xf32>, vector<128x384xf32>, vector<8x384xf32> -> vector<8x384xf32>
      %343 = vector.extract_strided_slice %339 {offsets = [0, 0], sizes = [8, 128], strides = [1, 1]} : vector<8x384xf32> to vector<8x128xf32>
      %344 = vector.extract_strided_slice %342 {offsets = [0, 0], sizes = [8, 128], strides = [1, 1]} : vector<8x384xf32> to vector<8x128xf32>
      %345 = arith.addf %343, %344 : vector<8x128xf32>
      %346 = arith.negf %345 : vector<8x128xf32>
      %347 = math.exp %346 : vector<8x128xf32>
      %cst_134 = arith.constant 1.000000e+00 : f32
      %348 = vector.broadcast %cst_134 : f32 to vector<8x128xf32>
      %349 = arith.addf %348, %347 : vector<8x128xf32>
      %350 = arith.divf %348, %349 : vector<8x128xf32>
      %351 = vector.extract_strided_slice %339 {offsets = [0, 128], sizes = [8, 128], strides = [1, 1]} : vector<8x384xf32> to vector<8x128xf32>
      %352 = vector.extract_strided_slice %342 {offsets = [0, 128], sizes = [8, 128], strides = [1, 1]} : vector<8x384xf32> to vector<8x128xf32>
      %353 = arith.addf %351, %352 : vector<8x128xf32>
      %354 = arith.negf %353 : vector<8x128xf32>
      %355 = math.exp %354 : vector<8x128xf32>
      %cst_135 = arith.constant 1.000000e+00 : f32
      %356 = vector.broadcast %cst_135 : f32 to vector<8x128xf32>
      %357 = arith.addf %356, %355 : vector<8x128xf32>
      %358 = arith.divf %356, %357 : vector<8x128xf32>
      %359 = vector.extract_strided_slice %339 {offsets = [0, 256], sizes = [8, 128], strides = [1, 1]} : vector<8x384xf32> to vector<8x128xf32>
      %360 = vector.extract_strided_slice %342 {offsets = [0, 256], sizes = [8, 128], strides = [1, 1]} : vector<8x384xf32> to vector<8x128xf32>
      %c0_136 = arith.constant 0 : index
      %c0_137 = arith.constant 0 : index
      %c0_138 = arith.constant 0 : index
      %361 = vector.load %arg5[%c0_136, %c0_137, %c0_138] : memref<1x1x128xf32, #tpu.memory_space<vmem>>, vector<1x1x128xf32>
      %362 = vector.shape_cast %361 : vector<1x1x128xf32> to vector<1x128xf32>
      %363 = vector.broadcast %362 : vector<1x128xf32> to vector<8x128xf32>
      %364 = arith.addf %360, %363 : vector<8x128xf32>
      %365 = arith.mulf %350, %364 : vector<8x128xf32>
      %366 = arith.addf %359, %365 : vector<8x128xf32>
      %367 = math.tanh %366 : vector<8x128xf32>
      %cst_139 = arith.constant 1.000000e+00 : f32
      %368 = vector.broadcast %cst_139 : f32 to vector<8x128xf32>
      %369 = arith.subf %368, %358 : vector<8x128xf32>
      %370 = arith.mulf %369, %367 : vector<8x128xf32>
      %371 = arith.mulf %358, %330 : vector<8x128xf32>
      %372 = arith.addf %370, %371 : vector<8x128xf32>
      %c7_i32 = arith.constant 7 : i32
      %373 = vector.broadcast %c7_i32 : i32 to vector<8x1xi32>
      %374 = arith.cmpi sgt, %6, %373 : vector<8x1xi32>
      %375 = vector.shape_cast %374 : vector<8x1xi1> to vector<8x1xi1>
      %376 = vector.broadcast %375 : vector<8x1xi1> to vector<8x128xi1>
      %377 = arith.select %376, %372, %330 : vector<8x128xi1>, vector<8x128xf32>
      %cst_140 = arith.constant 0.000000e+00 : f32
      %378 = vector.shape_cast %374 : vector<8x1xi1> to vector<8x1xi1>
      %379 = vector.broadcast %378 : vector<8x1xi1> to vector<8x128xi1>
      %380 = vector.broadcast %cst_140 : f32 to vector<8x128xf32>
      %381 = arith.select %379, %372, %380 : vector<8x128xi1>, vector<8x128xf32>
      %c7_141 = arith.constant 7 : index
      %c0_142 = arith.constant 0 : index
      %c0_143 = arith.constant 0 : index
      %382 = vector.load %arg6[%c7_141, %c0_142, %c0_143] : memref<8x8x128xf32, #tpu.memory_space<vmem>>, vector<1x8x128xf32>
      %383 = vector.shape_cast %382 : vector<1x8x128xf32> to vector<8x128xf32>
      %384 = vector.shape_cast %381 : vector<8x128xf32> to vector<1x8x128xf32>
      tpu.vector_store %arg6[%c7_141, %c0_142, %c0_143], %384 {strides = array<i32>} : memref<8x8x128xf32, #tpu.memory_space<vmem>>, vector<1x8x128xf32>,
      %c0_144 = arith.constant 0 : index
      %c0_145 = arith.constant 0 : index
      %c0_146 = arith.constant 0 : index
      %385 = vector.load %arg7[%c0_144, %c0_145, %c0_146] : memref<1x8x128xf32, #tpu.memory_space<vmem>>, vector<1x8x128xf32>
      %386 = vector.shape_cast %385 : vector<1x8x128xf32> to vector<8x128xf32>
      %387 = vector.shape_cast %377 : vector<8x128xf32> to vector<1x8x128xf32>
      tpu.vector_store %arg7[%c0_144, %c0_145, %c0_146], %387 {strides = array<i32>} : memref<1x8x128xf32, #tpu.memory_space<vmem>>, vector<1x8x128xf32>,
    } else {
    }
    %c1_i32 = arith.constant 1 : i32
    %3 = arith.cmpi eq, %arg0, %c1_i32 : i32
    %4 = arith.extui %3 : i1 to i32
    %c0_i32_1 = arith.constant 0 : i32
    %5 = arith.cmpi ne, %4, %c0_i32_1 : i32
    scf.if %5 {
      %c0 = arith.constant 0 : index
      %c0_2 = arith.constant 0 : index
      %6 = vector.load %arg1[%c0, %c0_2] : memref<8x1xi32, #tpu.memory_space<vmem>>, vector<8x1xi32>
      %c0_3 = arith.constant 0 : index
      %c0_4 = arith.constant 0 : index
      %c0_5 = arith.constant 0 : index
      %7 = vector.load %arg3[%c0_3, %c0_4, %c0_5] : memref<1x8x128xf32, #tpu.memory_space<vmem>>, vector<1x8x128xf32>
      %8 = vector.shape_cast %7 : vector<1x8x128xf32> to vector<8x128xf32>
      %c0_6 = arith.constant 0 : index
      %c7 = arith.constant 7 : index
      %c0_7 = arith.constant 0 : index
      %c0_8 = arith.constant 0 : index
      %9 = vector.load %arg2[%c0_6, %c7, %c0_7, %c0_8] : memref<1x8x8x384xf32, #tpu.memory_space<vmem>>, vector<1x1x8x384xf32>
      %10 = vector.shape_cast %9 : vector<1x1x8x384xf32> to vector<8x384xf32>
      %c0_9 = arith.constant 0 : index
      %c0_10 = arith.constant 0 : index
      %c0_11 = arith.constant 0 : index
      %11 = vector.load %arg4[%c0_9, %c0_10, %c0_11] : memref<1x128x384xf32, #tpu.memory_space<vmem>>, vector<1x128x384xf32>
      %12 = vector.shape_cast %11 : vector<1x128x384xf32> to vector<128x384xf32>
      %cst = arith.constant dense<0.000000e+00> : vector<8x384xf32>
      %13 = tpu.matmul %8, %12, %cst {dimension_numbers = #tpu.dot_dimension_numbers<[1], [0], [0], [1], [0, 0, 1, 1], [], []>} : vector<8x128xf32>, vector<128x384xf32>, vector<8x384xf32> -> vector<8x384xf32>
      %14 = vector.extract_strided_slice %10 {offsets = [0, 0], sizes = [8, 128], strides = [1, 1]} : vector<8x384xf32> to vector<8x128xf32>
      %15 = vector.extract_strided_slice %13 {offsets = [0, 0], sizes = [8, 128], strides = [1, 1]} : vector<8x384xf32> to vector<8x128xf32>
      %16 = arith.addf %14, %15 : vector<8x128xf32>
      %17 = arith.negf %16 : vector<8x128xf32>
      %18 = math.exp %17 : vector<8x128xf32>
      %cst_12 = arith.constant 1.000000e+00 : f32
      %19 = vector.broadcast %cst_12 : f32 to vector<8x128xf32>
      %20 = arith.addf %19, %18 : vector<8x128xf32>
      %21 = arith.divf %19, %20 : vector<8x128xf32>
      %22 = vector.extract_strided_slice %10 {offsets = [0, 128], sizes = [8, 128], strides = [1, 1]} : vector<8x384xf32> to vector<8x128xf32>
      %23 = vector.extract_strided_slice %13 {offsets = [0, 128], sizes = [8, 128], strides = [1, 1]} : vector<8x384xf32> to vector<8x128xf32>
      %24 = arith.addf %22, %23 : vector<8x128xf32>
      %25 = arith.negf %24 : vector<8x128xf32>
      %26 = math.exp %25 : vector<8x128xf32>
      %cst_13 = arith.constant 1.000000e+00 : f32
      %27 = vector.broadcast %cst_13 : f32 to vector<8x128xf32>
      %28 = arith.addf %27, %26 : vector<8x128xf32>
      %29 = arith.divf %27, %28 : vector<8x128xf32>
      %30 = vector.extract_strided_slice %10 {offsets = [0, 256], sizes = [8, 128], strides = [1, 1]} : vector<8x384xf32> to vector<8x128xf32>
      %31 = vector.extract_strided_slice %13 {offsets = [0, 256], sizes = [8, 128], strides = [1, 1]} : vector<8x384xf32> to vector<8x128xf32>
      %c0_14 = arith.constant 0 : index
      %c0_15 = arith.constant 0 : index
      %c0_16 = arith.constant 0 : index
      %32 = vector.load %arg5[%c0_14, %c0_15, %c0_16] : memref<1x1x128xf32, #tpu.memory_space<vmem>>, vector<1x1x128xf32>
      %33 = vector.shape_cast %32 : vector<1x1x128xf32> to vector<1x128xf32>
      %34 = vector.broadcast %33 : vector<1x128xf32> to vector<8x128xf32>
      %35 = arith.addf %31, %34 : vector<8x128xf32>
      %36 = arith.mulf %21, %35 : vector<8x128xf32>
      %37 = arith.addf %30, %36 : vector<8x128xf32>
      %38 = math.tanh %37 : vector<8x128xf32>
      %cst_17 = arith.constant 1.000000e+00 : f32
      %39 = vector.broadcast %cst_17 : f32 to vector<8x128xf32>
      %40 = arith.subf %39, %29 : vector<8x128xf32>
      %41 = arith.mulf %40, %38 : vector<8x128xf32>
      %42 = arith.mulf %29, %8 : vector<8x128xf32>
      %43 = arith.addf %41, %42 : vector<8x128xf32>
      %c7_i32 = arith.constant 7 : i32
      %44 = vector.broadcast %c7_i32 : i32 to vector<8x1xi32>
      %45 = arith.cmpi sgt, %6, %44 : vector<8x1xi32>
      %46 = vector.shape_cast %45 : vector<8x1xi1> to vector<8x1xi1>
      %47 = vector.broadcast %46 : vector<8x1xi1> to vector<8x128xi1>
      %48 = arith.select %47, %43, %8 : vector<8x128xi1>, vector<8x128xf32>
      %cst_18 = arith.constant 0.000000e+00 : f32
      %49 = vector.shape_cast %45 : vector<8x1xi1> to vector<8x1xi1>
      %50 = vector.broadcast %49 : vector<8x1xi1> to vector<8x128xi1>
      %51 = vector.broadcast %cst_18 : f32 to vector<8x128xf32>
      %52 = arith.select %50, %43, %51 : vector<8x128xi1>, vector<8x128xf32>
      %c7_19 = arith.constant 7 : index
      %c0_20 = arith.constant 0 : index
      %c0_21 = arith.constant 0 : index
      %53 = vector.load %arg6[%c7_19, %c0_20, %c0_21] : memref<8x8x128xf32, #tpu.memory_space<vmem>>, vector<1x8x128xf32>
      %54 = vector.shape_cast %53 : vector<1x8x128xf32> to vector<8x128xf32>
      %55 = arith.addf %54, %52 : vector<8x128xf32>
      %c7_22 = arith.constant 7 : index
      %c0_23 = arith.constant 0 : index
      %c0_24 = arith.constant 0 : index
      %56 = vector.load %arg6[%c7_22, %c0_23, %c0_24] : memref<8x8x128xf32, #tpu.memory_space<vmem>>, vector<1x8x128xf32>
      %57 = vector.shape_cast %56 : vector<1x8x128xf32> to vector<8x128xf32>
      %58 = vector.shape_cast %55 : vector<8x128xf32> to vector<1x8x128xf32>
      tpu.vector_store %arg6[%c7_22, %c0_23, %c0_24], %58 {strides = array<i32>} : memref<8x8x128xf32, #tpu.memory_space<vmem>>, vector<1x8x128xf32>,
      %c0_25 = arith.constant 0 : index
      %c6 = arith.constant 6 : index
      %c0_26 = arith.constant 0 : index
      %c0_27 = arith.constant 0 : index
      %59 = vector.load %arg2[%c0_25, %c6, %c0_26, %c0_27] : memref<1x8x8x384xf32, #tpu.memory_space<vmem>>, vector<1x1x8x384xf32>
      %60 = vector.shape_cast %59 : vector<1x1x8x384xf32> to vector<8x384xf32>
      %c0_28 = arith.constant 0 : index
      %c0_29 = arith.constant 0 : index
      %c0_30 = arith.constant 0 : index
      %61 = vector.load %arg4[%c0_28, %c0_29, %c0_30] : memref<1x128x384xf32, #tpu.memory_space<vmem>>, vector<1x128x384xf32>
      %62 = vector.shape_cast %61 : vector<1x128x384xf32> to vector<128x384xf32>
      %cst_31 = arith.constant dense<0.000000e+00> : vector<8x384xf32>
      %63 = tpu.matmul %48, %62, %cst_31 {dimension_numbers = #tpu.dot_dimension_numbers<[1], [0], [0], [1], [0, 0, 1, 1], [], []>} : vector<8x128xf32>, vector<128x384xf32>, vector<8x384xf32> -> vector<8x384xf32>
      %64 = vector.extract_strided_slice %60 {offsets = [0, 0], sizes = [8, 128], strides = [1, 1]} : vector<8x384xf32> to vector<8x128xf32>
      %65 = vector.extract_strided_slice %63 {offsets = [0, 0], sizes = [8, 128], strides = [1, 1]} : vector<8x384xf32> to vector<8x128xf32>
      %66 = arith.addf %64, %65 : vector<8x128xf32>
      %67 = arith.negf %66 : vector<8x128xf32>
      %68 = math.exp %67 : vector<8x128xf32>
      %cst_32 = arith.constant 1.000000e+00 : f32
      %69 = vector.broadcast %cst_32 : f32 to vector<8x128xf32>
      %70 = arith.addf %69, %68 : vector<8x128xf32>
      %71 = arith.divf %69, %70 : vector<8x128xf32>
      %72 = vector.extract_strided_slice %60 {offsets = [0, 128], sizes = [8, 128], strides = [1, 1]} : vector<8x384xf32> to vector<8x128xf32>
      %73 = vector.extract_strided_slice %63 {offsets = [0, 128], sizes = [8, 128], strides = [1, 1]} : vector<8x384xf32> to vector<8x128xf32>
      %74 = arith.addf %72, %73 : vector<8x128xf32>
      %75 = arith.negf %74 : vector<8x128xf32>
      %76 = math.exp %75 : vector<8x128xf32>
      %cst_33 = arith.constant 1.000000e+00 : f32
      %77 = vector.broadcast %cst_33 : f32 to vector<8x128xf32>
      %78 = arith.addf %77, %76 : vector<8x128xf32>
      %79 = arith.divf %77, %78 : vector<8x128xf32>
      %80 = vector.extract_strided_slice %60 {offsets = [0, 256], sizes = [8, 128], strides = [1, 1]} : vector<8x384xf32> to vector<8x128xf32>
      %81 = vector.extract_strided_slice %63 {offsets = [0, 256], sizes = [8, 128], strides = [1, 1]} : vector<8x384xf32> to vector<8x128xf32>
      %c0_34 = arith.constant 0 : index
      %c0_35 = arith.constant 0 : index
      %c0_36 = arith.constant 0 : index
      %82 = vector.load %arg5[%c0_34, %c0_35, %c0_36] : memref<1x1x128xf32, #tpu.memory_space<vmem>>, vector<1x1x128xf32>
      %83 = vector.shape_cast %82 : vector<1x1x128xf32> to vector<1x128xf32>
      %84 = vector.broadcast %83 : vector<1x128xf32> to vector<8x128xf32>
      %85 = arith.addf %81, %84 : vector<8x128xf32>
      %86 = arith.mulf %71, %85 : vector<8x128xf32>
      %87 = arith.addf %80, %86 : vector<8x128xf32>
      %88 = math.tanh %87 : vector<8x128xf32>
      %cst_37 = arith.constant 1.000000e+00 : f32
      %89 = vector.broadcast %cst_37 : f32 to vector<8x128xf32>
      %90 = arith.subf %89, %79 : vector<8x128xf32>
      %91 = arith.mulf %90, %88 : vector<8x128xf32>
      %92 = arith.mulf %79, %48 : vector<8x128xf32>
      %93 = arith.addf %91, %92 : vector<8x128xf32>
      %c6_i32 = arith.constant 6 : i32
      %94 = vector.broadcast %c6_i32 : i32 to vector<8x1xi32>
      %95 = arith.cmpi sgt, %6, %94 : vector<8x1xi32>
      %96 = vector.shape_cast %95 : vector<8x1xi1> to vector<8x1xi1>
      %97 = vector.broadcast %96 : vector<8x1xi1> to vector<8x128xi1>
      %98 = arith.select %97, %93, %48 : vector<8x128xi1>, vector<8x128xf32>
      %cst_38 = arith.constant 0.000000e+00 : f32
      %99 = vector.shape_cast %95 : vector<8x1xi1> to vector<8x1xi1>
      %100 = vector.broadcast %99 : vector<8x1xi1> to vector<8x128xi1>
      %101 = vector.broadcast %cst_38 : f32 to vector<8x128xf32>
      %102 = arith.select %100, %93, %101 : vector<8x128xi1>, vector<8x128xf32>
      %c6_39 = arith.constant 6 : index
      %c0_40 = arith.constant 0 : index
      %c0_41 = arith.constant 0 : index
      %103 = vector.load %arg6[%c6_39, %c0_40, %c0_41] : memref<8x8x128xf32, #tpu.memory_space<vmem>>, vector<1x8x128xf32>
      %104 = vector.shape_cast %103 : vector<1x8x128xf32> to vector<8x128xf32>
      %105 = arith.addf %104, %102 : vector<8x128xf32>
      %c6_42 = arith.constant 6 : index
      %c0_43 = arith.constant 0 : index
      %c0_44 = arith.constant 0 : index
      %106 = vector.load %arg6[%c6_42, %c0_43, %c0_44] : memref<8x8x128xf32, #tpu.memory_space<vmem>>, vector<1x8x128xf32>
      %107 = vector.shape_cast %106 : vector<1x8x128xf32> to vector<8x128xf32>
      %108 = vector.shape_cast %105 : vector<8x128xf32> to vector<1x8x128xf32>
      tpu.vector_store %arg6[%c6_42, %c0_43, %c0_44], %108 {strides = array<i32>} : memref<8x8x128xf32, #tpu.memory_space<vmem>>, vector<1x8x128xf32>,
      %c0_45 = arith.constant 0 : index
      %c5 = arith.constant 5 : index
      %c0_46 = arith.constant 0 : index
      %c0_47 = arith.constant 0 : index
      %109 = vector.load %arg2[%c0_45, %c5, %c0_46, %c0_47] : memref<1x8x8x384xf32, #tpu.memory_space<vmem>>, vector<1x1x8x384xf32>
      %110 = vector.shape_cast %109 : vector<1x1x8x384xf32> to vector<8x384xf32>
      %c0_48 = arith.constant 0 : index
      %c0_49 = arith.constant 0 : index
      %c0_50 = arith.constant 0 : index
      %111 = vector.load %arg4[%c0_48, %c0_49, %c0_50] : memref<1x128x384xf32, #tpu.memory_space<vmem>>, vector<1x128x384xf32>
      %112 = vector.shape_cast %111 : vector<1x128x384xf32> to vector<128x384xf32>
      %cst_51 = arith.constant dense<0.000000e+00> : vector<8x384xf32>
      %113 = tpu.matmul %98, %112, %cst_51 {dimension_numbers = #tpu.dot_dimension_numbers<[1], [0], [0], [1], [0, 0, 1, 1], [], []>} : vector<8x128xf32>, vector<128x384xf32>, vector<8x384xf32> -> vector<8x384xf32>
      %114 = vector.extract_strided_slice %110 {offsets = [0, 0], sizes = [8, 128], strides = [1, 1]} : vector<8x384xf32> to vector<8x128xf32>
      %115 = vector.extract_strided_slice %113 {offsets = [0, 0], sizes = [8, 128], strides = [1, 1]} : vector<8x384xf32> to vector<8x128xf32>
      %116 = arith.addf %114, %115 : vector<8x128xf32>
      %117 = arith.negf %116 : vector<8x128xf32>
      %118 = math.exp %117 : vector<8x128xf32>
      %cst_52 = arith.constant 1.000000e+00 : f32
      %119 = vector.broadcast %cst_52 : f32 to vector<8x128xf32>
      %120 = arith.addf %119, %118 : vector<8x128xf32>
      %121 = arith.divf %119, %120 : vector<8x128xf32>
      %122 = vector.extract_strided_slice %110 {offsets = [0, 128], sizes = [8, 128], strides = [1, 1]} : vector<8x384xf32> to vector<8x128xf32>
      %123 = vector.extract_strided_slice %113 {offsets = [0, 128], sizes = [8, 128], strides = [1, 1]} : vector<8x384xf32> to vector<8x128xf32>
      %124 = arith.addf %122, %123 : vector<8x128xf32>
      %125 = arith.negf %124 : vector<8x128xf32>
      %126 = math.exp %125 : vector<8x128xf32>
      %cst_53 = arith.constant 1.000000e+00 : f32
      %127 = vector.broadcast %cst_53 : f32 to vector<8x128xf32>
      %128 = arith.addf %127, %126 : vector<8x128xf32>
      %129 = arith.divf %127, %128 : vector<8x128xf32>
      %130 = vector.extract_strided_slice %110 {offsets = [0, 256], sizes = [8, 128], strides = [1, 1]} : vector<8x384xf32> to vector<8x128xf32>
      %131 = vector.extract_strided_slice %113 {offsets = [0, 256], sizes = [8, 128], strides = [1, 1]} : vector<8x384xf32> to vector<8x128xf32>
      %c0_54 = arith.constant 0 : index
      %c0_55 = arith.constant 0 : index
      %c0_56 = arith.constant 0 : index
      %132 = vector.load %arg5[%c0_54, %c0_55, %c0_56] : memref<1x1x128xf32, #tpu.memory_space<vmem>>, vector<1x1x128xf32>
      %133 = vector.shape_cast %132 : vector<1x1x128xf32> to vector<1x128xf32>
      %134 = vector.broadcast %133 : vector<1x128xf32> to vector<8x128xf32>
      %135 = arith.addf %131, %134 : vector<8x128xf32>
      %136 = arith.mulf %121, %135 : vector<8x128xf32>
      %137 = arith.addf %130, %136 : vector<8x128xf32>
      %138 = math.tanh %137 : vector<8x128xf32>
      %cst_57 = arith.constant 1.000000e+00 : f32
      %139 = vector.broadcast %cst_57 : f32 to vector<8x128xf32>
      %140 = arith.subf %139, %129 : vector<8x128xf32>
      %141 = arith.mulf %140, %138 : vector<8x128xf32>
      %142 = arith.mulf %129, %98 : vector<8x128xf32>
      %143 = arith.addf %141, %142 : vector<8x128xf32>
      %c5_i32 = arith.constant 5 : i32
      %144 = vector.broadcast %c5_i32 : i32 to vector<8x1xi32>
      %145 = arith.cmpi sgt, %6, %144 : vector<8x1xi32>
      %146 = vector.shape_cast %145 : vector<8x1xi1> to vector<8x1xi1>
      %147 = vector.broadcast %146 : vector<8x1xi1> to vector<8x128xi1>
      %148 = arith.select %147, %143, %98 : vector<8x128xi1>, vector<8x128xf32>
      %cst_58 = arith.constant 0.000000e+00 : f32
      %149 = vector.shape_cast %145 : vector<8x1xi1> to vector<8x1xi1>
      %150 = vector.broadcast %149 : vector<8x1xi1> to vector<8x128xi1>
      %151 = vector.broadcast %cst_58 : f32 to vector<8x128xf32>
      %152 = arith.select %150, %143, %151 : vector<8x128xi1>, vector<8x128xf32>
      %c5_59 = arith.constant 5 : index
      %c0_60 = arith.constant 0 : index
      %c0_61 = arith.constant 0 : index
      %153 = vector.load %arg6[%c5_59, %c0_60, %c0_61] : memref<8x8x128xf32, #tpu.memory_space<vmem>>, vector<1x8x128xf32>
      %154 = vector.shape_cast %153 : vector<1x8x128xf32> to vector<8x128xf32>
      %155 = arith.addf %154, %152 : vector<8x128xf32>
      %c5_62 = arith.constant 5 : index
      %c0_63 = arith.constant 0 : index
      %c0_64 = arith.constant 0 : index
      %156 = vector.load %arg6[%c5_62, %c0_63, %c0_64] : memref<8x8x128xf32, #tpu.memory_space<vmem>>, vector<1x8x128xf32>
      %157 = vector.shape_cast %156 : vector<1x8x128xf32> to vector<8x128xf32>
      %158 = vector.shape_cast %155 : vector<8x128xf32> to vector<1x8x128xf32>
      tpu.vector_store %arg6[%c5_62, %c0_63, %c0_64], %158 {strides = array<i32>} : memref<8x8x128xf32, #tpu.memory_space<vmem>>, vector<1x8x128xf32>,
      %c0_65 = arith.constant 0 : index
      %c4 = arith.constant 4 : index
      %c0_66 = arith.constant 0 : index
      %c0_67 = arith.constant 0 : index
      %159 = vector.load %arg2[%c0_65, %c4, %c0_66, %c0_67] : memref<1x8x8x384xf32, #tpu.memory_space<vmem>>, vector<1x1x8x384xf32>
      %160 = vector.shape_cast %159 : vector<1x1x8x384xf32> to vector<8x384xf32>
      %c0_68 = arith.constant 0 : index
      %c0_69 = arith.constant 0 : index
      %c0_70 = arith.constant 0 : index
      %161 = vector.load %arg4[%c0_68, %c0_69, %c0_70] : memref<1x128x384xf32, #tpu.memory_space<vmem>>, vector<1x128x384xf32>
      %162 = vector.shape_cast %161 : vector<1x128x384xf32> to vector<128x384xf32>
      %cst_71 = arith.constant dense<0.000000e+00> : vector<8x384xf32>
      %163 = tpu.matmul %148, %162, %cst_71 {dimension_numbers = #tpu.dot_dimension_numbers<[1], [0], [0], [1], [0, 0, 1, 1], [], []>} : vector<8x128xf32>, vector<128x384xf32>, vector<8x384xf32> -> vector<8x384xf32>
      %164 = vector.extract_strided_slice %160 {offsets = [0, 0], sizes = [8, 128], strides = [1, 1]} : vector<8x384xf32> to vector<8x128xf32>
      %165 = vector.extract_strided_slice %163 {offsets = [0, 0], sizes = [8, 128], strides = [1, 1]} : vector<8x384xf32> to vector<8x128xf32>
      %166 = arith.addf %164, %165 : vector<8x128xf32>
      %167 = arith.negf %166 : vector<8x128xf32>
      %168 = math.exp %167 : vector<8x128xf32>
      %cst_72 = arith.constant 1.000000e+00 : f32
      %169 = vector.broadcast %cst_72 : f32 to vector<8x128xf32>
      %170 = arith.addf %169, %168 : vector<8x128xf32>
      %171 = arith.divf %169, %170 : vector<8x128xf32>
      %172 = vector.extract_strided_slice %160 {offsets = [0, 128], sizes = [8, 128], strides = [1, 1]} : vector<8x384xf32> to vector<8x128xf32>
      %173 = vector.extract_strided_slice %163 {offsets = [0, 128], sizes = [8, 128], strides = [1, 1]} : vector<8x384xf32> to vector<8x128xf32>
      %174 = arith.addf %172, %173 : vector<8x128xf32>
      %175 = arith.negf %174 : vector<8x128xf32>
      %176 = math.exp %175 : vector<8x128xf32>
      %cst_73 = arith.constant 1.000000e+00 : f32
      %177 = vector.broadcast %cst_73 : f32 to vector<8x128xf32>
      %178 = arith.addf %177, %176 : vector<8x128xf32>
      %179 = arith.divf %177, %178 : vector<8x128xf32>
      %180 = vector.extract_strided_slice %160 {offsets = [0, 256], sizes = [8, 128], strides = [1, 1]} : vector<8x384xf32> to vector<8x128xf32>
      %181 = vector.extract_strided_slice %163 {offsets = [0, 256], sizes = [8, 128], strides = [1, 1]} : vector<8x384xf32> to vector<8x128xf32>
      %c0_74 = arith.constant 0 : index
      %c0_75 = arith.constant 0 : index
      %c0_76 = arith.constant 0 : index
      %182 = vector.load %arg5[%c0_74, %c0_75, %c0_76] : memref<1x1x128xf32, #tpu.memory_space<vmem>>, vector<1x1x128xf32>
      %183 = vector.shape_cast %182 : vector<1x1x128xf32> to vector<1x128xf32>
      %184 = vector.broadcast %183 : vector<1x128xf32> to vector<8x128xf32>
      %185 = arith.addf %181, %184 : vector<8x128xf32>
      %186 = arith.mulf %171, %185 : vector<8x128xf32>
      %187 = arith.addf %180, %186 : vector<8x128xf32>
      %188 = math.tanh %187 : vector<8x128xf32>
      %cst_77 = arith.constant 1.000000e+00 : f32
      %189 = vector.broadcast %cst_77 : f32 to vector<8x128xf32>
      %190 = arith.subf %189, %179 : vector<8x128xf32>
      %191 = arith.mulf %190, %188 : vector<8x128xf32>
      %192 = arith.mulf %179, %148 : vector<8x128xf32>
      %193 = arith.addf %191, %192 : vector<8x128xf32>
      %c4_i32 = arith.constant 4 : i32
      %194 = vector.broadcast %c4_i32 : i32 to vector<8x1xi32>
      %195 = arith.cmpi sgt, %6, %194 : vector<8x1xi32>
      %196 = vector.shape_cast %195 : vector<8x1xi1> to vector<8x1xi1>
      %197 = vector.broadcast %196 : vector<8x1xi1> to vector<8x128xi1>
      %198 = arith.select %197, %193, %148 : vector<8x128xi1>, vector<8x128xf32>
      %cst_78 = arith.constant 0.000000e+00 : f32
      %199 = vector.shape_cast %195 : vector<8x1xi1> to vector<8x1xi1>
      %200 = vector.broadcast %199 : vector<8x1xi1> to vector<8x128xi1>
      %201 = vector.broadcast %cst_78 : f32 to vector<8x128xf32>
      %202 = arith.select %200, %193, %201 : vector<8x128xi1>, vector<8x128xf32>
      %c4_79 = arith.constant 4 : index
      %c0_80 = arith.constant 0 : index
      %c0_81 = arith.constant 0 : index
      %203 = vector.load %arg6[%c4_79, %c0_80, %c0_81] : memref<8x8x128xf32, #tpu.memory_space<vmem>>, vector<1x8x128xf32>
      %204 = vector.shape_cast %203 : vector<1x8x128xf32> to vector<8x128xf32>
      %205 = arith.addf %204, %202 : vector<8x128xf32>
      %c4_82 = arith.constant 4 : index
      %c0_83 = arith.constant 0 : index
      %c0_84 = arith.constant 0 : index
      %206 = vector.load %arg6[%c4_82, %c0_83, %c0_84] : memref<8x8x128xf32, #tpu.memory_space<vmem>>, vector<1x8x128xf32>
      %207 = vector.shape_cast %206 : vector<1x8x128xf32> to vector<8x128xf32>
      %208 = vector.shape_cast %205 : vector<8x128xf32> to vector<1x8x128xf32>
      tpu.vector_store %arg6[%c4_82, %c0_83, %c0_84], %208 {strides = array<i32>} : memref<8x8x128xf32, #tpu.memory_space<vmem>>, vector<1x8x128xf32>,
      %c0_85 = arith.constant 0 : index
      %c3 = arith.constant 3 : index
      %c0_86 = arith.constant 0 : index
      %c0_87 = arith.constant 0 : index
      %209 = vector.load %arg2[%c0_85, %c3, %c0_86, %c0_87] : memref<1x8x8x384xf32, #tpu.memory_space<vmem>>, vector<1x1x8x384xf32>
      %210 = vector.shape_cast %209 : vector<1x1x8x384xf32> to vector<8x384xf32>
      %c0_88 = arith.constant 0 : index
      %c0_89 = arith.constant 0 : index
      %c0_90 = arith.constant 0 : index
      %211 = vector.load %arg4[%c0_88, %c0_89, %c0_90] : memref<1x128x384xf32, #tpu.memory_space<vmem>>, vector<1x128x384xf32>
      %212 = vector.shape_cast %211 : vector<1x128x384xf32> to vector<128x384xf32>
      %cst_91 = arith.constant dense<0.000000e+00> : vector<8x384xf32>
      %213 = tpu.matmul %198, %212, %cst_91 {dimension_numbers = #tpu.dot_dimension_numbers<[1], [0], [0], [1], [0, 0, 1, 1], [], []>} : vector<8x128xf32>, vector<128x384xf32>, vector<8x384xf32> -> vector<8x384xf32>
      %214 = vector.extract_strided_slice %210 {offsets = [0, 0], sizes = [8, 128], strides = [1, 1]} : vector<8x384xf32> to vector<8x128xf32>
      %215 = vector.extract_strided_slice %213 {offsets = [0, 0], sizes = [8, 128], strides = [1, 1]} : vector<8x384xf32> to vector<8x128xf32>
      %216 = arith.addf %214, %215 : vector<8x128xf32>
      %217 = arith.negf %216 : vector<8x128xf32>
      %218 = math.exp %217 : vector<8x128xf32>
      %cst_92 = arith.constant 1.000000e+00 : f32
      %219 = vector.broadcast %cst_92 : f32 to vector<8x128xf32>
      %220 = arith.addf %219, %218 : vector<8x128xf32>
      %221 = arith.divf %219, %220 : vector<8x128xf32>
      %222 = vector.extract_strided_slice %210 {offsets = [0, 128], sizes = [8, 128], strides = [1, 1]} : vector<8x384xf32> to vector<8x128xf32>
      %223 = vector.extract_strided_slice %213 {offsets = [0, 128], sizes = [8, 128], strides = [1, 1]} : vector<8x384xf32> to vector<8x128xf32>
      %224 = arith.addf %222, %223 : vector<8x128xf32>
      %225 = arith.negf %224 : vector<8x128xf32>
      %226 = math.exp %225 : vector<8x128xf32>
      %cst_93 = arith.constant 1.000000e+00 : f32
      %227 = vector.broadcast %cst_93 : f32 to vector<8x128xf32>
      %228 = arith.addf %227, %226 : vector<8x128xf32>
      %229 = arith.divf %227, %228 : vector<8x128xf32>
      %230 = vector.extract_strided_slice %210 {offsets = [0, 256], sizes = [8, 128], strides = [1, 1]} : vector<8x384xf32> to vector<8x128xf32>
      %231 = vector.extract_strided_slice %213 {offsets = [0, 256], sizes = [8, 128], strides = [1, 1]} : vector<8x384xf32> to vector<8x128xf32>
      %c0_94 = arith.constant 0 : index
      %c0_95 = arith.constant 0 : index
      %c0_96 = arith.constant 0 : index
      %232 = vector.load %arg5[%c0_94, %c0_95, %c0_96] : memref<1x1x128xf32, #tpu.memory_space<vmem>>, vector<1x1x128xf32>
      %233 = vector.shape_cast %232 : vector<1x1x128xf32> to vector<1x128xf32>
      %234 = vector.broadcast %233 : vector<1x128xf32> to vector<8x128xf32>
      %235 = arith.addf %231, %234 : vector<8x128xf32>
      %236 = arith.mulf %221, %235 : vector<8x128xf32>
      %237 = arith.addf %230, %236 : vector<8x128xf32>
      %238 = math.tanh %237 : vector<8x128xf32>
      %cst_97 = arith.constant 1.000000e+00 : f32
      %239 = vector.broadcast %cst_97 : f32 to vector<8x128xf32>
      %240 = arith.subf %239, %229 : vector<8x128xf32>
      %241 = arith.mulf %240, %238 : vector<8x128xf32>
      %242 = arith.mulf %229, %198 : vector<8x128xf32>
      %243 = arith.addf %241, %242 : vector<8x128xf32>
      %c3_i32 = arith.constant 3 : i32
      %244 = vector.broadcast %c3_i32 : i32 to vector<8x1xi32>
      %245 = arith.cmpi sgt, %6, %244 : vector<8x1xi32>
      %246 = vector.shape_cast %245 : vector<8x1xi1> to vector<8x1xi1>
      %247 = vector.broadcast %246 : vector<8x1xi1> to vector<8x128xi1>
      %248 = arith.select %247, %243, %198 : vector<8x128xi1>, vector<8x128xf32>
      %cst_98 = arith.constant 0.000000e+00 : f32
      %249 = vector.shape_cast %245 : vector<8x1xi1> to vector<8x1xi1>
      %250 = vector.broadcast %249 : vector<8x1xi1> to vector<8x128xi1>
      %251 = vector.broadcast %cst_98 : f32 to vector<8x128xf32>
      %252 = arith.select %250, %243, %251 : vector<8x128xi1>, vector<8x128xf32>
      %c3_99 = arith.constant 3 : index
      %c0_100 = arith.constant 0 : index
      %c0_101 = arith.constant 0 : index
      %253 = vector.load %arg6[%c3_99, %c0_100, %c0_101] : memref<8x8x128xf32, #tpu.memory_space<vmem>>, vector<1x8x128xf32>
      %254 = vector.shape_cast %253 : vector<1x8x128xf32> to vector<8x128xf32>
      %255 = arith.addf %254, %252 : vector<8x128xf32>
      %c3_102 = arith.constant 3 : index
      %c0_103 = arith.constant 0 : index
      %c0_104 = arith.constant 0 : index
      %256 = vector.load %arg6[%c3_102, %c0_103, %c0_104] : memref<8x8x128xf32, #tpu.memory_space<vmem>>, vector<1x8x128xf32>
      %257 = vector.shape_cast %256 : vector<1x8x128xf32> to vector<8x128xf32>
      %258 = vector.shape_cast %255 : vector<8x128xf32> to vector<1x8x128xf32>
      tpu.vector_store %arg6[%c3_102, %c0_103, %c0_104], %258 {strides = array<i32>} : memref<8x8x128xf32, #tpu.memory_space<vmem>>, vector<1x8x128xf32>,
      %c0_105 = arith.constant 0 : index
      %c2 = arith.constant 2 : index
      %c0_106 = arith.constant 0 : index
      %c0_107 = arith.constant 0 : index
      %259 = vector.load %arg2[%c0_105, %c2, %c0_106, %c0_107] : memref<1x8x8x384xf32, #tpu.memory_space<vmem>>, vector<1x1x8x384xf32>
      %260 = vector.shape_cast %259 : vector<1x1x8x384xf32> to vector<8x384xf32>
      %c0_108 = arith.constant 0 : index
      %c0_109 = arith.constant 0 : index
      %c0_110 = arith.constant 0 : index
      %261 = vector.load %arg4[%c0_108, %c0_109, %c0_110] : memref<1x128x384xf32, #tpu.memory_space<vmem>>, vector<1x128x384xf32>
      %262 = vector.shape_cast %261 : vector<1x128x384xf32> to vector<128x384xf32>
      %cst_111 = arith.constant dense<0.000000e+00> : vector<8x384xf32>
      %263 = tpu.matmul %248, %262, %cst_111 {dimension_numbers = #tpu.dot_dimension_numbers<[1], [0], [0], [1], [0, 0, 1, 1], [], []>} : vector<8x128xf32>, vector<128x384xf32>, vector<8x384xf32> -> vector<8x384xf32>
      %264 = vector.extract_strided_slice %260 {offsets = [0, 0], sizes = [8, 128], strides = [1, 1]} : vector<8x384xf32> to vector<8x128xf32>
      %265 = vector.extract_strided_slice %263 {offsets = [0, 0], sizes = [8, 128], strides = [1, 1]} : vector<8x384xf32> to vector<8x128xf32>
      %266 = arith.addf %264, %265 : vector<8x128xf32>
      %267 = arith.negf %266 : vector<8x128xf32>
      %268 = math.exp %267 : vector<8x128xf32>
      %cst_112 = arith.constant 1.000000e+00 : f32
      %269 = vector.broadcast %cst_112 : f32 to vector<8x128xf32>
      %270 = arith.addf %269, %268 : vector<8x128xf32>
      %271 = arith.divf %269, %270 : vector<8x128xf32>
      %272 = vector.extract_strided_slice %260 {offsets = [0, 128], sizes = [8, 128], strides = [1, 1]} : vector<8x384xf32> to vector<8x128xf32>
      %273 = vector.extract_strided_slice %263 {offsets = [0, 128], sizes = [8, 128], strides = [1, 1]} : vector<8x384xf32> to vector<8x128xf32>
      %274 = arith.addf %272, %273 : vector<8x128xf32>
      %275 = arith.negf %274 : vector<8x128xf32>
      %276 = math.exp %275 : vector<8x128xf32>
      %cst_113 = arith.constant 1.000000e+00 : f32
      %277 = vector.broadcast %cst_113 : f32 to vector<8x128xf32>
      %278 = arith.addf %277, %276 : vector<8x128xf32>
      %279 = arith.divf %277, %278 : vector<8x128xf32>
      %280 = vector.extract_strided_slice %260 {offsets = [0, 256], sizes = [8, 128], strides = [1, 1]} : vector<8x384xf32> to vector<8x128xf32>
      %281 = vector.extract_strided_slice %263 {offsets = [0, 256], sizes = [8, 128], strides = [1, 1]} : vector<8x384xf32> to vector<8x128xf32>
      %c0_114 = arith.constant 0 : index
      %c0_115 = arith.constant 0 : index
      %c0_116 = arith.constant 0 : index
      %282 = vector.load %arg5[%c0_114, %c0_115, %c0_116] : memref<1x1x128xf32, #tpu.memory_space<vmem>>, vector<1x1x128xf32>
      %283 = vector.shape_cast %282 : vector<1x1x128xf32> to vector<1x128xf32>
      %284 = vector.broadcast %283 : vector<1x128xf32> to vector<8x128xf32>
      %285 = arith.addf %281, %284 : vector<8x128xf32>
      %286 = arith.mulf %271, %285 : vector<8x128xf32>
      %287 = arith.addf %280, %286 : vector<8x128xf32>
      %288 = math.tanh %287 : vector<8x128xf32>
      %cst_117 = arith.constant 1.000000e+00 : f32
      %289 = vector.broadcast %cst_117 : f32 to vector<8x128xf32>
      %290 = arith.subf %289, %279 : vector<8x128xf32>
      %291 = arith.mulf %290, %288 : vector<8x128xf32>
      %292 = arith.mulf %279, %248 : vector<8x128xf32>
      %293 = arith.addf %291, %292 : vector<8x128xf32>
      %c2_i32 = arith.constant 2 : i32
      %294 = vector.broadcast %c2_i32 : i32 to vector<8x1xi32>
      %295 = arith.cmpi sgt, %6, %294 : vector<8x1xi32>
      %296 = vector.shape_cast %295 : vector<8x1xi1> to vector<8x1xi1>
      %297 = vector.broadcast %296 : vector<8x1xi1> to vector<8x128xi1>
      %298 = arith.select %297, %293, %248 : vector<8x128xi1>, vector<8x128xf32>
      %cst_118 = arith.constant 0.000000e+00 : f32
      %299 = vector.shape_cast %295 : vector<8x1xi1> to vector<8x1xi1>
      %300 = vector.broadcast %299 : vector<8x1xi1> to vector<8x128xi1>
      %301 = vector.broadcast %cst_118 : f32 to vector<8x128xf32>
      %302 = arith.select %300, %293, %301 : vector<8x128xi1>, vector<8x128xf32>
      %c2_119 = arith.constant 2 : index
      %c0_120 = arith.constant 0 : index
      %c0_121 = arith.constant 0 : index
      %303 = vector.load %arg6[%c2_119, %c0_120, %c0_121] : memref<8x8x128xf32, #tpu.memory_space<vmem>>, vector<1x8x128xf32>
      %304 = vector.shape_cast %303 : vector<1x8x128xf32> to vector<8x128xf32>
      %305 = arith.addf %304, %302 : vector<8x128xf32>
      %c2_122 = arith.constant 2 : index
      %c0_123 = arith.constant 0 : index
      %c0_124 = arith.constant 0 : index
      %306 = vector.load %arg6[%c2_122, %c0_123, %c0_124] : memref<8x8x128xf32, #tpu.memory_space<vmem>>, vector<1x8x128xf32>
      %307 = vector.shape_cast %306 : vector<1x8x128xf32> to vector<8x128xf32>
      %308 = vector.shape_cast %305 : vector<8x128xf32> to vector<1x8x128xf32>
      tpu.vector_store %arg6[%c2_122, %c0_123, %c0_124], %308 {strides = array<i32>} : memref<8x8x128xf32, #tpu.memory_space<vmem>>, vector<1x8x128xf32>,
      %c0_125 = arith.constant 0 : index
      %c1 = arith.constant 1 : index
      %c0_126 = arith.constant 0 : index
      %c0_127 = arith.constant 0 : index
      %309 = vector.load %arg2[%c0_125, %c1, %c0_126, %c0_127] : memref<1x8x8x384xf32, #tpu.memory_space<vmem>>, vector<1x1x8x384xf32>
      %310 = vector.shape_cast %309 : vector<1x1x8x384xf32> to vector<8x384xf32>
      %c0_128 = arith.constant 0 : index
      %c0_129 = arith.constant 0 : index
      %c0_130 = arith.constant 0 : index
      %311 = vector.load %arg4[%c0_128, %c0_129, %c0_130] : memref<1x128x384xf32, #tpu.memory_space<vmem>>, vector<1x128x384xf32>
      %312 = vector.shape_cast %311 : vector<1x128x384xf32> to vector<128x384xf32>
      %cst_131 = arith.constant dense<0.000000e+00> : vector<8x384xf32>
      %313 = tpu.matmul %298, %312, %cst_131 {dimension_numbers = #tpu.dot_dimension_numbers<[1], [0], [0], [1], [0, 0, 1, 1], [], []>} : vector<8x128xf32>, vector<128x384xf32>, vector<8x384xf32> -> vector<8x384xf32>
      %314 = vector.extract_strided_slice %310 {offsets = [0, 0], sizes = [8, 128], strides = [1, 1]} : vector<8x384xf32> to vector<8x128xf32>
      %315 = vector.extract_strided_slice %313 {offsets = [0, 0], sizes = [8, 128], strides = [1, 1]} : vector<8x384xf32> to vector<8x128xf32>
      %316 = arith.addf %314, %315 : vector<8x128xf32>
      %317 = arith.negf %316 : vector<8x128xf32>
      %318 = math.exp %317 : vector<8x128xf32>
      %cst_132 = arith.constant 1.000000e+00 : f32
      %319 = vector.broadcast %cst_132 : f32 to vector<8x128xf32>
      %320 = arith.addf %319, %318 : vector<8x128xf32>
      %321 = arith.divf %319, %320 : vector<8x128xf32>
      %322 = vector.extract_strided_slice %310 {offsets = [0, 128], sizes = [8, 128], strides = [1, 1]} : vector<8x384xf32> to vector<8x128xf32>
      %323 = vector.extract_strided_slice %313 {offsets = [0, 128], sizes = [8, 128], strides = [1, 1]} : vector<8x384xf32> to vector<8x128xf32>
      %324 = arith.addf %322, %323 : vector<8x128xf32>
      %325 = arith.negf %324 : vector<8x128xf32>
      %326 = math.exp %325 : vector<8x128xf32>
      %cst_133 = arith.constant 1.000000e+00 : f32
      %327 = vector.broadcast %cst_133 : f32 to vector<8x128xf32>
      %328 = arith.addf %327, %326 : vector<8x128xf32>
      %329 = arith.divf %327, %328 : vector<8x128xf32>
      %330 = vector.extract_strided_slice %310 {offsets = [0, 256], sizes = [8, 128], strides = [1, 1]} : vector<8x384xf32> to vector<8x128xf32>
      %331 = vector.extract_strided_slice %313 {offsets = [0, 256], sizes = [8, 128], strides = [1, 1]} : vector<8x384xf32> to vector<8x128xf32>
      %c0_134 = arith.constant 0 : index
      %c0_135 = arith.constant 0 : index
      %c0_136 = arith.constant 0 : index
      %332 = vector.load %arg5[%c0_134, %c0_135, %c0_136] : memref<1x1x128xf32, #tpu.memory_space<vmem>>, vector<1x1x128xf32>
      %333 = vector.shape_cast %332 : vector<1x1x128xf32> to vector<1x128xf32>
      %334 = vector.broadcast %333 : vector<1x128xf32> to vector<8x128xf32>
      %335 = arith.addf %331, %334 : vector<8x128xf32>
      %336 = arith.mulf %321, %335 : vector<8x128xf32>
      %337 = arith.addf %330, %336 : vector<8x128xf32>
      %338 = math.tanh %337 : vector<8x128xf32>
      %cst_137 = arith.constant 1.000000e+00 : f32
      %339 = vector.broadcast %cst_137 : f32 to vector<8x128xf32>
      %340 = arith.subf %339, %329 : vector<8x128xf32>
      %341 = arith.mulf %340, %338 : vector<8x128xf32>
      %342 = arith.mulf %329, %298 : vector<8x128xf32>
      %343 = arith.addf %341, %342 : vector<8x128xf32>
      %c1_i32_138 = arith.constant 1 : i32
      %344 = vector.broadcast %c1_i32_138 : i32 to vector<8x1xi32>
      %345 = arith.cmpi sgt, %6, %344 : vector<8x1xi32>
      %346 = vector.shape_cast %345 : vector<8x1xi1> to vector<8x1xi1>
      %347 = vector.broadcast %346 : vector<8x1xi1> to vector<8x128xi1>
      %348 = arith.select %347, %343, %298 : vector<8x128xi1>, vector<8x128xf32>
      %cst_139 = arith.constant 0.000000e+00 : f32
      %349 = vector.shape_cast %345 : vector<8x1xi1> to vector<8x1xi1>
      %350 = vector.broadcast %349 : vector<8x1xi1> to vector<8x128xi1>
      %351 = vector.broadcast %cst_139 : f32 to vector<8x128xf32>
      %352 = arith.select %350, %343, %351 : vector<8x128xi1>, vector<8x128xf32>
      %c1_140 = arith.constant 1 : index
      %c0_141 = arith.constant 0 : index
      %c0_142 = arith.constant 0 : index
      %353 = vector.load %arg6[%c1_140, %c0_141, %c0_142] : memref<8x8x128xf32, #tpu.memory_space<vmem>>, vector<1x8x128xf32>
      %354 = vector.shape_cast %353 : vector<1x8x128xf32> to vector<8x128xf32>
      %355 = arith.addf %354, %352 : vector<8x128xf32>
      %c1_143 = arith.constant 1 : index
      %c0_144 = arith.constant 0 : index
      %c0_145 = arith.constant 0 : index
      %356 = vector.load %arg6[%c1_143, %c0_144, %c0_145] : memref<8x8x128xf32, #tpu.memory_space<vmem>>, vector<1x8x128xf32>
      %357 = vector.shape_cast %356 : vector<1x8x128xf32> to vector<8x128xf32>
      %358 = vector.shape_cast %355 : vector<8x128xf32> to vector<1x8x128xf32>
      tpu.vector_store %arg6[%c1_143, %c0_144, %c0_145], %358 {strides = array<i32>} : memref<8x8x128xf32, #tpu.memory_space<vmem>>, vector<1x8x128xf32>,
      %c0_146 = arith.constant 0 : index
      %c0_147 = arith.constant 0 : index
      %c0_148 = arith.constant 0 : index
      %c0_149 = arith.constant 0 : index
      %359 = vector.load %arg2[%c0_146, %c0_147, %c0_148, %c0_149] : memref<1x8x8x384xf32, #tpu.memory_space<vmem>>, vector<1x1x8x384xf32>
      %360 = vector.shape_cast %359 : vector<1x1x8x384xf32> to vector<8x384xf32>
      %c0_150 = arith.constant 0 : index
      %c0_151 = arith.constant 0 : index
      %c0_152 = arith.constant 0 : index
      %361 = vector.load %arg4[%c0_150, %c0_151, %c0_152] : memref<1x128x384xf32, #tpu.memory_space<vmem>>, vector<1x128x384xf32>
      %362 = vector.shape_cast %361 : vector<1x128x384xf32> to vector<128x384xf32>
      %cst_153 = arith.constant dense<0.000000e+00> : vector<8x384xf32>
      %363 = tpu.matmul %348, %362, %cst_153 {dimension_numbers = #tpu.dot_dimension_numbers<[1], [0], [0], [1], [0, 0, 1, 1], [], []>} : vector<8x128xf32>, vector<128x384xf32>, vector<8x384xf32> -> vector<8x384xf32>
      %364 = vector.extract_strided_slice %360 {offsets = [0, 0], sizes = [8, 128], strides = [1, 1]} : vector<8x384xf32> to vector<8x128xf32>
      %365 = vector.extract_strided_slice %363 {offsets = [0, 0], sizes = [8, 128], strides = [1, 1]} : vector<8x384xf32> to vector<8x128xf32>
      %366 = arith.addf %364, %365 : vector<8x128xf32>
      %367 = arith.negf %366 : vector<8x128xf32>
      %368 = math.exp %367 : vector<8x128xf32>
      %cst_154 = arith.constant 1.000000e+00 : f32
      %369 = vector.broadcast %cst_154 : f32 to vector<8x128xf32>
      %370 = arith.addf %369, %368 : vector<8x128xf32>
      %371 = arith.divf %369, %370 : vector<8x128xf32>
      %372 = vector.extract_strided_slice %360 {offsets = [0, 128], sizes = [8, 128], strides = [1, 1]} : vector<8x384xf32> to vector<8x128xf32>
      %373 = vector.extract_strided_slice %363 {offsets = [0, 128], sizes = [8, 128], strides = [1, 1]} : vector<8x384xf32> to vector<8x128xf32>
      %374 = arith.addf %372, %373 : vector<8x128xf32>
      %375 = arith.negf %374 : vector<8x128xf32>
      %376 = math.exp %375 : vector<8x128xf32>
      %cst_155 = arith.constant 1.000000e+00 : f32
      %377 = vector.broadcast %cst_155 : f32 to vector<8x128xf32>
      %378 = arith.addf %377, %376 : vector<8x128xf32>
      %379 = arith.divf %377, %378 : vector<8x128xf32>
      %380 = vector.extract_strided_slice %360 {offsets = [0, 256], sizes = [8, 128], strides = [1, 1]} : vector<8x384xf32> to vector<8x128xf32>
      %381 = vector.extract_strided_slice %363 {offsets = [0, 256], sizes = [8, 128], strides = [1, 1]} : vector<8x384xf32> to vector<8x128xf32>
      %c0_156 = arith.constant 0 : index
      %c0_157 = arith.constant 0 : index
      %c0_158 = arith.constant 0 : index
      %382 = vector.load %arg5[%c0_156, %c0_157, %c0_158] : memref<1x1x128xf32, #tpu.memory_space<vmem>>, vector<1x1x128xf32>
      %383 = vector.shape_cast %382 : vector<1x1x128xf32> to vector<1x128xf32>
      %384 = vector.broadcast %383 : vector<1x128xf32> to vector<8x128xf32>
      %385 = arith.addf %381, %384 : vector<8x128xf32>
      %386 = arith.mulf %371, %385 : vector<8x128xf32>
      %387 = arith.addf %380, %386 : vector<8x128xf32>
      %388 = math.tanh %387 : vector<8x128xf32>
      %cst_159 = arith.constant 1.000000e+00 : f32
      %389 = vector.broadcast %cst_159 : f32 to vector<8x128xf32>
      %390 = arith.subf %389, %379 : vector<8x128xf32>
      %391 = arith.mulf %390, %388 : vector<8x128xf32>
      %392 = arith.mulf %379, %348 : vector<8x128xf32>
      %393 = arith.addf %391, %392 : vector<8x128xf32>
      %c0_i32_160 = arith.constant 0 : i32
      %394 = vector.broadcast %c0_i32_160 : i32 to vector<8x1xi32>
      %395 = arith.cmpi sgt, %6, %394 : vector<8x1xi32>
      %396 = vector.shape_cast %395 : vector<8x1xi1> to vector<8x1xi1>
      %397 = vector.broadcast %396 : vector<8x1xi1> to vector<8x128xi1>
      %398 = arith.select %397, %393, %348 : vector<8x128xi1>, vector<8x128xf32>
      %cst_161 = arith.constant 0.000000e+00 : f32
      %399 = vector.shape_cast %395 : vector<8x1xi1> to vector<8x1xi1>
      %400 = vector.broadcast %399 : vector<8x1xi1> to vector<8x128xi1>
      %401 = vector.broadcast %cst_161 : f32 to vector<8x128xf32>
      %402 = arith.select %400, %393, %401 : vector<8x128xi1>, vector<8x128xf32>
      %c0_162 = arith.constant 0 : index
      %c0_163 = arith.constant 0 : index
      %c0_164 = arith.constant 0 : index
      %403 = vector.load %arg6[%c0_162, %c0_163, %c0_164] : memref<8x8x128xf32, #tpu.memory_space<vmem>>, vector<1x8x128xf32>
      %404 = vector.shape_cast %403 : vector<1x8x128xf32> to vector<8x128xf32>
      %405 = arith.addf %404, %402 : vector<8x128xf32>
      %c0_165 = arith.constant 0 : index
      %c0_166 = arith.constant 0 : index
      %c0_167 = arith.constant 0 : index
      %406 = vector.load %arg6[%c0_165, %c0_166, %c0_167] : memref<8x8x128xf32, #tpu.memory_space<vmem>>, vector<1x8x128xf32>
      %407 = vector.shape_cast %406 : vector<1x8x128xf32> to vector<8x128xf32>
      %408 = vector.shape_cast %405 : vector<8x128xf32> to vector<1x8x128xf32>
      tpu.vector_store %arg6[%c0_165, %c0_166, %c0_167], %408 {strides = array<i32>} : memref<8x8x128xf32, #tpu.memory_space<vmem>>, vector<1x8x128xf32>,
      %c0_168 = arith.constant 0 : index
      %c0_169 = arith.constant 0 : index
      %c0_170 = arith.constant 0 : index
      %409 = vector.load %arg7[%c0_168, %c0_169, %c0_170] : memref<1x8x128xf32, #tpu.memory_space<vmem>>, vector<1x8x128xf32>
      %410 = vector.shape_cast %409 : vector<1x8x128xf32> to vector<8x128xf32>
      %411 = vector.shape_cast %398 : vector<8x128xf32> to vector<1x8x128xf32>
      tpu.vector_store %arg7[%c0_168, %c0_169, %c0_170], %411 {strides = array<i32>} : memref<1x8x128xf32, #tpu.memory_space<vmem>>, vector<1x8x128xf32>,
    } else {
    }
    return
  }
  func.func @transform_0(%arg0: i32) -> (i32, i32) {
    %c0_i32 = arith.constant 0 : i32
    %c0_i32_0 = arith.constant 0 : i32
    %c0_i32_1 = arith.constant 0 : i32
    return %c0_i32, %c0_i32_0 : i32, i32
  }
  func.func @transform_1(%arg0: i32) -> (i32, i32, i32, i32) {
    %c0_i32 = arith.constant 0 : i32
    %c0_i32_0 = arith.constant 0 : i32
    %c0_i32_1 = arith.constant 0 : i32
    %c0_i32_2 = arith.constant 0 : i32
    return %arg0, %c0_i32, %c0_i32_0, %c0_i32_1 : i32, i32, i32, i32
  }
  func.func @transform_2(%arg0: i32) -> (i32, i32, i32) {
    %c0_i32 = arith.constant 0 : i32
    %c0_i32_0 = arith.constant 0 : i32
    %c0_i32_1 = arith.constant 0 : i32
    return %arg0, %c0_i32, %c0_i32_0 : i32, i32, i32
  }
  func.func @transform_3(%arg0: i32) -> (i32, i32, i32) {
    %c0_i32 = arith.constant 0 : i32
    %c0_i32_0 = arith.constant 0 : i32
    %c0_i32_1 = arith.constant 0 : i32
    return %arg0, %c0_i32, %c0_i32_0 : i32, i32, i32
  }
  func.func @transform_4(%arg0: i32) -> (i32, i32, i32) {
    %c0_i32 = arith.constant 0 : i32
    %c0_i32_0 = arith.constant 0 : i32
    %c0_i32_1 = arith.constant 0 : i32
    return %arg0, %c0_i32, %c0_i32_0 : i32, i32, i32
  }
  func.func @transform_5(%arg0: i32) -> (i32, i32, i32) {
    %c0_i32 = arith.constant 0 : i32
    %c0_i32_0 = arith.constant 0 : i32
    %c0_i32_1 = arith.constant 0 : i32
    %c0_i32_2 = arith.constant 0 : i32
    return %c0_i32, %c0_i32_0, %c0_i32_1 : i32, i32, i32
  }
  func.func @transform_6(%arg0: i32) -> (i32, i32, i32) {
    %c0_i32 = arith.constant 0 : i32
    %c0_i32_0 = arith.constant 0 : i32
    %c0_i32_1 = arith.constant 0 : i32
    return %arg0, %c0_i32, %c0_i32_0 : i32, i32, i32
  }
}

</mosaic_0001>

<llo_original>
// kernel: tpu_custom_call.1
$region0: #{tpu_custom_call.1}
  #allocation0 [shape = 'u32[]', space=smem, size = 0x4, offset = 0x4, fixed_abs, tag = 'smem constant byte address 0x4 - core index']
  #allocation1 [shape = 'u32[144,128]{1,0:T(1,128)}', space=vmem, size = 0x12000, scoped, tag = 'internal scratch']
  %s0 = inlined_call_operand.vmem [shape: s32[8,1], index: 0, kind: input, shape index: {}]
  %s1 = inlined_call_operand.hbm [shape: f32[2,8,8,384], index: 1, kind: input, shape index: {}]
  %s2 = inlined_call_operand.vmem [shape: f32[2,8,128], index: 2, kind: input, shape index: {}]
  %s3 = inlined_call_operand.hbm [shape: f32[2,128,384], index: 3, kind: input, shape index: {}]
  %s4 = inlined_call_operand.vmem [shape: f32[2,1,128], index: 4, kind: input, shape index: {}]
  %s5 = inlined_call_operand.hbm [shape: f32[8,8,128], index: 5, kind: output, shape index: {0}]
  %s6 = inlined_call_operand.hbm [shape: f32[2,8,128], index: 6, kind: output, shape index: {1}]
  %7 = xla_tuple %s5, %s6
  %s8 = sld [smem:[#allocation0]]
  $region77: #{tpu_custom_call.1} parent=0
    _
  %s10 = ssub.s32 1, %s8
  %s11 = scalar_select 0, %s10, %s8
  $region1: #{tpu_custom_call.1} parent=0
    #allocation2 [shape = 'u8[196608]{0}', space=vmem, size = 0x30000, scoped, tag = 'input window, operand 1']
    #allocation3 [shape = 's32[2]{0}', space=sflag, size = 0x8, scoped, tag = 'scoped memory for tpu_custom_call.1']
    #allocation4 [shape = 's32[2]{0}', space=sflag, size = 0x8, scoped, tag = 'scoped memory for tpu_custom_call.1']
    #allocation5 [shape = 'u8[393216]{0}', space=vmem, size = 0x60000, scoped, tag = 'input window, operand 3']
    #allocation6 [shape = 's32[2]{0}', space=sflag, size = 0x8, scoped, tag = 'scoped memory for tpu_custom_call.1']
    #allocation7 [shape = 'u8[32768]{0}', space=vmem, size = 0x8000, scoped, tag = 'output window, operand 0, single buffered']
    #allocation8 [shape = 'u8[8192]{0}', space=vmem, size = 0x2000, scoped, tag = 'output window, operand 1']
    #allocation9 [shape = 's32[2]{0}', space=sflag, size = 0x8, scoped, tag = 'scoped memory for tpu_custom_call.1']
    %12 = vsyncpa [#allocation3], 0
    %s13 = scalar_lea.sflag [#allocation3], 1
    %14 = vsyncpa %s13, 0
    %15 = vsyncpa [#allocation6], 0
    %s16 = scalar_lea.sflag [#allocation6], 1
    %17 = vsyncpa %s16, 0
    %18 = vsyncpa [#allocation4], 0
    %19 = vsyncpa [#allocation9], 0
    %s20 = scalar_lea.sflag [#allocation9], 1
    %21 = vsyncpa %s20, 0
    loop: start=0, step=1, limit=4
    $region2: #{tpu_custom_call.1} parent=1 // loop_pre_header
      _
    $region3: #{tpu_custom_call.1} parent=1 // loop_header
      %s23 = sphi 0, %s27
      %p24 = scmp.ge.s32.totalorder %s23, 4
      %s31 = sphi 0, %s31
      %s33 = sphi 0, %s31
      %s34 = sphi 0, %s33
      %s48 = sphi 0, %s34
      %s54 = sphi 0, %s56
      %s57 = sphi 0, %s54
      %s58 = sphi 0, %s57
      %s74 = sphi 0, %s58
      %s80 = sphi 0, %s82
      %s83 = sphi 0, %s80
      %s84 = sphi 0, %s83
      %s100 = sphi 0, %s84
      %s106 = sphi 0, %s108
      %s109 = sphi 0, %s106
      %s110 = sphi 0, %s109
      %s126 = sphi 0, %s110
      %s132 = sphi 0, %s134
      %s135 = sphi 0, %s132
      %s136 = sphi 0, %s135
      %s152 = sphi 0, %s136
      %s156 = sphi 0, %s156
      %s158 = sphi 0, %s156
      %s159 = sphi 0, %s158
      %s173 = sphi 0, %s159
      %s179 = sphi 0, %s181
      %s182 = sphi 0, %s179
      %s183 = sphi 0, %s182
      %s199 = sphi 0, %s183
    $region4: #{tpu_custom_call.1} parent=1 // loop_header_branch
      %26 = sbr.rel (%p24) target = $region8
    $region5: #{tpu_custom_call.1} parent=1 // loop_body
      %s28 = ssub.s32 %s23, 1
      %s29 = ssub.s32 %s23, 2
      %s30 = sadd.s32 %s23, 1
      %s32 = sadd.s32 %s31, 1
      %p35 = scmp.eq.s32.totalorder %s23, 1
      %p36 = scmp.ne.s32.totalorder %s31, %s33
      %p37 = scmp.eq.s32.totalorder %s23, 0
      %p38 = por %p36, %p37
      %p39 = scmp.ne.s32.totalorder %s31, %s33
      %p40 = scmp.eq.s32.totalorder %s28, 1
      %p41 = por %p39, %p40
      %p42 = scmp.ne.s32.totalorder %s33, %s34
      %p43 = scmp.eq.s32.totalorder %s28, 0
      %p44 = por %p42, %p43
      %p45 = scmp.ne.s32.totalorder %s33, %s34
      %p46 = scmp.eq.s32.totalorder %s29, 1
      %p47 = por %p45, %p46
      %p49 = scmp.ne.s32.totalorder %s34, %s48
      %p50 = scmp.eq.s32.totalorder %s29, 0
      %p51 = por %p49, %p50
      %s52 = ssub.s32 %s23, %s30
      %p53 = scmp.eq.s32.totalorder %s52, 0
      %s55 = sadd.s32 %s54, 1
      %s56 = scalar_select %p53, %s54, %s55
      %p59 = pneg %p53
      %p60 = scmp.eq.s32.totalorder %s23, 1
      %p61 = por %p59, %p60
      %p62 = scmp.ne.s32.totalorder %s54, %s57
      %p63 = scmp.eq.s32.totalorder %s23, 0
      %p64 = por %p62, %p63
      %p65 = scmp.ne.s32.totalorder %s54, %s57
      %p66 = scmp.eq.s32.totalorder %s28, 1
      %p67 = por %p65, %p66
      %p68 = scmp.ne.s32.totalorder %s57, %s58
      %p69 = scmp.eq.s32.totalorder %s28, 0
      %p70 = por %p68, %p69
      %p71 = scmp.ne.s32.totalorder %s57, %s58
      %p72 = scmp.eq.s32.totalorder %s29, 1
      %p73 = por %p71, %p72
      %p75 = scmp.ne.s32.totalorder %s58, %s74
      %p76 = scmp.eq.s32.totalorder %s29, 0
      %p77 = por %p75, %p76
      %s78 = ssub.s32 %s23, %s30
      %p79 = scmp.eq.s32.totalorder %s78, 0
      %s81 = sadd.s32 %s80, 1
      %s82 = scalar_select %p79, %s80, %s81
      %p85 = pneg %p79
      %p86 = scmp.eq.s32.totalorder %s23, 1
      %p87 = por %p85, %p86
      %p88 = scmp.ne.s32.totalorder %s80, %s83
      %p89 = scmp.eq.s32.totalorder %s23, 0
      %p90 = por %p88, %p89
      %p91 = scmp.ne.s32.totalorder %s80, %s83
      %p92 = scmp.eq.s32.totalorder %s28, 1
      %p93 = por %p91, %p92
      %p94 = scmp.ne.s32.totalorder %s83, %s84
      %p95 = scmp.eq.s32.totalorder %s28, 0
      %p96 = por %p94, %p95
      %p97 = scmp.ne.s32.totalorder %s83, %s84
      %p98 = scmp.eq.s32.totalorder %s29, 1
      %p99 = por %p97, %p98
      %p101 = scmp.ne.s32.totalorder %s84, %s100
      %p102 = scmp.eq.s32.totalorder %s29, 0
      %p103 = por %p101, %p102
      %s104 = ssub.s32 %s23, %s30
      %p105 = scmp.eq.s32.totalorder %s104, 0
      %s107 = sadd.s32 %s106, 1
      %s108 = scalar_select %p105, %s106, %s107
      %p111 = pneg %p105
      %p112 = scmp.eq.s32.totalorder %s23, 1
      %p113 = por %p111, %p112
      %p114 = scmp.ne.s32.totalorder %s106, %s109
      %p115 = scmp.eq.s32.totalorder %s23, 0
      %p116 = por %p114, %p115
      %p117 = scmp.ne.s32.totalorder %s106, %s109
      %p118 = scmp.eq.s32.totalorder %s28, 1
      %p119 = por %p117, %p118
      %p120 = scmp.ne.s32.totalorder %s109, %s110
      %p121 = scmp.eq.s32.totalorder %s28, 0
      %p122 = por %p120, %p121
      %p123 = scmp.ne.s32.totalorder %s109, %s110
      %p124 = scmp.eq.s32.totalorder %s29, 1
      %p125 = por %p123, %p124
      %p127 = scmp.ne.s32.totalorder %s110, %s126
      %p128 = scmp.eq.s32.totalorder %s29, 0
      %p129 = por %p127, %p128
      %s130 = ssub.s32 %s23, %s30
      %p131 = scmp.eq.s32.totalorder %s130, 0
      %s133 = sadd.s32 %s132, 1
      %s134 = scalar_select %p131, %s132, %s133
      %p137 = pneg %p131
      %p138 = scmp.eq.s32.totalorder %s23, 1
      %p139 = por %p137, %p138
      %p140 = scmp.ne.s32.totalorder %s132, %s135
      %p141 = scmp.eq.s32.totalorder %s23, 0
      %p142 = por %p140, %p141
      %p143 = scmp.ne.s32.totalorder %s132, %s135
      %p144 = scmp.eq.s32.totalorder %s28, 1
      %p145 = por %p143, %p144
      %p146 = scmp.ne.s32.totalorder %s135, %s136
      %p147 = scmp.eq.s32.totalorder %s28, 0
      %p148 = por %p146, %p147
      %p149 = scmp.ne.s32.totalorder %s135, %s136
      %p150 = scmp.eq.s32.totalorder %s29, 1
      %p151 = por %p149, %p150
      %p153 = scmp.ne.s32.totalorder %s136, %s152
      %p154 = scmp.eq.s32.totalorder %s29, 0
      %p155 = por %p153, %p154
      %s157 = sadd.s32 %s156, 1
      %p160 = scmp.eq.s32.totalorder %s23, 1
      %p161 = scmp.ne.s32.totalorder %s156, %s158
      %p162 = scmp.eq.s32.totalorder %s23, 0
      %p163 = por %p161, %p162
      %p164 = scmp.ne.s32.totalorder %s156, %s158
      %p165 = scmp.eq.s32.totalorder %s28, 1
      %p166 = por %p164, %p165
      %p167 = scmp.ne.s32.totalorder %s158, %s159
      %p168 = scmp.eq.s32.totalorder %s28, 0
      %p169 = por %p167, %p168
      %p170 = scmp.ne.s32.totalorder %s158, %s159
      %p171 = scmp.eq.s32.totalorder %s29, 1
      %p172 = por %p170, %p171
      %p174 = scmp.ne.s32.totalorder %s159, %s173
      %p175 = scmp.eq.s32.totalorder %s29, 0
      %p176 = por %p174, %p175
      %s177 = ssub.s32 %s23, %s30
      %p178 = scmp.eq.s32.totalorder %s177, 0
      %s180 = sadd.s32 %s179, 1
      %s181 = scalar_select %p178, %s179, %s180
      %p184 = pneg %p178
      %p185 = scmp.eq.s32.totalorder %s23, 1
      %p186 = por %p184, %p185
      %p187 = scmp.ne.s32.totalorder %s179, %s182
      %p188 = scmp.eq.s32.totalorder %s23, 0
      %p189 = por %p187, %p188
      %p190 = scmp.ne.s32.totalorder %s179, %s182
      %p191 = scmp.eq.s32.totalorder %s28, 1
      %p192 = por %p190, %p191
      %p193 = scmp.ne.s32.totalorder %s182, %s183
      %p194 = scmp.eq.s32.totalorder %s28, 0
      %p195 = por %p193, %p194
      %p196 = scmp.ne.s32.totalorder %s182, %s183
      %p197 = scmp.eq.s32.totalorder %s29, 1
      %p198 = por %p196, %p197
      %p200 = scmp.ne.s32.totalorder %s183, %s199
      %p201 = scmp.eq.s32.totalorder %s29, 0
      %p202 = por %p200, %p201
      %p203 = scmp.le.s32.totalorder 1, %s23
      %p204 = scmp.lt.s32.totalorder %s23, 3
      %p205 = pnand %p203, %p204
      %p206 = pneg %p205
      // Predicated region
      $region9: #{tpu_custom_call.1} parent=5 // pred_check
        _
      $region10: #{tpu_custom_call.1} parent=5 // pred_check_branch
        %208 = sbr.rel (%p205) target = $region12
      $region11: #{tpu_custom_call.1} parent=5 // pred_region
        %s209 = ssub.s32 %s23, 1
        // Predicated region
        $region13: #{tpu_custom_call.1} parent=11 // pred_check
          %p210 = pneg %p44
        $region14: #{tpu_custom_call.1} parent=11 // pred_check_branch
          %212 = sbr.rel (%p210) target = $region16
        $region15: #{tpu_custom_call.1} parent=11 // pred_region
          _
        $region16: #{tpu_custom_call.1} parent=11 // pred_fallthru
          _
      $region12: #{tpu_custom_call.1} parent=5 // pred_fallthru
        _
      %p213 = scmp.lt.s32.totalorder %s23, 2
      // Predicated region
      $region17: #{tpu_custom_call.1} parent=5 // pred_check
        %p214 = pneg %p213
      $region18: #{tpu_custom_call.1} parent=5 // pred_check_branch
        %216 = sbr.rel (%p214) target = $region20
      $region19: #{tpu_custom_call.1} parent=5 // pred_region
        // Predicated region
        $region21: #{tpu_custom_call.1} parent=19 // pred_check
          %p217 = pneg %p64
        $region22: #{tpu_custom_call.1} parent=19 // pred_check_branch
          %219 = sbr.rel (%p217) target = $region24
        $region23: #{tpu_custom_call.1} parent=19 // pred_region
          %s220 = sand.u32 %s54, 1
          %s221 = scalar_lea.sflag [#allocation3], %s220
          %s222 = sand.u32 %s54, 1
          %s223 = smul.addr %s222, 192
          %s224 = scalar_lea.vmem [#allocation2], %s223
          %s226 = ssub.s32 3072, 3072
          %227 = vsyncadd %s221, %s226
          %s228 = smul.addr %s23, 24
          %s229 = smul.addr %s228, 128
          %s230 = scalar_lea.hbm %s1, %s229
          %s231 = sshll.u32 %s224, 4
          %s232 = int_to_ptr.vmem [resolvable:$true] %s231
          %237 = dma.hbm_to_vmem [thread:$0]  %s230, 3072, %s232, %s221, 384, 384, 24
        $region24: #{tpu_custom_call.1} parent=19 // pred_fallthru
          _
        // Predicated region
        $region25: #{tpu_custom_call.1} parent=19 // pred_check
          %p238 = pneg %p90
        $region26: #{tpu_custom_call.1} parent=19 // pred_check_branch
          %240 = sbr.rel (%p238) target = $region28
        $region27: #{tpu_custom_call.1} parent=19 // pred_region
          %p241 = scmp.lt.s32.totalorder %s23, 1
          %s242 = scalar_select %p241, %s23, 1
          %s243 = smul.addr %s242, 8
          %s244 = scalar_lea.vmem %s2, %s243
        $region28: #{tpu_custom_call.1} parent=19 // pred_fallthru
          _
        // Predicated region
        $region29: #{tpu_custom_call.1} parent=19 // pred_check
          %p245 = pneg %p116
        $region30: #{tpu_custom_call.1} parent=19 // pred_check_branch
          %247 = sbr.rel (%p245) target = $region32
        $region31: #{tpu_custom_call.1} parent=19 // pred_region
          %s248 = sand.u32 %s106, 1
          %s249 = scalar_lea.sflag [#allocation6], %s248
          %s250 = sand.u32 %s106, 1
          %s251 = smul.addr %s250, 384
          %s252 = scalar_lea.vmem [#allocation5], %s251
          %s254 = ssub.s32 6144, 6144
          %255 = vsyncadd %s249, %s254
          %s256 = smul.addr %s23, 48
          %s257 = smul.addr %s256, 128
          %s258 = scalar_lea.hbm %s3, %s257
          %s259 = sshll.u32 %s252, 4
          %s260 = int_to_ptr.vmem [resolvable:$true] %s259
          %265 = dma.hbm_to_vmem [thread:$0]  %s258, 6144, %s260, %s249, 384, 384, 24
        $region32: #{tpu_custom_call.1} parent=19 // pred_fallthru
          _
        // Predicated region
        $region33: #{tpu_custom_call.1} parent=19 // pred_check
          %p266 = pneg %p142
        $region34: #{tpu_custom_call.1} parent=19 // pred_check_branch
          %268 = sbr.rel (%p266) target = $region36
        $region35: #{tpu_custom_call.1} parent=19 // pred_region
          %p269 = scmp.lt.s32.totalorder %s23, 1
          %s270 = scalar_select %p269, %s23, 1
          %s271 = scalar_lea.vmem %s4, %s270
        $region36: #{tpu_custom_call.1} parent=19 // pred_fallthru
          _
      $region20: #{tpu_custom_call.1} parent=5 // pred_fallthru
        _
      %p272 = scmp.le.s32.totalorder 1, %s23
      %p273 = scmp.lt.s32.totalorder %s23, 3
      %p274 = pnand %p272, %p273
      %p275 = pneg %p274
      // Predicated region
      $region37: #{tpu_custom_call.1} parent=5 // pred_check
        _
      $region38: #{tpu_custom_call.1} parent=5 // pred_check_branch
        %277 = sbr.rel (%p274) target = $region40
      $region39: #{tpu_custom_call.1} parent=5 // pred_region
        %s278 = ssub.s32 %s23, 1
        %s279 = sand.u32 %s57, 1
        %s280 = scalar_lea.sflag [#allocation3], %s279
        %s281 = sand.u32 %s57, 1
        %s282 = smul.addr %s281, 192
        %s283 = scalar_lea.vmem [#allocation2], %s282
        // Predicated region
        $region41: #{tpu_custom_call.1} parent=39 // pred_check
          %p284 = pneg %p70
        $region42: #{tpu_custom_call.1} parent=39 // pred_check_branch
          %286 = sbr.rel (%p284) target = $region44
        $region43: #{tpu_custom_call.1} parent=39 // pred_region
          %287 = dma.done %s280, 3072
        $region44: #{tpu_custom_call.1} parent=39 // pred_fallthru
          _
        %s288 = sand.u32 %s109, 1
        %s289 = scalar_lea.sflag [#allocation6], %s288
        %s290 = sand.u32 %s109, 1
        %s291 = smul.addr %s290, 384
        %s292 = scalar_lea.vmem [#allocation5], %s291
        // Predicated region
        $region45: #{tpu_custom_call.1} parent=39 // pred_check
          %p293 = pneg %p122
        $region46: #{tpu_custom_call.1} parent=39 // pred_check_branch
          %295 = sbr.rel (%p293) target = $region48
        $region47: #{tpu_custom_call.1} parent=39 // pred_region
          %296 = dma.done %s289, 6144
        $region48: #{tpu_custom_call.1} parent=39 // pred_fallthru
          _
        %p297 = pneg %p44
        %p298 = pneg %p41
        %s299 = sand.u32 %s57, 1
        %s300 = scalar_lea.sflag [#allocation3], %s299
        %s301 = sand.u32 %s57, 1
        %s302 = smul.addr %s301, 192
        %s303 = scalar_lea.vmem [#allocation2], %s302
        %p304 = pneg %p70
        %p305 = pneg %p67
        %p306 = scmp.lt.s32.totalorder %s28, 1
        %s307 = scalar_select %p306, %s28, 1
        %s308 = smul.addr %s307, 8
        %s309 = scalar_lea.vmem %s2, %s308
        %p310 = pneg %p96
        %p311 = pneg %p93
        %s312 = sand.u32 %s109, 1
        %s313 = scalar_lea.sflag [#allocation6], %s312
        %s314 = sand.u32 %s109, 1
        %s315 = smul.addr %s314, 384
        %s316 = scalar_lea.vmem [#allocation5], %s315
        %p317 = pneg %p122
        %p318 = pneg %p119
        %p319 = scmp.lt.s32.totalorder %s28, 1
        %s320 = scalar_select %p319, %s28, 1
        %s321 = scalar_lea.vmem %s4, %s320
        %p322 = pneg %p148
        %p323 = pneg %p145
        %p324 = pneg %p169
        %p325 = pneg %p166
        %p326 = pneg %p195
        %p327 = pneg %p192
        %s328 = sand.u32 %s182, 1
        %s329 = scalar_lea.sflag [#allocation9], %s328
        %s330 = sand.u32 %s182, 1
        %s331 = smul.addr %s330, 8
        %s332 = scalar_lea.vmem [#allocation8], %s331
        %p333 = scmp.lt.s32.totalorder %s28, 1
        %s334 = scalar_select %p333, %s28, 1
        %s335 = smul.addr %s334, 8
        %s336 = scalar_lea.vmem %s2, %s335
        %p337 = scmp.lt.s32.totalorder %s28, 1
        %s338 = scalar_select %p337, %s28, 1
        %s339 = scalar_lea.vmem %s4, %s338
        %p340 = scmp.eq.s32.totalorder %s28, 0
        // Predicated region
        $region49: #{tpu_custom_call.1} parent=39 // pred_check
          %p341 = pneg %p340
        $region50: #{tpu_custom_call.1} parent=39 // pred_check_branch
          %343 = sbr.rel (%p341) target = $region52
        $region51: #{tpu_custom_call.1} parent=39 // pred_region
          %v344 = vld [vmem:[%s0] sm:$0xff]
          %v345 = vld [vmem:[%s336] sm:$0xff]
          %v346 = vld [vmem:[%s283] sm:$0xff]
          %v347 = vld [vmem:[%s283 + $0x8] sm:$0xff]
          %v348 = vld [vmem:[%s283 + $0x10] sm:$0xff]
          %v349 = vld [vmem:[%s292] sm:$0xff]
          %v350 = vld [vmem:[%s292 + $0x8] sm:$0xff]
          %v351 = vld [vmem:[%s292 + $0x10] sm:$0xff]
          %v352 = vld [vmem:[%s292 + $0x18] sm:$0xff]
          %v353 = vld [vmem:[%s292 + $0x20] sm:$0xff]
          %v354 = vld [vmem:[%s292 + $0x28] sm:$0xff]
          %v355 = vld [vmem:[%s292 + $0x30] sm:$0xff]
          %v356 = vld [vmem:[%s292 + $0x38] sm:$0xff]
          %v357 = vld [vmem:[%s292 + $0x40] sm:$0xff]
          %v358 = vld [vmem:[%s292 + $0x48] sm:$0xff]
          %v359 = vld [vmem:[%s292 + $0x50] sm:$0xff]
          %v360 = vld [vmem:[%s292 + $0x58] sm:$0xff]
          %v361 = vld [vmem:[%s292 + $0x60] sm:$0xff]
          %v362 = vld [vmem:[%s292 + $0x68] sm:$0xff]
          %v363 = vld [vmem:[%s292 + $0x70] sm:$0xff]
          %v364 = vld [vmem:[%s292 + $0x78] sm:$0xff]
          %v365 = vld [vmem:[%s292 + $0x80] sm:$0xff]
          %v366 = vld [vmem:[%s292 + $0x88] sm:$0xff]
          %v367 = vld [vmem:[%s292 + $0x90] sm:$0xff]
          %v368 = vld [vmem:[%s292 + $0x98] sm:$0xff]
          %v369 = vld [vmem:[%s292 + $0xa0] sm:$0xff]
          %v370 = vld [vmem:[%s292 + $0xa8] sm:$0xff]
          %v371 = vld [vmem:[%s292 + $0xb0] sm:$0xff]
          %v372 = vld [vmem:[%s292 + $0xb8] sm:$0xff]
          %v373 = vld [vmem:[%s292 + $0xc0] sm:$0xff]
          %v374 = vld [vmem:[%s292 + $0xc8] sm:$0xff]
          %v375 = vld [vmem:[%s292 + $0xd0] sm:$0xff]
          %v376 = vld [vmem:[%s292 + $0xd8] sm:$0xff]
          %v377 = vld [vmem:[%s292 + $0xe0] sm:$0xff]
          %v378 = vld [vmem:[%s292 + $0xe8] sm:$0xff]
          %v379 = vld [vmem:[%s292 + $0xf0] sm:$0xff]
          %v380 = vld [vmem:[%s292 + $0xf8] sm:$0xff]
          %v381 = vld [vmem:[%s292 + $0x100] sm:$0xff]
          %v382 = vld [vmem:[%s292 + $0x108] sm:$0xff]
          %v383 = vld [vmem:[%s292 + $0x110] sm:$0xff]
          %v384 = vld [vmem:[%s292 + $0x118] sm:$0xff]
          %v385 = vld [vmem:[%s292 + $0x120] sm:$0xff]
          %v386 = vld [vmem:[%s292 + $0x128] sm:$0xff]
          %v387 = vld [vmem:[%s292 + $0x130] sm:$0xff]
          %v388 = vld [vmem:[%s292 + $0x138] sm:$0xff]
          %v389 = vld [vmem:[%s292 + $0x140] sm:$0xff]
          %v390 = vld [vmem:[%s292 + $0x148] sm:$0xff]
          %v391 = vld [vmem:[%s292 + $0x150] sm:$0xff]
          %v392 = vld [vmem:[%s292 + $0x158] sm:$0xff]
          %v393 = vld [vmem:[%s292 + $0x160] sm:$0xff]
          %v394 = vld [vmem:[%s292 + $0x168] sm:$0xff]
          %v395 = vld [vmem:[%s292 + $0x170] sm:$0xff]
          %v396 = vld [vmem:[%s292 + $0x178] sm:$0xff]
          %397 = vmatprep.subr.mxu0 %v350
          %398 = vmatpush1.msra.mxu0 %v349
          %399 = vmatprep.subr.mxu0 %v353
          %400 = vmatpush1.msra.mxu0 %v352
          %401 = vmatprep.subr.mxu0 %v356
          %402 = vmatpush1.msra.mxu0 %v355
          %403 = vmatprep.subr.mxu0 %v359
          %404 = vmatpush1.msra.mxu0 %v358
          %405 = vmatprep.subr.mxu0 %v362
          %406 = vmatpush1.msra.mxu0 %v361
          %407 = vmatprep.subr.mxu0 %v365
          %408 = vmatpush1.msra.mxu0 %v364
          %409 = vmatprep.subr.mxu0 %v368
          %410 = vmatpush1.msra.mxu0 %v367
          %411 = vmatprep.subr.mxu0 %v371
          %412 = vmatpush1.msra.mxu0 %v370
          %413 = vmatprep.subr.mxu0 %v374
          %414 = vmatpush1.msra.mxu0 %v373
          %415 = vmatprep.subr.mxu0 %v377
          %416 = vmatpush1.msra.mxu0 %v376
          %417 = vmatprep.subr.mxu0 %v380
          %418 = vmatpush1.msra.mxu0 %v379
          %419 = vmatprep.subr.mxu0 %v383
          %420 = vmatpush1.msra.mxu0 %v382
          %421 = vmatprep.subr.mxu0 %v386
          %422 = vmatpush1.msra.mxu0 %v385
          %423 = vmatprep.subr.mxu0 %v389
          %424 = vmatpush1.msra.mxu0 %v388
          %425 = vmatprep.subr.mxu0 %v392
          %426 = vmatpush1.msra.mxu0 %v391
          %427 = vmatprep.subr.mxu0 %v395
          %428 = vmatpush1.msra.mxu0 %v394
          %429 = vmatprep.subr.mxu0 0.0
          %430 = vmatpush1.msra.mxu0 0.0
          %431 = vmatprep.subr.mxu0 0.0
          %432 = vmatpush1.msra.mxu0 0.0
          %433 = vmatprep.subr.mxu0 0.0
          %434 = vmatpush1.msra.mxu0 0.0
          %435 = vmatprep.subr.mxu0 0.0
          %436 = vmatpush1.msra.mxu0 0.0
          %437 = vmatprep.subr.mxu0 0.0
          %438 = vmatpush1.msra.mxu0 0.0
          %439 = vmatprep.subr.mxu0 0.0
          %440 = vmatpush1.msra.mxu0 0.0
          %441 = vmatprep.subr.mxu0 0.0
          %442 = vmatpush1.msra.mxu0 0.0
          %443 = vmatprep.subr.mxu0 0.0
          %444 = vmatpush1.msra.mxu0 0.0
          %445 = vmatprep.subr.mxu0 0.0
          %446 = vmatpush1.msra.mxu0 0.0
          %447 = vmatprep.subr.mxu0 0.0
          %448 = vmatpush1.msra.mxu0 0.0
          %449 = vmatprep.subr.mxu0 0.0
          %450 = vmatpush1.msra.mxu0 0.0
          %451 = vmatprep.subr.mxu0 0.0
          %452 = vmatpush1.msra.mxu0 0.0
          %453 = vmatprep.subr.mxu0 0.0
          %454 = vmatpush1.msra.mxu0 0.0
          %455 = vmatprep.subr.mxu0 0.0
          %456 = vmatpush1.msra.mxu0 0.0
          %457 = vmatprep.subr.mxu0 0.0
          %458 = vmatpush1.msra.mxu0 0.0
          %459 = vmatprep.subr.mxu0 0.0
          %460 = vmatpush1.msra.mxu0 0.0
          %461 = vmatprep.mubr.f32.mxu0 0.0
          %462 = vmatmul.mubr.f32.gmra.mrb[0].mxu0 %v345
          %v463 = vpop.f32.mrb[0].mxu0
          %v464 = vadd.f32 0.0, %v463
          %v465 = vpop.f32.mrb[0].mxu0
          %v466 = vadd.f32 0.0, %v465
          %467 = vdwg.mxu0
          %468 = vmatprep.subr.mxu0 0.0
          %469 = vmatpush1.msra.mxu0 %v351
          %470 = vmatprep.subr.mxu0 0.0
          %471 = vmatpush1.msra.mxu0 %v354
          %472 = vmatprep.subr.mxu0 0.0
          %473 = vmatpush1.msra.mxu0 %v357
          %474 = vmatprep.subr.mxu0 0.0
          %475 = vmatpush1.msra.mxu0 %v360
          %476 = vmatprep.subr.mxu0 0.0
          %477 = vmatpush1.msra.mxu0 %v363
          %478 = vmatprep.subr.mxu0 0.0
          %479 = vmatpush1.msra.mxu0 %v366
          %480 = vmatprep.subr.mxu0 0.0
          %481 = vmatpush1.msra.mxu0 %v369
          %482 = vmatprep.subr.mxu0 0.0
          %483 = vmatpush1.msra.mxu0 %v372
          %484 = vmatprep.subr.mxu0 0.0
          %485 = vmatpush1.msra.mxu0 %v375
          %486 = vmatprep.subr.mxu0 0.0
          %487 = vmatpush1.msra.mxu0 %v378
          %488 = vmatprep.subr.mxu0 0.0
          %489 = vmatpush1.msra.mxu0 %v381
          %490 = vmatprep.subr.mxu0 0.0
          %491 = vmatpush1.msra.mxu0 %v384
          %492 = vmatprep.subr.mxu0 0.0
          %493 = vmatpush1.msra.mxu0 %v387
          %494 = vmatprep.subr.mxu0 0.0
          %495 = vmatpush1.msra.mxu0 %v390
          %496 = vmatprep.subr.mxu0 0.0
          %497 = vmatpush1.msra.mxu0 %v393
          %498 = vmatprep.subr.mxu0 0.0
          %499 = vmatpush1.msra.mxu0 %v396
          %500 = vmatprep.subr.mxu0 0.0
          %501 = vmatpush1.msra.mxu0 0.0
          %502 = vmatprep.subr.mxu0 0.0
          %503 = vmatpush1.msra.mxu0 0.0
          %504 = vmatprep.subr.mxu0 0.0
          %505 = vmatpush1.msra.mxu0 0.0
          %506 = vmatprep.subr.mxu0 0.0
          %507 = vmatpush1.msra.mxu0 0.0
          %508 = vmatprep.subr.mxu0 0.0
          %509 = vmatpush1.msra.mxu0 0.0
          %510 = vmatprep.subr.mxu0 0.0
          %511 = vmatpush1.msra.mxu0 0.0
          %512 = vmatprep.subr.mxu0 0.0
          %513 = vmatpush1.msra.mxu0 0.0
          %514 = vmatprep.subr.mxu0 0.0
          %515 = vmatpush1.msra.mxu0 0.0
          %516 = vmatprep.subr.mxu0 0.0
          %517 = vmatpush1.msra.mxu0 0.0
          %518 = vmatprep.subr.mxu0 0.0
          %519 = vmatpush1.msra.mxu0 0.0
          %520 = vmatprep.subr.mxu0 0.0
          %521 = vmatpush1.msra.mxu0 0.0
          %522 = vmatprep.subr.mxu0 0.0
          %523 = vmatpush1.msra.mxu0 0.0
          %524 = vmatprep.subr.mxu0 0.0
          %525 = vmatpush1.msra.mxu0 0.0
          %526 = vmatprep.subr.mxu0 0.0
          %527 = vmatpush1.msra.mxu0 0.0
          %528 = vmatprep.subr.mxu0 0.0
          %529 = vmatpush1.msra.mxu0 0.0
          %530 = vmatprep.subr.mxu0 0.0
          %531 = vmatpush1.msra.mxu0 0.0
          %532 = vmatprep.mubr.f32.mxu0 0.0
          %533 = vmatmul.mubr.f32.gmra.mrb[0].mxu0 %v345
          %v534 = vpop.f32.mrb[0].mxu0
          %v535 = vadd.f32 0.0, %v534
          %v536 = vpop.f32.mrb[0].mxu0
          %537 = vdwg.mxu0
          %v538 = vadd.f32 %v346, %v464
          %v539 = vxor.u32 %v538, 2147483648
          %v540 = vmul.f32 %v539, 1.442695
          %v541 = vpow.pop %v540
          %v542 = vadd.f32 %v541, 1.0
          %v543 = vrcp.pop %v542
          %v544 = vmul.f32 1.0, %v543
          %v545 = vadd.f32 %v347, %v466
          %v546 = vxor.u32 %v545, 2147483648
          %v547 = vmul.f32 %v546, 1.442695
          %v548 = vpow.pop %v547
          %v549 = vadd.f32 %v548, 1.0
          %v550 = vrcp.pop %v549
          %v551 = vmul.f32 1.0, %v550
          %v552 = vld [vmem:[%s339] sm:$0x1]
          %v554 = vlaneseq
          %v555 = vshrl.u32 %v554, 7
          %v556 = vsub.s32 0, %v555
          %v557 = vrot.slane %v552, %v556
          %v559 = vadd.f32 %v535, %v557
          %v560 = vmul.f32 %v544, %v559
          %v561 = vadd.f32 %v348, %v560
          %v562 = vtanh.pop %v561
          %v563 = vsub.f32 1.0, %v551
          %v564 = vmul.f32 %v563, %v562
          %v565 = vmul.f32 %v551, %v345
          %v566 = vadd.f32 %v564, %v565
          %vm567 = vcmp.gt.s32.totalorder %v344, 0
          %v568 = vsel %vm567, 1, 0
          %569 = vset.pattern.permute.xlu0 0
          %570 = vperm.xlu0 %569, %v568
          %v571 = vpop.permute.xlu0 %570
          %vm572 = vcmp.eq.s32.totalorder %v571, 1
          %v573 = vsel %vm572, %v566, %v345
          %v574 = vsel %vm572, %v566, 0.0
          %575 = vst [vmem:[#allocation7] sm:$0xff] %v574
          %s576 = scalar_lea.vmem %s283, 24 [#allocation2]
          %v577 = vld [vmem:[%s576] sm:$0xff]
          %v578 = vld [vmem:[%s576 + $0x8] sm:$0xff]
          %v579 = vld [vmem:[%s576 + $0x10] sm:$0xff]
          %v580 = vld [vmem:[%s292] sm:$0xff]
          %v581 = vld [vmem:[%s292 + $0x8] sm:$0xff]
          %v582 = vld [vmem:[%s292 + $0x10] sm:$0xff]
          %v583 = vld [vmem:[%s292 + $0x18] sm:$0xff]
          %v584 = vld [vmem:[%s292 + $0x20] sm:$0xff]
          %v585 = vld [vmem:[%s292 + $0x28] sm:$0xff]
          %v586 = vld [vmem:[%s292 + $0x30] sm:$0xff]
          %v587 = vld [vmem:[%s292 + $0x38] sm:$0xff]
          %v588 = vld [vmem:[%s292 + $0x40] sm:$0xff]
          %v589 = vld [vmem:[%s292 + $0x48] sm:$0xff]
          %v590 = vld [vmem:[%s292 + $0x50] sm:$0xff]
          %v591 = vld [vmem:[%s292 + $0x58] sm:$0xff]
          %v592 = vld [vmem:[%s292 + $0x60] sm:$0xff]
          %v593 = vld [vmem:[%s292 + $0x68] sm:$0xff]
          %v594 = vld [vmem:[%s292 + $0x70] sm:$0xff]
          %v595 = vld [vmem:[%s292 + $0x78] sm:$0xff]
          %v596 = vld [vmem:[%s292 + $0x80] sm:$0xff]
          %v597 = vld [vmem:[%s292 + $0x88] sm:$0xff]
          %v598 = vld [vmem:[%s292 + $0x90] sm:$0xff]
          %v599 = vld [vmem:[%s292 + $0x98] sm:$0xff]
          %v600 = vld [vmem:[%s292 + $0xa0] sm:$0xff]
          %v601 = vld [vmem:[%s292 + $0xa8] sm:$0xff]
          %v602 = vld [vmem:[%s292 + $0xb0] sm:$0xff]
          %v603 = vld [vmem:[%s292 + $0xb8] sm:$0xff]
          %v604 = vld [vmem:[%s292 + $0xc0] sm:$0xff]
          %v605 = vld [vmem:[%s292 + $0xc8] sm:$0xff]
          %v606 = vld [vmem:[%s292 + $0xd0] sm:$0xff]
          %v607 = vld [vmem:[%s292 + $0xd8] sm:$0xff]
          %v608 = vld [vmem:[%s292 + $0xe0] sm:$0xff]
          %v609 = vld [vmem:[%s292 + $0xe8] sm:$0xff]
          %v610 = vld [vmem:[%s292 + $0xf0] sm:$0xff]
          %v611 = vld [vmem:[%s292 + $0xf8] sm:$0xff]
          %v612 = vld [vmem:[%s292 + $0x100] sm:$0xff]
          %v613 = vld [vmem:[%s292 + $0x108] sm:$0xff]
          %v614 = vld [vmem:[%s292 + $0x110] sm:$0xff]
          %v615 = vld [vmem:[%s292 + $0x118] sm:$0xff]
          %v616 = vld [vmem:[%s292 + $0x120] sm:$0xff]
          %v617 = vld [vmem:[%s292 + $0x128] sm:$0xff]
          %v618 = vld [vmem:[%s292 + $0x130] sm:$0xff]
          %v619 = vld [vmem:[%s292 + $0x138] sm:$0xff]
          %v620 = vld [vmem:[%s292 + $0x140] sm:$0xff]
          %v621 = vld [vmem:[%s292 + $0x148] sm:$0xff]
          %v622 = vld [vmem:[%s292 + $0x150] sm:$0xff]
          %v623 = vld [vmem:[%s292 + $0x158] sm:$0xff]
          %v624 = vld [vmem:[%s292 + $0x160] sm:$0xff]
          %v625 = vld [vmem:[%s292 + $0x168] sm:$0xff]
          %v626 = vld [vmem:[%s292 + $0x170] sm:$0xff]
          %v627 = vld [vmem:[%s292 + $0x178] sm:$0xff]
          %628 = vmatprep.subr.mxu0 %v581
          %629 = vmatpush1.msra.mxu0 %v580
          %630 = vmatprep.subr.mxu0 %v584
          %631 = vmatpush1.msra.mxu0 %v583
          %632 = vmatprep.subr.mxu0 %v587
          %633 = vmatpush1.msra.mxu0 %v586
          %634 = vmatprep.subr.mxu0 %v590
          %635 = vmatpush1.msra.mxu0 %v589
          %636 = vmatprep.subr.mxu0 %v593
          %637 = vmatpush1.msra.mxu0 %v592
          %638 = vmatprep.subr.mxu0 %v596
          %639 = vmatpush1.msra.mxu0 %v595
          %640 = vmatprep.subr.mxu0 %v599
          %641 = vmatpush1.msra.mxu0 %v598
          %642 = vmatprep.subr.mxu0 %v602
          %643 = vmatpush1.msra.mxu0 %v601
          %644 = vmatprep.subr.mxu0 %v605
          %645 = vmatpush1.msra.mxu0 %v604
          %646 = vmatprep.subr.mxu0 %v608
          %647 = vmatpush1.msra.mxu0 %v607
          %648 = vmatprep.subr.mxu0 %v611
          %649 = vmatpush1.msra.mxu0 %v610
          %650 = vmatprep.subr.mxu0 %v614
          %651 = vmatpush1.msra.mxu0 %v613
          %652 = vmatprep.subr.mxu0 %v617
          %653 = vmatpush1.msra.mxu0 %v616
          %654 = vmatprep.subr.mxu0 %v620
          %655 = vmatpush1.msra.mxu0 %v619
          %656 = vmatprep.subr.mxu0 %v623
          %657 = vmatpush1.msra.mxu0 %v622
          %658 = vmatprep.subr.mxu0 %v626
          %659 = vmatpush1.msra.mxu0 %v625
          %660 = vmatprep.subr.mxu0 0.0
          %661 = vmatpush1.msra.mxu0 0.0
          %662 = vmatprep.subr.mxu0 0.0
          %663 = vmatpush1.msra.mxu0 0.0
          %664 = vmatprep.subr.mxu0 0.0
          %665 = vmatpush1.msra.mxu0 0.0
          %666 = vmatprep.subr.mxu0 0.0
          %667 = vmatpush1.msra.mxu0 0.0
          %668 = vmatprep.subr.mxu0 0.0
          %669 = vmatpush1.msra.mxu0 0.0
          %670 = vmatprep.subr.mxu0 0.0
          %671 = vmatpush1.msra.mxu0 0.0
          %672 = vmatprep.subr.mxu0 0.0
          %673 = vmatpush1.msra.mxu0 0.0
          %674 = vmatprep.subr.mxu0 0.0
          %675 = vmatpush1.msra.mxu0 0.0
          %676 = vmatprep.subr.mxu0 0.0
          %677 = vmatpush1.msra.mxu0 0.0
          %678 = vmatprep.subr.mxu0 0.0
          %679 = vmatpush1.msra.mxu0 0.0
          %680 = vmatprep.subr.mxu0 0.0
          %681 = vmatpush1.msra.mxu0 0.0
          %682 = vmatprep.subr.mxu0 0.0
          %683 = vmatpush1.msra.mxu0 0.0
          %684 = vmatprep.subr.mxu0 0.0
          %685 = vmatpush1.msra.mxu0 0.0
          %686 = vmatprep.subr.mxu0 0.0
          %687 = vmatpush1.msra.mxu0 0.0
          %688 = vmatprep.subr.mxu0 0.0
          %689 = vmatpush1.msra.mxu0 0.0
          %690 = vmatprep.subr.mxu0 0.0
          %691 = vmatpush1.msra.mxu0 0.0
          %692 = vmatprep.mubr.f32.mxu0 0.0
          %693 = vmatmul.mubr.f32.gmra.mrb[0].mxu0 %v573
          %v694 = vpop.f32.mrb[0].mxu0
          %v695 = vadd.f32 0.0, %v694
          %v696 = vpop.f32.mrb[0].mxu0
          %v697 = vadd.f32 0.0, %v696
          %698 = vdwg.mxu0
          %699 = vmatprep.subr.mxu0 0.0
          %700 = vmatpush1.msra.mxu0 %v582
          %701 = vmatprep.subr.mxu0 0.0
          %702 = vmatpush1.msra.mxu0 %v585
          %703 = vmatprep.subr.mxu0 0.0
          %704 = vmatpush1.msra.mxu0 %v588
          %705 = vmatprep.subr.mxu0 0.0
          %706 = vmatpush1.msra.mxu0 %v591
          %707 = vmatprep.subr.mxu0 0.0
          %708 = vmatpush1.msra.mxu0 %v594
          %709 = vmatprep.subr.mxu0 0.0
          %710 = vmatpush1.msra.mxu0 %v597
          %711 = vmatprep.subr.mxu0 0.0
          %712 = vmatpush1.msra.mxu0 %v600
          %713 = vmatprep.subr.mxu0 0.0
          %714 = vmatpush1.msra.mxu0 %v603
          %715 = vmatprep.subr.mxu0 0.0
          %716 = vmatpush1.msra.mxu0 %v606
          %717 = vmatprep.subr.mxu0 0.0
          %718 = vmatpush1.msra.mxu0 %v609
          %719 = vmatprep.subr.mxu0 0.0
          %720 = vmatpush1.msra.mxu0 %v612
          %721 = vmatprep.subr.mxu0 0.0
          %722 = vmatpush1.msra.mxu0 %v615
          %723 = vmatprep.subr.mxu0 0.0
          %724 = vmatpush1.msra.mxu0 %v618
          %725 = vmatprep.subr.mxu0 0.0
          %726 = vmatpush1.msra.mxu0 %v621
          %727 = vmatprep.subr.mxu0 0.0
          %728 = vmatpush1.msra.mxu0 %v624
          %729 = vmatprep.subr.mxu0 0.0
          %730 = vmatpush1.msra.mxu0 %v627
          %731 = vmatprep.subr.mxu0 0.0
          %732 = vmatpush1.msra.mxu0 0.0
          %733 = vmatprep.subr.mxu0 0.0
          %734 = vmatpush1.msra.mxu0 0.0
          %735 = vmatprep.subr.mxu0 0.0
          %736 = vmatpush1.msra.mxu0 0.0
          %737 = vmatprep.subr.mxu0 0.0
          %738 = vmatpush1.msra.mxu0 0.0
          %739 = vmatprep.subr.mxu0 0.0
          %740 = vmatpush1.msra.mxu0 0.0
          %741 = vmatprep.subr.mxu0 0.0
          %742 = vmatpush1.msra.mxu0 0.0
          %743 = vmatprep.subr.mxu0 0.0
          %744 = vmatpush1.msra.mxu0 0.0
          %745 = vmatprep.subr.mxu0 0.0
          %746 = vmatpush1.msra.mxu0 0.0
          %747 = vmatprep.subr.mxu0 0.0
          %748 = vmatpush1.msra.mxu0 0.0
          %749 = vmatprep.subr.mxu0 0.0
          %750 = vmatpush1.msra.mxu0 0.0
          %751 = vmatprep.subr.mxu0 0.0
          %752 = vmatpush1.msra.mxu0 0.0
          %753 = vmatprep.subr.mxu0 0.0
          %754 = vmatpush1.msra.mxu0 0.0
          %755 = vmatprep.subr.mxu0 0.0
          %756 = vmatpush1.msra.mxu0 0.0
          %757 = vmatprep.subr.mxu0 0.0
          %758 = vmatpush1.msra.mxu0 0.0
          %759 = vmatprep.subr.mxu0 0.0
          %760 = vmatpush1.msra.mxu0 0.0
          %761 = vmatprep.subr.mxu0 0.0
          %762 = vmatpush1.msra.mxu0 0.0
          %763 = vmatprep.mubr.f32.mxu0 0.0
          %764 = vmatmul.mubr.f32.gmra.mrb[0].mxu0 %v573
          %v765 = vpop.f32.mrb[0].mxu0
          %v766 = vadd.f32 0.0, %v765
          %v767 = vpop.f32.mrb[0].mxu0
          %768 = vdwg.mxu0
          %v769 = vadd.f32 %v577, %v695
          %v770 = vxor.u32 %v769, 2147483648
          %v771 = vmul.f32 %v770, 1.442695
          %v772 = vpow.pop %v771
          %v773 = vadd.f32 %v772, 1.0
          %v774 = vrcp.pop %v773
          %v775 = vmul.f32 1.0, %v774
          %v776 = vadd.f32 %v578, %v697
          %v777 = vxor.u32 %v776, 2147483648
          %v778 = vmul.f32 %v777, 1.442695
          %v779 = vpow.pop %v778
          %v780 = vadd.f32 %v779, 1.0
          %v781 = vrcp.pop %v780
          %v782 = vmul.f32 1.0, %v781
          %v783 = vld [vmem:[%s339] sm:$0x1]
          %v785 = vlaneseq
          %v786 = vshrl.u32 %v785, 7
          %v787 = vsub.s32 0, %v786
          %v788 = vrot.slane %v783, %v787
          %v790 = vadd.f32 %v766, %v788
          %v791 = vmul.f32 %v775, %v790
          %v792 = vadd.f32 %v579, %v791
          %v793 = vtanh.pop %v792
          %v794 = vsub.f32 1.0, %v782
          %v795 = vmul.f32 %v794, %v793
          %v796 = vmul.f32 %v782, %v573
          %v797 = vadd.f32 %v795, %v796
          %vm798 = vcmp.gt.s32.totalorder %v344, 1
          %v799 = vsel %vm798, 1, 0
          %800 = vset.pattern.permute.xlu0 0
          %801 = vperm.xlu0 %800, %v799
          %v802 = vpop.permute.xlu0 %801
          %vm803 = vcmp.eq.s32.totalorder %v802, 1
          %v804 = vsel %vm803, %v797, %v573
          %v805 = vsel %vm803, %v797, 0.0
          %s806 = scalar_lea.vmem [#allocation7], 8
          %807 = vst [vmem:[%s806] sm:$0xff] %v805
          %s808 = scalar_lea.vmem %s283, 48 [#allocation2]
          %v809 = vld [vmem:[%s808] sm:$0xff]
          %v810 = vld [vmem:[%s808 + $0x8] sm:$0xff]
          %v811 = vld [vmem:[%s808 + $0x10] sm:$0xff]
          %v812 = vld [vmem:[%s292] sm:$0xff]
          %v813 = vld [vmem:[%s292 + $0x8] sm:$0xff]
          %v814 = vld [vmem:[%s292 + $0x10] sm:$0xff]
          %v815 = vld [vmem:[%s292 + $0x18] sm:$0xff]
          %v816 = vld [vmem:[%s292 + $0x20] sm:$0xff]
          %v817 = vld [vmem:[%s292 + $0x28] sm:$0xff]
          %v818 = vld [vmem:[%s292 + $0x30] sm:$0xff]
          %v819 = vld [vmem:[%s292 + $0x38] sm:$0xff]
          %v820 = vld [vmem:[%s292 + $0x40] sm:$0xff]
          %v821 = vld [vmem:[%s292 + $0x48] sm:$0xff]
          %v822 = vld [vmem:[%s292 + $0x50] sm:$0xff]
          %v823 = vld [vmem:[%s292 + $0x58] sm:$0xff]
          %v824 = vld [vmem:[%s292 + $0x60] sm:$0xff]
          %v825 = vld [vmem:[%s292 + $0x68] sm:$0xff]
          %v826 = vld [vmem:[%s292 + $0x70] sm:$0xff]
          %v827 = vld [vmem:[%s292 + $0x78] sm:$0xff]
          %v828 = vld [vmem:[%s292 + $0x80] sm:$0xff]
          %v829 = vld [vmem:[%s292 + $0x88] sm:$0xff]
          %v830 = vld [vmem:[%s292 + $0x90] sm:$0xff]
          %v831 = vld [vmem:[%s292 + $0x98] sm:$0xff]
          %v832 = vld [vmem:[%s292 + $0xa0] sm:$0xff]
          %v833 = vld [vmem:[%s292 + $0xa8] sm:$0xff]
          %v834 = vld [vmem:[%s292 + $0xb0] sm:$0xff]
          %v835 = vld [vmem:[%s292 + $0xb8] sm:$0xff]
          %v836 = vld [vmem:[%s292 + $0xc0] sm:$0xff]
          %v837 = vld [vmem:[%s292 + $0xc8] sm:$0xff]
          %v838 = vld [vmem:[%s292 + $0xd0] sm:$0xff]
          %v839 = vld [vmem:[%s292 + $0xd8] sm:$0xff]
          %v840 = vld [vmem:[%s292 + $0xe0] sm:$0xff]
          %v841 = vld [vmem:[%s292 + $0xe8] sm:$0xff]
          %v842 = vld [vmem:[%s292 + $0xf0] sm:$0xff]
          %v843 = vld [vmem:[%s292 + $0xf8] sm:$0xff]
          %v844 = vld [vmem:[%s292 + $0x100] sm:$0xff]
          %v845 = vld [vmem:[%s292 + $0x108] sm:$0xff]
          %v846 = vld [vmem:[%s292 + $0x110] sm:$0xff]
          %v847 = vld [vmem:[%s292 + $0x118] sm:$0xff]
          %v848 = vld [vmem:[%s292 + $0x120] sm:$0xff]
          %v849 = vld [vmem:[%s292 + $0x128] sm:$0xff]
          %v850 = vld [vmem:[%s292 + $0x130] sm:$0xff]
          %v851 = vld [vmem:[%s292 + $0x138] sm:$0xff]
          %v852 = vld [vmem:[%s292 + $0x140] sm:$0xff]
          %v853 = vld [vmem:[%s292 + $0x148] sm:$0xff]
          %v854 = vld [vmem:[%s292 + $0x150] sm:$0xff]
          %v855 = vld [vmem:[%s292 + $0x158] sm:$0xff]
          %v856 = vld [vmem:[%s292 + $0x160] sm:$0xff]
          %v857 = vld [vmem:[%s292 + $0x168] sm:$0xff]
          %v858 = vld [vmem:[%s292 + $0x170] sm:$0xff]
          %v859 = vld [vmem:[%s292 + $0x178] sm:$0xff]
          %860 = vmatprep.subr.mxu0 %v813
          %861 = vmatpush1.msra.mxu0 %v812
          %862 = vmatprep.subr.mxu0 %v816
          %863 = vmatpush1.msra.mxu0 %v815
          %864 = vmatprep.subr.mxu0 %v819
          %865 = vmatpush1.msra.mxu0 %v818
          %866 = vmatprep.subr.mxu0 %v822
          %867 = vmatpush1.msra.mxu0 %v821
          %868 = vmatprep.subr.mxu0 %v825
          %869 = vmatpush1.msra.mxu0 %v824
          %870 = vmatprep.subr.mxu0 %v828
          %871 = vmatpush1.msra.mxu0 %v827
          %872 = vmatprep.subr.mxu0 %v831
          %873 = vmatpush1.msra.mxu0 %v830
          %874 = vmatprep.subr.mxu0 %v834
          %875 = vmatpush1.msra.mxu0 %v833
          %876 = vmatprep.subr.mxu0 %v837
          %877 = vmatpush1.msra.mxu0 %v836
          %878 = vmatprep.subr.mxu0 %v840
          %879 = vmatpush1.msra.mxu0 %v839
          %880 = vmatprep.subr.mxu0 %v843
          %881 = vmatpush1.msra.mxu0 %v842
          %882 = vmatprep.subr.mxu0 %v846
          %883 = vmatpush1.msra.mxu0 %v845
          %884 = vmatprep.subr.mxu0 %v849
          %885 = vmatpush1.msra.mxu0 %v848
          %886 = vmatprep.subr.mxu0 %v852
          %887 = vmatpush1.msra.mxu0 %v851
          %888 = vmatprep.subr.mxu0 %v855
          %889 = vmatpush1.msra.mxu0 %v854
          %890 = vmatprep.subr.mxu0 %v858
          %891 = vmatpush1.msra.mxu0 %v857
          %892 = vmatprep.subr.mxu0 0.0
          %893 = vmatpush1.msra.mxu0 0.0
          %894 = vmatprep.subr.mxu0 0.0
          %895 = vmatpush1.msra.mxu0 0.0
          %896 = vmatprep.subr.mxu0 0.0
          %897 = vmatpush1.msra.mxu0 0.0
          %898 = vmatprep.subr.mxu0 0.0
          %899 = vmatpush1.msra.mxu0 0.0
          %900 = vmatprep.subr.mxu0 0.0
          %901 = vmatpush1.msra.mxu0 0.0
          %902 = vmatprep.subr.mxu0 0.0
          %903 = vmatpush1.msra.mxu0 0.0
          %904 = vmatprep.subr.mxu0 0.0
          %905 = vmatpush1.msra.mxu0 0.0
          %906 = vmatprep.subr.mxu0 0.0
          %907 = vmatpush1.msra.mxu0 0.0
          %908 = vmatprep.subr.mxu0 0.0
          %909 = vmatpush1.msra.mxu0 0.0
          %910 = vmatprep.subr.mxu0 0.0
          %911 = vmatpush1.msra.mxu0 0.0
          %912 = vmatprep.subr.mxu0 0.0
          %913 = vmatpush1.msra.mxu0 0.0
          %914 = vmatprep.subr.mxu0 0.0
          %915 = vmatpush1.msra.mxu0 0.0
          %916 = vmatprep.subr.mxu0 0.0
          %917 = vmatpush1.msra.mxu0 0.0
          %918 = vmatprep.subr.mxu0 0.0
          %919 = vmatpush1.msra.mxu0 0.0
          %920 = vmatprep.subr.mxu0 0.0
          %921 = vmatpush1.msra.mxu0 0.0
          %922 = vmatprep.subr.mxu0 0.0
          %923 = vmatpush1.msra.mxu0 0.0
          %924 = vmatprep.mubr.f32.mxu0 0.0
          %925 = vmatmul.mubr.f32.gmra.mrb[0].mxu0 %v804
          %v926 = vpop.f32.mrb[0].mxu0
          %v927 = vadd.f32 0.0, %v926
          %v928 = vpop.f32.mrb[0].mxu0
          %v929 = vadd.f32 0.0, %v928
          %930 = vdwg.mxu0
          %931 = vmatprep.subr.mxu0 0.0
          %932 = vmatpush1.msra.mxu0 %v814
          %933 = vmatprep.subr.mxu0 0.0
          %934 = vmatpush1.msra.mxu0 %v817
          %935 = vmatprep.subr.mxu0 0.0
          %936 = vmatpush1.msra.mxu0 %v820
          %937 = vmatprep.subr.mxu0 0.0
          %938 = vmatpush1.msra.mxu0 %v823
          %939 = vmatprep.subr.mxu0 0.0
          %940 = vmatpush1.msra.mxu0 %v826
          %941 = vmatprep.subr.mxu0 0.0
          %942 = vmatpush1.msra.mxu0 %v829
          %943 = vmatprep.subr.mxu0 0.0
          %944 = vmatpush1.msra.mxu0 %v832
          %945 = vmatprep.subr.mxu0 0.0
          %946 = vmatpush1.msra.mxu0 %v835
          %947 = vmatprep.subr.mxu0 0.0
          %948 = vmatpush1.msra.mxu0 %v838
          %949 = vmatprep.subr.mxu0 0.0
          %950 = vmatpush1.msra.mxu0 %v841
          %951 = vmatprep.subr.mxu0 0.0
          %952 = vmatpush1.msra.mxu0 %v844
          %953 = vmatprep.subr.mxu0 0.0
          %954 = vmatpush1.msra.mxu0 %v847
          %955 = vmatprep.subr.mxu0 0.0
          %956 = vmatpush1.msra.mxu0 %v850
          %957 = vmatprep.subr.mxu0 0.0
          %958 = vmatpush1.msra.mxu0 %v853
          %959 = vmatprep.subr.mxu0 0.0
          %960 = vmatpush1.msra.mxu0 %v856
          %961 = vmatprep.subr.mxu0 0.0
          %962 = vmatpush1.msra.mxu0 %v859
          %963 = vmatprep.subr.mxu0 0.0
          %964 = vmatpush1.msra.mxu0 0.0
          %965 = vmatprep.subr.mxu0 0.0
          %966 = vmatpush1.msra.mxu0 0.0
          %967 = vmatprep.subr.mxu0 0.0
          %968 = vmatpush1.msra.mxu0 0.0
          %969 = vmatprep.subr.mxu0 0.0
          %970 = vmatpush1.msra.mxu0 0.0
          %971 = vmatprep.subr.mxu0 0.0
          %972 = vmatpush1.msra.mxu0 0.0
          %973 = vmatprep.subr.mxu0 0.0
          %974 = vmatpush1.msra.mxu0 0.0
          %975 = vmatprep.subr.mxu0 0.0
          %976 = vmatpush1.msra.mxu0 0.0
          %977 = vmatprep.subr.mxu0 0.0
          %978 = vmatpush1.msra.mxu0 0.0
          %979 = vmatprep.subr.mxu0 0.0
          %980 = vmatpush1.msra.mxu0 0.0
          %981 = vmatprep.subr.mxu0 0.0
          %982 = vmatpush1.msra.mxu0 0.0
          %983 = vmatprep.subr.mxu0 0.0
          %984 = vmatpush1.msra.mxu0 0.0
          %985 = vmatprep.subr.mxu0 0.0
          %986 = vmatpush1.msra.mxu0 0.0
          %987 = vmatprep.subr.mxu0 0.0
          %988 = vmatpush1.msra.mxu0 0.0
          %989 = vmatprep.subr.mxu0 0.0
          %990 = vmatpush1.msra.mxu0 0.0
          %991 = vmatprep.subr.mxu0 0.0
          %992 = vmatpush1.msra.mxu0 0.0
          %993 = vmatprep.subr.mxu0 0.0
          %994 = vmatpush1.msra.mxu0 0.0
          %995 = vmatprep.mubr.f32.mxu0 0.0
          %996 = vmatmul.mubr.f32.gmra.mrb[0].mxu0 %v804
          %v997 = vpop.f32.mrb[0].mxu0
          %v998 = vadd.f32 0.0, %v997
          %v999 = vpop.f32.mrb[0].mxu0
          %1000 = vdwg.mxu0
          %v1001 = vadd.f32 %v809, %v927
          %v1002 = vxor.u32 %v1001, 2147483648
          %v1003 = vmul.f32 %v1002, 1.442695
          %v1004 = vpow.pop %v1003
          %v1005 = vadd.f32 %v1004, 1.0
          %v1006 = vrcp.pop %v1005
          %v1007 = vmul.f32 1.0, %v1006
          %v1008 = vadd.f32 %v810, %v929
          %v1009 = vxor.u32 %v1008, 2147483648
          %v1010 = vmul.f32 %v1009, 1.442695
          %v1011 = vpow.pop %v1010
          %v1012 = vadd.f32 %v1011, 1.0
          %v1013 = vrcp.pop %v1012
          %v1014 = vmul.f32 1.0, %v1013
          %v1015 = vld [vmem:[%s339] sm:$0x1]
          %v1017 = vlaneseq
          %v1018 = vshrl.u32 %v1017, 7
          %v1019 = vsub.s32 0, %v1018
          %v1020 = vrot.slane %v1015, %v1019
          %v1022 = vadd.f32 %v998, %v1020
          %v1023 = vmul.f32 %v1007, %v1022
          %v1024 = vadd.f32 %v811, %v1023
          %v1025 = vtanh.pop %v1024
          %v1026 = vsub.f32 1.0, %v1014
          %v1027 = vmul.f32 %v1026, %v1025
          %v1028 = vmul.f32 %v1014, %v804
          %v1029 = vadd.f32 %v1027, %v1028
          %vm1030 = vcmp.gt.s32.totalorder %v344, 2
          %v1031 = vsel %vm1030, 1, 0
          %1032 = vset.pattern.permute.xlu0 0
          %1033 = vperm.xlu0 %1032, %v1031
          %v1034 = vpop.permute.xlu0 %1033
          %vm1035 = vcmp.eq.s32.totalorder %v1034, 1
          %v1036 = vsel %vm1035, %v1029, %v804
          %v1037 = vsel %vm1035, %v1029, 0.0
          %s1038 = scalar_lea.vmem [#allocation7], 16
          %1039 = vst [vmem:[%s1038] sm:$0xff] %v1037
          %s1040 = scalar_lea.vmem %s283, 72 [#allocation2]
          %v1041 = vld [vmem:[%s1040] sm:$0xff]
          %v1042 = vld [vmem:[%s1040 + $0x8] sm:$0xff]
          %v1043 = vld [vmem:[%s1040 + $0x10] sm:$0xff]
          %v1044 = vld [vmem:[%s292] sm:$0xff]
          %v1045 = vld [vmem:[%s292 + $0x8] sm:$0xff]
          %v1046 = vld [vmem:[%s292 + $0x10] sm:$0xff]
          %v1047 = vld [vmem:[%s292 + $0x18] sm:$0xff]
          %v1048 = vld [vmem:[%s292 + $0x20] sm:$0xff]
          %v1049 = vld [vmem:[%s292 + $0x28] sm:$0xff]
          %v1050 = vld [vmem:[%s292 + $0x30] sm:$0xff]
          %v1051 = vld [vmem:[%s292 + $0x38] sm:$0xff]
          %v1052 = vld [vmem:[%s292 + $0x40] sm:$0xff]
          %v1053 = vld [vmem:[%s292 + $0x48] sm:$0xff]
          %v1054 = vld [vmem:[%s292 + $0x50] sm:$0xff]
          %v1055 = vld [vmem:[%s292 + $0x58] sm:$0xff]
          %v1056 = vld [vmem:[%s292 + $0x60] sm:$0xff]
          %v1057 = vld [vmem:[%s292 + $0x68] sm:$0xff]
          %v1058 = vld [vmem:[%s292 + $0x70] sm:$0xff]
          %v1059 = vld [vmem:[%s292 + $0x78] sm:$0xff]
          %v1060 = vld [vmem:[%s292 + $0x80] sm:$0xff]
          %v1061 = vld [vmem:[%s292 + $0x88] sm:$0xff]
          %v1062 = vld [vmem:[%s292 + $0x90] sm:$0xff]
          %v1063 = vld [vmem:[%s292 + $0x98] sm:$0xff]
          %v1064 = vld [vmem:[%s292 + $0xa0] sm:$0xff]
          %v1065 = vld [vmem:[%s292 + $0xa8] sm:$0xff]
          %v1066 = vld [vmem:[%s292 + $0xb0] sm:$0xff]
          %v1067 = vld [vmem:[%s292 + $0xb8] sm:$0xff]
          %v1068 = vld [vmem:[%s292 + $0xc0] sm:$0xff]
          %v1069 = vld [vmem:[%s292 + $0xc8] sm:$0xff]
          %v1070 = vld [vmem:[%s292 + $0xd0] sm:$0xff]
          %v1071 = vld [vmem:[%s292 + $0xd8] sm:$0xff]
          %v1072 = vld [vmem:[%s292 + $0xe0] sm:$0xff]
          %v1073 = vld [vmem:[%s292 + $0xe8] sm:$0xff]
          %v1074 = vld [vmem:[%s292 + $0xf0] sm:$0xff]
          %v1075 = vld [vmem:[%s292 + $0xf8] sm:$0xff]
          %v1076 = vld [vmem:[%s292 + $0x100] sm:$0xff]
          %v1077 = vld [vmem:[%s292 + $0x108] sm:$0xff]
          %v1078 = vld [vmem:[%s292 + $0x110] sm:$0xff]
          %v1079 = vld [vmem:[%s292 + $0x118] sm:$0xff]
          %v1080 = vld [vmem:[%s292 + $0x120] sm:$0xff]
          %v1081 = vld [vmem:[%s292 + $0x128] sm:$0xff]
          %v1082 = vld [vmem:[%s292 + $0x130] sm:$0xff]
          %v1083 = vld [vmem:[%s292 + $0x138] sm:$0xff]
          %v1084 = vld [vmem:[%s292 + $0x140] sm:$0xff]
          %v1085 = vld [vmem:[%s292 + $0x148] sm:$0xff]
          %v1086 = vld [vmem:[%s292 + $0x150] sm:$0xff]
          %v1087 = vld [vmem:[%s292 + $0x158] sm:$0xff]
          %v1088 = vld [vmem:[%s292 + $0x160] sm:$0xff]
          %v1089 = vld [vmem:[%s292 + $0x168] sm:$0xff]
          %v1090 = vld [vmem:[%s292 + $0x170] sm:$0xff]
          %v1091 = vld [vmem:[%s292 + $0x178] sm:$0xff]
          %1092 = vmatprep.subr.mxu0 %v1045
          %1093 = vmatpush1.msra.mxu0 %v1044
          %1094 = vmatprep.subr.mxu0 %v1048
          %1095 = vmatpush1.msra.mxu0 %v1047
          %1096 = vmatprep.subr.mxu0 %v1051
          %1097 = vmatpush1.msra.mxu0 %v1050
          %1098 = vmatprep.subr.mxu0 %v1054
          %1099 = vmatpush1.msra.mxu0 %v1053
          %1100 = vmatprep.subr.mxu0 %v1057
          %1101 = vmatpush1.msra.mxu0 %v1056
          %1102 = vmatprep.subr.mxu0 %v1060
          %1103 = vmatpush1.msra.mxu0 %v1059
          %1104 = vmatprep.subr.mxu0 %v1063
          %1105 = vmatpush1.msra.mxu0 %v1062
          %1106 = vmatprep.subr.mxu0 %v1066
          %1107 = vmatpush1.msra.mxu0 %v1065
          %1108 = vmatprep.subr.mxu0 %v1069
          %1109 = vmatpush1.msra.mxu0 %v1068
          %1110 = vmatprep.subr.mxu0 %v1072
          %1111 = vmatpush1.msra.mxu0 %v1071
          %1112 = vmatprep.subr.mxu0 %v1075
          %1113 = vmatpush1.msra.mxu0 %v1074
          %1114 = vmatprep.subr.mxu0 %v1078
          %1115 = vmatpush1.msra.mxu0 %v1077
          %1116 = vmatprep.subr.mxu0 %v1081
          %1117 = vmatpush1.msra.mxu0 %v1080
          %1118 = vmatprep.subr.mxu0 %v1084
          %1119 = vmatpush1.msra.mxu0 %v1083
          %1120 = vmatprep.subr.mxu0 %v1087
          %1121 = vmatpush1.msra.mxu0 %v1086
          %1122 = vmatprep.subr.mxu0 %v1090
          %1123 = vmatpush1.msra.mxu0 %v1089
          %1124 = vmatprep.subr.mxu0 0.0
          %1125 = vmatpush1.msra.mxu0 0.0
          %1126 = vmatprep.subr.mxu0 0.0
          %1127 = vmatpush1.msra.mxu0 0.0
          %1128 = vmatprep.subr.mxu0 0.0
          %1129 = vmatpush1.msra.mxu0 0.0
          %1130 = vmatprep.subr.mxu0 0.0
          %1131 = vmatpush1.msra.mxu0 0.0
          %1132 = vmatprep.subr.mxu0 0.0
          %1133 = vmatpush1.msra.mxu0 0.0
          %1134 = vmatprep.subr.mxu0 0.0
          %1135 = vmatpush1.msra.mxu0 0.0
          %1136 = vmatprep.subr.mxu0 0.0
          %1137 = vmatpush1.msra.mxu0 0.0
          %1138 = vmatprep.subr.mxu0 0.0
          %1139 = vmatpush1.msra.mxu0 0.0
          %1140 = vmatprep.subr.mxu0 0.0
          %1141 = vmatpush1.msra.mxu0 0.0
          %1142 = vmatprep.subr.mxu0 0.0
          %1143 = vmatpush1.msra.mxu0 0.0
          %1144 = vmatprep.subr.mxu0 0.0
          %1145 = vmatpush1.msra.mxu0 0.0
          %1146 = vmatprep.subr.mxu0 0.0
          %1147 = vmatpush1.msra.mxu0 0.0
          %1148 = vmatprep.subr.mxu0 0.0
          %1149 = vmatpush1.msra.mxu0 0.0
          %1150 = vmatprep.subr.mxu0 0.0
          %1151 = vmatpush1.msra.mxu0 0.0
          %1152 = vmatprep.subr.mxu0 0.0
          %1153 = vmatpush1.msra.mxu0 0.0
          %1154 = vmatprep.subr.mxu0 0.0
          %1155 = vmatpush1.msra.mxu0 0.0
          %1156 = vmatprep.mubr.f32.mxu0 0.0
          %1157 = vmatmul.mubr.f32.gmra.mrb[0].mxu0 %v1036
          %v1158 = vpop.f32.mrb[0].mxu0
          %v1159 = vadd.f32 0.0, %v1158
          %v1160 = vpop.f32.mrb[0].mxu0
          %v1161 = vadd.f32 0.0, %v1160
          %1162 = vdwg.mxu0
          %1163 = vmatprep.subr.mxu0 0.0
          %1164 = vmatpush1.msra.mxu0 %v1046
          %1165 = vmatprep.subr.mxu0 0.0
          %1166 = vmatpush1.msra.mxu0 %v1049
          %1167 = vmatprep.subr.mxu0 0.0
          %1168 = vmatpush1.msra.mxu0 %v1052
          %1169 = vmatprep.subr.mxu0 0.0
          %1170 = vmatpush1.msra.mxu0 %v1055
          %1171 = vmatprep.subr.mxu0 0.0
          %1172 = vmatpush1.msra.mxu0 %v1058
          %1173 = vmatprep.subr.mxu0 0.0
          %1174 = vmatpush1.msra.mxu0 %v1061
          %1175 = vmatprep.subr.mxu0 0.0
          %1176 = vmatpush1.msra.mxu0 %v1064
          %1177 = vmatprep.subr.mxu0 0.0
          %1178 = vmatpush1.msra.mxu0 %v1067
          %1179 = vmatprep.subr.mxu0 0.0
          %1180 = vmatpush1.msra.mxu0 %v1070
          %1181 = vmatprep.subr.mxu0 0.0
          %1182 = vmatpush1.msra.mxu0 %v1073
          %1183 = vmatprep.subr.mxu0 0.0
          %1184 = vmatpush1.msra.mxu0 %v1076
          %1185 = vmatprep.subr.mxu0 0.0
          %1186 = vmatpush1.msra.mxu0 %v1079
          %1187 = vmatprep.subr.mxu0 0.0
          %1188 = vmatpush1.msra.mxu0 %v1082
          %1189 = vmatprep.subr.mxu0 0.0
          %1190 = vmatpush1.msra.mxu0 %v1085
          %1191 = vmatprep.subr.mxu0 0.0
          %1192 = vmatpush1.msra.mxu0 %v1088
          %1193 = vmatprep.subr.mxu0 0.0
          %1194 = vmatpush1.msra.mxu0 %v1091
          %1195 = vmatprep.subr.mxu0 0.0
          %1196 = vmatpush1.msra.mxu0 0.0
          %1197 = vmatprep.subr.mxu0 0.0
          %1198 = vmatpush1.msra.mxu0 0.0
          %1199 = vmatprep.subr.mxu0 0.0
          %1200 = vmatpush1.msra.mxu0 0.0
          %1201 = vmatprep.subr.mxu0 0.0
          %1202 = vmatpush1.msra.mxu0 0.0
          %1203 = vmatprep.subr.mxu0 0.0
          %1204 = vmatpush1.msra.mxu0 0.0
          %1205 = vmatprep.subr.mxu0 0.0
          %1206 = vmatpush1.msra.mxu0 0.0
          %1207 = vmatprep.subr.mxu0 0.0
          %1208 = vmatpush1.msra.mxu0 0.0
          %1209 = vmatprep.subr.mxu0 0.0
          %1210 = vmatpush1.msra.mxu0 0.0
          %1211 = vmatprep.subr.mxu0 0.0
          %1212 = vmatpush1.msra.mxu0 0.0
          %1213 = vmatprep.subr.mxu0 0.0
          %1214 = vmatpush1.msra.mxu0 0.0
          %1215 = vmatprep.subr.mxu0 0.0
          %1216 = vmatpush1.msra.mxu0 0.0
          %1217 = vmatprep.subr.mxu0 0.0
          %1218 = vmatpush1.msra.mxu0 0.0
          %1219 = vmatprep.subr.mxu0 0.0
          %1220 = vmatpush1.msra.mxu0 0.0
          %1221 = vmatprep.subr.mxu0 0.0
          %1222 = vmatpush1.msra.mxu0 0.0
          %1223 = vmatprep.subr.mxu0 0.0
          %1224 = vmatpush1.msra.mxu0 0.0
          %1225 = vmatprep.subr.mxu0 0.0
          %1226 = vmatpush1.msra.mxu0 0.0
          %1227 = vmatprep.mubr.f32.mxu0 0.0
          %1228 = vmatmul.mubr.f32.gmra.mrb[0].mxu0 %v1036
          %v1229 = vpop.f32.mrb[0].mxu0
          %v1230 = vadd.f32 0.0, %v1229
          %v1231 = vpop.f32.mrb[0].mxu0
          %1232 = vdwg.mxu0
          %v1233 = vadd.f32 %v1041, %v1159
          %v1234 = vxor.u32 %v1233, 2147483648
          %v1235 = vmul.f32 %v1234, 1.442695
          %v1236 = vpow.pop %v1235
          %v1237 = vadd.f32 %v1236, 1.0
          %v1238 = vrcp.pop %v1237
          %v1239 = vmul.f32 1.0, %v1238
          %v1240 = vadd.f32 %v1042, %v1161
          %v1241 = vxor.u32 %v1240, 2147483648
          %v1242 = vmul.f32 %v1241, 1.442695
          %v1243 = vpow.pop %v1242
          %v1244 = vadd.f32 %v1243, 1.0
          %v1245 = vrcp.pop %v1244
          %v1246 = vmul.f32 1.0, %v1245
          %v1247 = vld [vmem:[%s339] sm:$0x1]
          %v1249 = vlaneseq
          %v1250 = vshrl.u32 %v1249, 7
          %v1251 = vsub.s32 0, %v1250
          %v1252 = vrot.slane %v1247, %v1251
          %v1254 = vadd.f32 %v1230, %v1252
          %v1255 = vmul.f32 %v1239, %v1254
          %v1256 = vadd.f32 %v1043, %v1255
          %v1257 = vtanh.pop %v1256
          %v1258 = vsub.f32 1.0, %v1246
          %v1259 = vmul.f32 %v1258, %v1257
          %v1260 = vmul.f32 %v1246, %v1036
          %v1261 = vadd.f32 %v1259, %v1260
          %vm1262 = vcmp.gt.s32.totalorder %v344, 3
          %v1263 = vsel %vm1262, 1, 0
          %1264 = vset.pattern.permute.xlu0 0
          %1265 = vperm.xlu0 %1264, %v1263
          %v1266 = vpop.permute.xlu0 %1265
          %vm1267 = vcmp.eq.s32.totalorder %v1266, 1
          %v1268 = vsel %vm1267, %v1261, %v1036
          %v1269 = vsel %vm1267, %v1261, 0.0
          %s1270 = scalar_lea.vmem [#allocation7], 24
          %1271 = vst [vmem:[%s1270] sm:$0xff] %v1269
          %s1272 = scalar_lea.vmem %s283, 96 [#allocation2]
          %v1273 = vld [vmem:[%s1272] sm:$0xff]
          %v1274 = vld [vmem:[%s1272 + $0x8] sm:$0xff]
          %v1275 = vld [vmem:[%s1272 + $0x10] sm:$0xff]
          %v1276 = vld [vmem:[%s292] sm:$0xff]
          %v1277 = vld [vmem:[%s292 + $0x8] sm:$0xff]
          %v1278 = vld [vmem:[%s292 + $0x10] sm:$0xff]
          %v1279 = vld [vmem:[%s292 + $0x18] sm:$0xff]
          %v1280 = vld [vmem:[%s292 + $0x20] sm:$0xff]
          %v1281 = vld [vmem:[%s292 + $0x28] sm:$0xff]
          %v1282 = vld [vmem:[%s292 + $0x30] sm:$0xff]
          %v1283 = vld [vmem:[%s292 + $0x38] sm:$0xff]
          %v1284 = vld [vmem:[%s292 + $0x40] sm:$0xff]
          %v1285 = vld [vmem:[%s292 + $0x48] sm:$0xff]
          %v1286 = vld [vmem:[%s292 + $0x50] sm:$0xff]
          %v1287 = vld [vmem:[%s292 + $0x58] sm:$0xff]
          %v1288 = vld [vmem:[%s292 + $0x60] sm:$0xff]
          %v1289 = vld [vmem:[%s292 + $0x68] sm:$0xff]
          %v1290 = vld [vmem:[%s292 + $0x70] sm:$0xff]
          %v1291 = vld [vmem:[%s292 + $0x78] sm:$0xff]
          %v1292 = vld [vmem:[%s292 + $0x80] sm:$0xff]
          %v1293 = vld [vmem:[%s292 + $0x88] sm:$0xff]
          %v1294 = vld [vmem:[%s292 + $0x90] sm:$0xff]
          %v1295 = vld [vmem:[%s292 + $0x98] sm:$0xff]
          %v1296 = vld [vmem:[%s292 + $0xa0] sm:$0xff]
          %v1297 = vld [vmem:[%s292 + $0xa8] sm:$0xff]
          %v1298 = vld [vmem:[%s292 + $0xb0] sm:$0xff]
          %v1299 = vld [vmem:[%s292 + $0xb8] sm:$0xff]
          %v1300 = vld [vmem:[%s292 + $0xc0] sm:$0xff]
          %v1301 = vld [vmem:[%s292 + $0xc8] sm:$0xff]
          %v1302 = vld [vmem:[%s292 + $0xd0] sm:$0xff]
          %v1303 = vld [vmem:[%s292 + $0xd8] sm:$0xff]
          %v1304 = vld [vmem:[%s292 + $0xe0] sm:$0xff]
          %v1305 = vld [vmem:[%s292 + $0xe8] sm:$0xff]
          %v1306 = vld [vmem:[%s292 + $0xf0] sm:$0xff]
          %v1307 = vld [vmem:[%s292 + $0xf8] sm:$0xff]
          %v1308 = vld [vmem:[%s292 + $0x100] sm:$0xff]
          %v1309 = vld [vmem:[%s292 + $0x108] sm:$0xff]
          %v1310 = vld [vmem:[%s292 + $0x110] sm:$0xff]
          %v1311 = vld [vmem:[%s292 + $0x118] sm:$0xff]
          %v1312 = vld [vmem:[%s292 + $0x120] sm:$0xff]
          %v1313 = vld [vmem:[%s292 + $0x128] sm:$0xff]
          %v1314 = vld [vmem:[%s292 + $0x130] sm:$0xff]
          %v1315 = vld [vmem:[%s292 + $0x138] sm:$0xff]
          %v1316 = vld [vmem:[%s292 + $0x140] sm:$0xff]
          %v1317 = vld [vmem:[%s292 + $0x148] sm:$0xff]
          %v1318 = vld [vmem:[%s292 + $0x150] sm:$0xff]
          %v1319 = vld [vmem:[%s292 + $0x158] sm:$0xff]
          %v1320 = vld [vmem:[%s292 + $0x160] sm:$0xff]
          %v1321 = vld [vmem:[%s292 + $0x168] sm:$0xff]
          %v1322 = vld [vmem:[%s292 + $0x170] sm:$0xff]
          %v1323 = vld [vmem:[%s292 + $0x178] sm:$0xff]
          %1324 = vmatprep.subr.mxu0 %v1277
          %1325 = vmatpush1.msra.mxu0 %v1276
          %1326 = vmatprep.subr.mxu0 %v1280
          %1327 = vmatpush1.msra.mxu0 %v1279
          %1328 = vmatprep.subr.mxu0 %v1283
          %1329 = vmatpush1.msra.mxu0 %v1282
          %1330 = vmatprep.subr.mxu0 %v1286
          %1331 = vmatpush1.msra.mxu0 %v1285
          %1332 = vmatprep.subr.mxu0 %v1289
          %1333 = vmatpush1.msra.mxu0 %v1288
          %1334 = vmatprep.subr.mxu0 %v1292
          %1335 = vmatpush1.msra.mxu0 %v1291
          %1336 = vmatprep.subr.mxu0 %v1295
          %1337 = vmatpush1.msra.mxu0 %v1294
          %1338 = vmatprep.subr.mxu0 %v1298
          %1339 = vmatpush1.msra.mxu0 %v1297
          %1340 = vmatprep.subr.mxu0 %v1301
          %1341 = vmatpush1.msra.mxu0 %v1300
          %1342 = vmatprep.subr.mxu0 %v1304
          %1343 = vmatpush1.msra.mxu0 %v1303
          %1344 = vmatprep.subr.mxu0 %v1307
          %1345 = vmatpush1.msra.mxu0 %v1306
          %1346 = vmatprep.subr.mxu0 %v1310
          %1347 = vmatpush1.msra.mxu0 %v1309
          %1348 = vmatprep.subr.mxu0 %v1313
          %1349 = vmatpush1.msra.mxu0 %v1312
          %1350 = vmatprep.subr.mxu0 %v1316
          %1351 = vmatpush1.msra.mxu0 %v1315
          %1352 = vmatprep.subr.mxu0 %v1319
          %1353 = vmatpush1.msra.mxu0 %v1318
          %1354 = vmatprep.subr.mxu0 %v1322
          %1355 = vmatpush1.msra.mxu0 %v1321
          %1356 = vmatprep.subr.mxu0 0.0
          %1357 = vmatpush1.msra.mxu0 0.0
          %1358 = vmatprep.subr.mxu0 0.0
          %1359 = vmatpush1.msra.mxu0 0.0
          %1360 = vmatprep.subr.mxu0 0.0
          %1361 = vmatpush1.msra.mxu0 0.0
          %1362 = vmatprep.subr.mxu0 0.0
          %1363 = vmatpush1.msra.mxu0 0.0
          %1364 = vmatprep.subr.mxu0 0.0
          %1365 = vmatpush1.msra.mxu0 0.0
          %1366 = vmatprep.subr.mxu0 0.0
          %1367 = vmatpush1.msra.mxu0 0.0
          %1368 = vmatprep.subr.mxu0 0.0
          %1369 = vmatpush1.msra.mxu0 0.0
          %1370 = vmatprep.subr.mxu0 0.0
          %1371 = vmatpush1.msra.mxu0 0.0
          %1372 = vmatprep.subr.mxu0 0.0
          %1373 = vmatpush1.msra.mxu0 0.0
          %1374 = vmatprep.subr.mxu0 0.0
          %1375 = vmatpush1.msra.mxu0 0.0
          %1376 = vmatprep.subr.mxu0 0.0
          %1377 = vmatpush1.msra.mxu0 0.0
          %1378 = vmatprep.subr.mxu0 0.0
          %1379 = vmatpush1.msra.mxu0 0.0
          %1380 = vmatprep.subr.mxu0 0.0
          %1381 = vmatpush1.msra.mxu0 0.0
          %1382 = vmatprep.subr.mxu0 0.0
          %1383 = vmatpush1.msra.mxu0 0.0
          %1384 = vmatprep.subr.mxu0 0.0
          %1385 = vmatpush1.msra.mxu0 0.0
          %1386 = vmatprep.subr.mxu0 0.0
          %1387 = vmatpush1.msra.mxu0 0.0
          %1388 = vmatprep.mubr.f32.mxu0 0.0
          %1389 = vmatmul.mubr.f32.gmra.mrb[0].mxu0 %v1268
          %v1390 = vpop.f32.mrb[0].mxu0
          %v1391 = vadd.f32 0.0, %v1390
          %v1392 = vpop.f32.mrb[0].mxu0
          %v1393 = vadd.f32 0.0, %v1392
          %1394 = vdwg.mxu0
          %1395 = vmatprep.subr.mxu0 0.0
          %1396 = vmatpush1.msra.mxu0 %v1278
          %1397 = vmatprep.subr.mxu0 0.0
          %1398 = vmatpush1.msra.mxu0 %v1281
          %1399 = vmatprep.subr.mxu0 0.0
          %1400 = vmatpush1.msra.mxu0 %v1284
          %1401 = vmatprep.subr.mxu0 0.0
          %1402 = vmatpush1.msra.mxu0 %v1287
          %1403 = vmatprep.subr.mxu0 0.0
          %1404 = vmatpush1.msra.mxu0 %v1290
          %1405 = vmatprep.subr.mxu0 0.0
          %1406 = vmatpush1.msra.mxu0 %v1293
          %1407 = vmatprep.subr.mxu0 0.0
          %1408 = vmatpush1.msra.mxu0 %v1296
          %1409 = vmatprep.subr.mxu0 0.0
          %1410 = vmatpush1.msra.mxu0 %v1299
          %1411 = vmatprep.subr.mxu0 0.0
          %1412 = vmatpush1.msra.mxu0 %v1302
          %1413 = vmatprep.subr.mxu0 0.0
          %1414 = vmatpush1.msra.mxu0 %v1305
          %1415 = vmatprep.subr.mxu0 0.0
          %1416 = vmatpush1.msra.mxu0 %v1308
          %1417 = vmatprep.subr.mxu0 0.0
          %1418 = vmatpush1.msra.mxu0 %v1311
          %1419 = vmatprep.subr.mxu0 0.0
          %1420 = vmatpush1.msra.mxu0 %v1314
          %1421 = vmatprep.subr.mxu0 0.0
          %1422 = vmatpush1.msra.mxu0 %v1317
          %1423 = vmatprep.subr.mxu0 0.0
          %1424 = vmatpush1.msra.mxu0 %v1320
          %1425 = vmatprep.subr.mxu0 0.0
          %1426 = vmatpush1.msra.mxu0 %v1323
          %1427 = vmatprep.subr.mxu0 0.0
          %1428 = vmatpush1.msra.mxu0 0.0
          %1429 = vmatprep.subr.mxu0 0.0
          %1430 = vmatpush1.msra.mxu0 0.0
          %1431 = vmatprep.subr.mxu0 0.0
          %1432 = vmatpush1.msra.mxu0 0.0
          %1433 = vmatprep.subr.mxu0 0.0
          %1434 = vmatpush1.msra.mxu0 0.0
          %1435 = vmatprep.subr.mxu0 0.0
          %1436 = vmatpush1.msra.mxu0 0.0
          %1437 = vmatprep.subr.mxu0 0.0
          %1438 = vmatpush1.msra.mxu0 0.0
          %1439 = vmatprep.subr.mxu0 0.0
          %1440 = vmatpush1.msra.mxu0 0.0
          %1441 = vmatprep.subr.mxu0 0.0
          %1442 = vmatpush1.msra.mxu0 0.0
          %1443 = vmatprep.subr.mxu0 0.0
          %1444 = vmatpush1.msra.mxu0 0.0
          %1445 = vmatprep.subr.mxu0 0.0
          %1446 = vmatpush1.msra.mxu0 0.0
          %1447 = vmatprep.subr.mxu0 0.0
          %1448 = vmatpush1.msra.mxu0 0.0
          %1449 = vmatprep.subr.mxu0 0.0
          %1450 = vmatpush1.msra.mxu0 0.0
          %1451 = vmatprep.subr.mxu0 0.0
          %1452 = vmatpush1.msra.mxu0 0.0
          %1453 = vmatprep.subr.mxu0 0.0
          %1454 = vmatpush1.msra.mxu0 0.0
          %1455 = vmatprep.subr.mxu0 0.0
          %1456 = vmatpush1.msra.mxu0 0.0
          %1457 = vmatprep.subr.mxu0 0.0
          %1458 = vmatpush1.msra.mxu0 0.0
          %1459 = vmatprep.mubr.f32.mxu0 0.0
          %1460 = vmatmul.mubr.f32.gmra.mrb[0].mxu0 %v1268
          %v1461 = vpop.f32.mrb[0].mxu0
          %v1462 = vadd.f32 0.0, %v1461
          %v1463 = vpop.f32.mrb[0].mxu0
          %1464 = vdwg.mxu0
          %v1465 = vadd.f32 %v1273, %v1391
          %v1466 = vxor.u32 %v1465, 2147483648
          %v1467 = vmul.f32 %v1466, 1.442695
          %v1468 = vpow.pop %v1467
          %v1469 = vadd.f32 %v1468, 1.0
          %v1470 = vrcp.pop %v1469
          %v1471 = vmul.f32 1.0, %v1470
          %v1472 = vadd.f32 %v1274, %v1393
          %v1473 = vxor.u32 %v1472, 2147483648
          %v1474 = vmul.f32 %v1473, 1.442695
          %v1475 = vpow.pop %v1474
          %v1476 = vadd.f32 %v1475, 1.0
          %v1477 = vrcp.pop %v1476
          %v1478 = vmul.f32 1.0, %v1477
          %v1479 = vld [vmem:[%s339] sm:$0x1]
          %v1481 = vlaneseq
          %v1482 = vshrl.u32 %v1481, 7
          %v1483 = vsub.s32 0, %v1482
          %v1484 = vrot.slane %v1479, %v1483
          %v1486 = vadd.f32 %v1462, %v1484
          %v1487 = vmul.f32 %v1471, %v1486
          %v1488 = vadd.f32 %v1275, %v1487
          %v1489 = vtanh.pop %v1488
          %v1490 = vsub.f32 1.0, %v1478
          %v1491 = vmul.f32 %v1490, %v1489
          %v1492 = vmul.f32 %v1478, %v1268
          %v1493 = vadd.f32 %v1491, %v1492
          %vm1494 = vcmp.gt.s32.totalorder %v344, 4
          %v1495 = vsel %vm1494, 1, 0
          %1496 = vset.pattern.permute.xlu0 0
          %1497 = vperm.xlu0 %1496, %v1495
          %v1498 = vpop.permute.xlu0 %1497
          %vm1499 = vcmp.eq.s32.totalorder %v1498, 1
          %v1500 = vsel %vm1499, %v1493, %v1268
          %v1501 = vsel %vm1499, %v1493, 0.0
          %s1502 = scalar_lea.vmem [#allocation7], 32
          %1503 = vst [vmem:[%s1502] sm:$0xff] %v1501
          %s1504 = scalar_lea.vmem %s283, 120 [#allocation2]
          %v1505 = vld [vmem:[%s1504] sm:$0xff]
          %v1506 = vld [vmem:[%s1504 + $0x8] sm:$0xff]
          %v1507 = vld [vmem:[%s1504 + $0x10] sm:$0xff]
          %v1508 = vld [vmem:[%s292] sm:$0xff]
          %v1509 = vld [vmem:[%s292 + $0x8] sm:$0xff]
          %v1510 = vld [vmem:[%s292 + $0x10] sm:$0xff]
          %v1511 = vld [vmem:[%s292 + $0x18] sm:$0xff]
          %v1512 = vld [vmem:[%s292 + $0x20] sm:$0xff]
          %v1513 = vld [vmem:[%s292 + $0x28] sm:$0xff]
          %v1514 = vld [vmem:[%s292 + $0x30] sm:$0xff]
          %v1515 = vld [vmem:[%s292 + $0x38] sm:$0xff]
          %v1516 = vld [vmem:[%s292 + $0x40] sm:$0xff]
          %v1517 = vld [vmem:[%s292 + $0x48] sm:$0xff]
          %v1518 = vld [vmem:[%s292 + $0x50] sm:$0xff]
          %v1519 = vld [vmem:[%s292 + $0x58] sm:$0xff]
          %v1520 = vld [vmem:[%s292 + $0x60] sm:$0xff]
          %v1521 = vld [vmem:[%s292 + $0x68] sm:$0xff]
          %v1522 = vld [vmem:[%s292 + $0x70] sm:$0xff]
          %v1523 = vld [vmem:[%s292 + $0x78] sm:$0xff]
          %v1524 = vld [vmem:[%s292 + $0x80] sm:$0xff]
          %v1525 = vld [vmem:[%s292 + $0x88] sm:$0xff]
          %v1526 = vld [vmem:[%s292 + $0x90] sm:$0xff]
          %v1527 = vld [vmem:[%s292 + $0x98] sm:$0xff]
          %v1528 = vld [vmem:[%s292 + $0xa0] sm:$0xff]
          %v1529 = vld [vmem:[%s292 + $0xa8] sm:$0xff]
          %v1530 = vld [vmem:[%s292 + $0xb0] sm:$0xff]
          %v1531 = vld [vmem:[%s292 + $0xb8] sm:$0xff]
          %v1532 = vld [vmem:[%s292 + $0xc0] sm:$0xff]
          %v1533 = vld [vmem:[%s292 + $0xc8] sm:$0xff]
          %v1534 = vld [vmem:[%s292 + $0xd0] sm:$0xff]
          %v1535 = vld [vmem:[%s292 + $0xd8] sm:$0xff]
          %v1536 = vld [vmem:[%s292 + $0xe0] sm:$0xff]
          %v1537 = vld [vmem:[%s292 + $0xe8] sm:$0xff]
          %v1538 = vld [vmem:[%s292 + $0xf0] sm:$0xff]
          %v1539 = vld [vmem:[%s292 + $0xf8] sm:$0xff]
          %v1540 = vld [vmem:[%s292 + $0x100] sm:$0xff]
          %v1541 = vld [vmem:[%s292 + $0x108] sm:$0xff]
          %v1542 = vld [vmem:[%s292 + $0x110] sm:$0xff]
          %v1543 = vld [vmem:[%s292 + $0x118] sm:$0xff]
          %v1544 = vld [vmem:[%s292 + $0x120] sm:$0xff]
          %v1545 = vld [vmem:[%s292 + $0x128] sm:$0xff]
          %v1546 = vld [vmem:[%s292 + $0x130] sm:$0xff]
          %v1547 = vld [vmem:[%s292 + $0x138] sm:$0xff]
          %v1548 = vld [vmem:[%s292 + $0x140] sm:$0xff]
          %v1549 = vld [vmem:[%s292 + $0x148] sm:$0xff]
          %v1550 = vld [vmem:[%s292 + $0x150] sm:$0xff]
          %v1551 = vld [vmem:[%s292 + $0x158] sm:$0xff]
          %v1552 = vld [vmem:[%s292 + $0x160] sm:$0xff]
          %v1553 = vld [vmem:[%s292 + $0x168] sm:$0xff]
          %v1554 = vld [vmem:[%s292 + $0x170] sm:$0xff]
          %v1555 = vld [vmem:[%s292 + $0x178] sm:$0xff]
          %1556 = vmatprep.subr.mxu0 %v1509
          %1557 = vmatpush1.msra.mxu0 %v1508
          %1558 = vmatprep.subr.mxu0 %v1512
          %1559 = vmatpush1.msra.mxu0 %v1511
          %1560 = vmatprep.subr.mxu0 %v1515
          %1561 = vmatpush1.msra.mxu0 %v1514
          %1562 = vmatprep.subr.mxu0 %v1518
          %1563 = vmatpush1.msra.mxu0 %v1517
          %1564 = vmatprep.subr.mxu0 %v1521
          %1565 = vmatpush1.msra.mxu0 %v1520
          %1566 = vmatprep.subr.mxu0 %v1524
          %1567 = vmatpush1.msra.mxu0 %v1523
          %1568 = vmatprep.subr.mxu0 %v1527
          %1569 = vmatpush1.msra.mxu0 %v1526
          %1570 = vmatprep.subr.mxu0 %v1530
          %1571 = vmatpush1.msra.mxu0 %v1529
          %1572 = vmatprep.subr.mxu0 %v1533
          %1573 = vmatpush1.msra.mxu0 %v1532
          %1574 = vmatprep.subr.mxu0 %v1536
          %1575 = vmatpush1.msra.mxu0 %v1535
          %1576 = vmatprep.subr.mxu0 %v1539
          %1577 = vmatpush1.msra.mxu0 %v1538
          %1578 = vmatprep.subr.mxu0 %v1542
          %1579 = vmatpush1.msra.mxu0 %v1541
          %1580 = vmatprep.subr.mxu0 %v1545
          %1581 = vmatpush1.msra.mxu0 %v1544
          %1582 = vmatprep.subr.mxu0 %v1548
          %1583 = vmatpush1.msra.mxu0 %v1547
          %1584 = vmatprep.subr.mxu0 %v1551
          %1585 = vmatpush1.msra.mxu0 %v1550
          %1586 = vmatprep.subr.mxu0 %v1554
          %1587 = vmatpush1.msra.mxu0 %v1553
          %1588 = vmatprep.subr.mxu0 0.0
          %1589 = vmatpush1.msra.mxu0 0.0
          %1590 = vmatprep.subr.mxu0 0.0
          %1591 = vmatpush1.msra.mxu0 0.0
          %1592 = vmatprep.subr.mxu0 0.0
          %1593 = vmatpush1.msra.mxu0 0.0
          %1594 = vmatprep.subr.mxu0 0.0
          %1595 = vmatpush1.msra.mxu0 0.0
          %1596 = vmatprep.subr.mxu0 0.0
          %1597 = vmatpush1.msra.mxu0 0.0
          %1598 = vmatprep.subr.mxu0 0.0
          %1599 = vmatpush1.msra.mxu0 0.0
          %1600 = vmatprep.subr.mxu0 0.0
          %1601 = vmatpush1.msra.mxu0 0.0
          %1602 = vmatprep.subr.mxu0 0.0
          %1603 = vmatpush1.msra.mxu0 0.0
          %1604 = vmatprep.subr.mxu0 0.0
          %1605 = vmatpush1.msra.mxu0 0.0
          %1606 = vmatprep.subr.mxu0 0.0
          %1607 = vmatpush1.msra.mxu0 0.0
          %1608 = vmatprep.subr.mxu0 0.0
          %1609 = vmatpush1.msra.mxu0 0.0
          %1610 = vmatprep.subr.mxu0 0.0
          %1611 = vmatpush1.msra.mxu0 0.0
          %1612 = vmatprep.subr.mxu0 0.0
          %1613 = vmatpush1.msra.mxu0 0.0
          %1614 = vmatprep.subr.mxu0 0.0
          %1615 = vmatpush1.msra.mxu0 0.0
          %1616 = vmatprep.subr.mxu0 0.0
          %1617 = vmatpush1.msra.mxu0 0.0
          %1618 = vmatprep.subr.mxu0 0.0
          %1619 = vmatpush1.msra.mxu0 0.0
          %1620 = vmatprep.mubr.f32.mxu0 0.0
          %1621 = vmatmul.mubr.f32.gmra.mrb[0].mxu0 %v1500
          %v1622 = vpop.f32.mrb[0].mxu0
          %v1623 = vadd.f32 0.0, %v1622
          %v1624 = vpop.f32.mrb[0].mxu0
          %v1625 = vadd.f32 0.0, %v1624
          %1626 = vdwg.mxu0
          %1627 = vmatprep.subr.mxu0 0.0
          %1628 = vmatpush1.msra.mxu0 %v1510
          %1629 = vmatprep.subr.mxu0 0.0
          %1630 = vmatpush1.msra.mxu0 %v1513
          %1631 = vmatprep.subr.mxu0 0.0
          %1632 = vmatpush1.msra.mxu0 %v1516
          %1633 = vmatprep.subr.mxu0 0.0
          %1634 = vmatpush1.msra.mxu0 %v1519
          %1635 = vmatprep.subr.mxu0 0.0
          %1636 = vmatpush1.msra.mxu0 %v1522
          %1637 = vmatprep.subr.mxu0 0.0
          %1638 = vmatpush1.msra.mxu0 %v1525
          %1639 = vmatprep.subr.mxu0 0.0
          %1640 = vmatpush1.msra.mxu0 %v1528
          %1641 = vmatprep.subr.mxu0 0.0
          %1642 = vmatpush1.msra.mxu0 %v1531
          %1643 = vmatprep.subr.mxu0 0.0
          %1644 = vmatpush1.msra.mxu0 %v1534
          %1645 = vmatprep.subr.mxu0 0.0
          %1646 = vmatpush1.msra.mxu0 %v1537
          %1647 = vmatprep.subr.mxu0 0.0
          %1648 = vmatpush1.msra.mxu0 %v1540
          %1649 = vmatprep.subr.mxu0 0.0
          %1650 = vmatpush1.msra.mxu0 %v1543
          %1651 = vmatprep.subr.mxu0 0.0
          %1652 = vmatpush1.msra.mxu0 %v1546
          %1653 = vmatprep.subr.mxu0 0.0
          %1654 = vmatpush1.msra.mxu0 %v1549
          %1655 = vmatprep.subr.mxu0 0.0
          %1656 = vmatpush1.msra.mxu0 %v1552
          %1657 = vmatprep.subr.mxu0 0.0
          %1658 = vmatpush1.msra.mxu0 %v1555
          %1659 = vmatprep.subr.mxu0 0.0
          %1660 = vmatpush1.msra.mxu0 0.0
          %1661 = vmatprep.subr.mxu0 0.0
          %1662 = vmatpush1.msra.mxu0 0.0
          %1663 = vmatprep.subr.mxu0 0.0
          %1664 = vmatpush1.msra.mxu0 0.0
          %1665 = vmatprep.subr.mxu0 0.0
          %1666 = vmatpush1.msra.mxu0 0.0
          %1667 = vmatprep.subr.mxu0 0.0
          %1668 = vmatpush1.msra.mxu0 0.0
          %1669 = vmatprep.subr.mxu0 0.0
          %1670 = vmatpush1.msra.mxu0 0.0
          %1671 = vmatprep.subr.mxu0 0.0
          %1672 = vmatpush1.msra.mxu0 0.0
          %1673 = vmatprep.subr.mxu0 0.0
          %1674 = vmatpush1.msra.mxu0 0.0
          %1675 = vmatprep.subr.mxu0 0.0
          %1676 = vmatpush1.msra.mxu0 0.0
          %1677 = vmatprep.subr.mxu0 0.0
          %1678 = vmatpush1.msra.mxu0 0.0
          %1679 = vmatprep.subr.mxu0 0.0
          %1680 = vmatpush1.msra.mxu0 0.0
          %1681 = vmatprep.subr.mxu0 0.0
          %1682 = vmatpush1.msra.mxu0 0.0
          %1683 = vmatprep.subr.mxu0 0.0
          %1684 = vmatpush1.msra.mxu0 0.0
          %1685 = vmatprep.subr.mxu0 0.0
          %1686 = vmatpush1.msra.mxu0 0.0
          %1687 = vmatprep.subr.mxu0 0.0
          %1688 = vmatpush1.msra.mxu0 0.0
          %1689 = vmatprep.subr.mxu0 0.0
          %1690 = vmatpush1.msra.mxu0 0.0
          %1691 = vmatprep.mubr.f32.mxu0 0.0
          %1692 = vmatmul.mubr.f32.gmra.mrb[0].mxu0 %v1500
          %v1693 = vpop.f32.mrb[0].mxu0
          %v1694 = vadd.f32 0.0, %v1693
          %v1695 = vpop.f32.mrb[0].mxu0
          %1696 = vdwg.mxu0
          %v1697 = vadd.f32 %v1505, %v1623
          %v1698 = vxor.u32 %v1697, 2147483648
          %v1699 = vmul.f32 %v1698, 1.442695
          %v1700 = vpow.pop %v1699
          %v1701 = vadd.f32 %v1700, 1.0
          %v1702 = vrcp.pop %v1701
          %v1703 = vmul.f32 1.0, %v1702
          %v1704 = vadd.f32 %v1506, %v1625
          %v1705 = vxor.u32 %v1704, 2147483648
          %v1706 = vmul.f32 %v1705, 1.442695
          %v1707 = vpow.pop %v1706
          %v1708 = vadd.f32 %v1707, 1.0
          %v1709 = vrcp.pop %v1708
          %v1710 = vmul.f32 1.0, %v1709
          %v1711 = vld [vmem:[%s339] sm:$0x1]
          %v1713 = vlaneseq
          %v1714 = vshrl.u32 %v1713, 7
          %v1715 = vsub.s32 0, %v1714
          %v1716 = vrot.slane %v1711, %v1715
          %v1718 = vadd.f32 %v1694, %v1716
          %v1719 = vmul.f32 %v1703, %v1718
          %v1720 = vadd.f32 %v1507, %v1719
          %v1721 = vtanh.pop %v1720
          %v1722 = vsub.f32 1.0, %v1710
          %v1723 = vmul.f32 %v1722, %v1721
          %v1724 = vmul.f32 %v1710, %v1500
          %v1725 = vadd.f32 %v1723, %v1724
          %vm1726 = vcmp.gt.s32.totalorder %v344, 5
          %v1727 = vsel %vm1726, 1, 0
          %1728 = vset.pattern.permute.xlu0 0
          %1729 = vperm.xlu0 %1728, %v1727
          %v1730 = vpop.permute.xlu0 %1729
          %vm1731 = vcmp.eq.s32.totalorder %v1730, 1
          %v1732 = vsel %vm1731, %v1725, %v1500
          %v1733 = vsel %vm1731, %v1725, 0.0
          %s1734 = scalar_lea.vmem [#allocation7], 40
          %1735 = vst [vmem:[%s1734] sm:$0xff] %v1733
          %s1736 = scalar_lea.vmem %s283, 144 [#allocation2]
          %v1737 = vld [vmem:[%s1736] sm:$0xff]
          %v1738 = vld [vmem:[%s1736 + $0x8] sm:$0xff]
          %v1739 = vld [vmem:[%s1736 + $0x10] sm:$0xff]
          %v1740 = vld [vmem:[%s292] sm:$0xff]
          %v1741 = vld [vmem:[%s292 + $0x8] sm:$0xff]
          %v1742 = vld [vmem:[%s292 + $0x10] sm:$0xff]
          %v1743 = vld [vmem:[%s292 + $0x18] sm:$0xff]
          %v1744 = vld [vmem:[%s292 + $0x20] sm:$0xff]
          %v1745 = vld [vmem:[%s292 + $0x28] sm:$0xff]
          %v1746 = vld [vmem:[%s292 + $0x30] sm:$0xff]
          %v1747 = vld [vmem:[%s292 + $0x38] sm:$0xff]
          %v1748 = vld [vmem:[%s292 + $0x40] sm:$0xff]
          %v1749 = vld [vmem:[%s292 + $0x48] sm:$0xff]
          %v1750 = vld [vmem:[%s292 + $0x50] sm:$0xff]
          %v1751 = vld [vmem:[%s292 + $0x58] sm:$0xff]
          %v1752 = vld [vmem:[%s292 + $0x60] sm:$0xff]
          %v1753 = vld [vmem:[%s292 + $0x68] sm:$0xff]
          %v1754 = vld [vmem:[%s292 + $0x70] sm:$0xff]
          %v1755 = vld [vmem:[%s292 + $0x78] sm:$0xff]
          %v1756 = vld [vmem:[%s292 + $0x80] sm:$0xff]
          %v1757 = vld [vmem:[%s292 + $0x88] sm:$0xff]
          %v1758 = vld [vmem:[%s292 + $0x90] sm:$0xff]
          %v1759 = vld [vmem:[%s292 + $0x98] sm:$0xff]
          %v1760 = vld [vmem:[%s292 + $0xa0] sm:$0xff]
          %v1761 = vld [vmem:[%s292 + $0xa8] sm:$0xff]
          %v1762 = vld [vmem:[%s292 + $0xb0] sm:$0xff]
          %v1763 = vld [vmem:[%s292 + $0xb8] sm:$0xff]
          %v1764 = vld [vmem:[%s292 + $0xc0] sm:$0xff]
          %v1765 = vld [vmem:[%s292 + $0xc8] sm:$0xff]
          %v1766 = vld [vmem:[%s292 + $0xd0] sm:$0xff]
          %v1767 = vld [vmem:[%s292 + $0xd8] sm:$0xff]
          %v1768 = vld [vmem:[%s292 + $0xe0] sm:$0xff]
          %v1769 = vld [vmem:[%s292 + $0xe8] sm:$0xff]
          %v1770 = vld [vmem:[%s292 + $0xf0] sm:$0xff]
          %v1771 = vld [vmem:[%s292 + $0xf8] sm:$0xff]
          %v1772 = vld [vmem:[%s292 + $0x100] sm:$0xff]
          %v1773 = vld [vmem:[%s292 + $0x108] sm:$0xff]
          %v1774 = vld [vmem:[%s292 + $0x110] sm:$0xff]
          %v1775 = vld [vmem:[%s292 + $0x118] sm:$0xff]
          %v1776 = vld [vmem:[%s292 + $0x120] sm:$0xff]
          %v1777 = vld [vmem:[%s292 + $0x128] sm:$0xff]
          %v1778 = vld [vmem:[%s292 + $0x130] sm:$0xff]
          %v1779 = vld [vmem:[%s292 + $0x138] sm:$0xff]
          %v1780 = vld [vmem:[%s292 + $0x140] sm:$0xff]
          %v1781 = vld [vmem:[%s292 + $0x148] sm:$0xff]
          %v1782 = vld [vmem:[%s292 + $0x150] sm:$0xff]
          %v1783 = vld [vmem:[%s292 + $0x158] sm:$0xff]
          %v1784 = vld [vmem:[%s292 + $0x160] sm:$0xff]
          %v1785 = vld [vmem:[%s292 + $0x168] sm:$0xff]
          %v1786 = vld [vmem:[%s292 + $0x170] sm:$0xff]
          %v1787 = vld [vmem:[%s292 + $0x178] sm:$0xff]
          %1788 = vmatprep.subr.mxu0 %v1741
          %1789 = vmatpush1.msra.mxu0 %v1740
          %1790 = vmatprep.subr.mxu0 %v1744
          %1791 = vmatpush1.msra.mxu0 %v1743
          %1792 = vmatprep.subr.mxu0 %v1747
          %1793 = vmatpush1.msra.mxu0 %v1746
          %1794 = vmatprep.subr.mxu0 %v1750
          %1795 = vmatpush1.msra.mxu0 %v1749
          %1796 = vmatprep.subr.mxu0 %v1753
          %1797 = vmatpush1.msra.mxu0 %v1752
          %1798 = vmatprep.subr.mxu0 %v1756
          %1799 = vmatpush1.msra.mxu0 %v1755
          %1800 = vmatprep.subr.mxu0 %v1759
          %1801 = vmatpush1.msra.mxu0 %v1758
          %1802 = vmatprep.subr.mxu0 %v1762
          %1803 = vmatpush1.msra.mxu0 %v1761
          %1804 = vmatprep.subr.mxu0 %v1765
          %1805 = vmatpush1.msra.mxu0 %v1764
          %1806 = vmatprep.subr.mxu0 %v1768
          %1807 = vmatpush1.msra.mxu0 %v1767
          %1808 = vmatprep.subr.mxu0 %v1771
          %1809 = vmatpush1.msra.mxu0 %v1770
          %1810 = vmatprep.subr.mxu0 %v1774
          %1811 = vmatpush1.msra.mxu0 %v1773
          %1812 = vmatprep.subr.mxu0 %v1777
          %1813 = vmatpush1.msra.mxu0 %v1776
          %1814 = vmatprep.subr.mxu0 %v1780
          %1815 = vmatpush1.msra.mxu0 %v1779
          %1816 = vmatprep.subr.mxu0 %v1783
          %1817 = vmatpush1.msra.mxu0 %v1782
          %1818 = vmatprep.subr.mxu0 %v1786
          %1819 = vmatpush1.msra.mxu0 %v1785
          %1820 = vmatprep.subr.mxu0 0.0
          %1821 = vmatpush1.msra.mxu0 0.0
          %1822 = vmatprep.subr.mxu0 0.0
          %1823 = vmatpush1.msra.mxu0 0.0
          %1824 = vmatprep.subr.mxu0 0.0
          %1825 = vmatpush1.msra.mxu0 0.0
          %1826 = vmatprep.subr.mxu0 0.0
          %1827 = vmatpush1.msra.mxu0 0.0
          %1828 = vmatprep.subr.mxu0 0.0
          %1829 = vmatpush1.msra.mxu0 0.0
          %1830 = vmatprep.subr.mxu0 0.0
          %1831 = vmatpush1.msra.mxu0 0.0
          %1832 = vmatprep.subr.mxu0 0.0
          %1833 = vmatpush1.msra.mxu0 0.0
          %1834 = vmatprep.subr.mxu0 0.0
          %1835 = vmatpush1.msra.mxu0 0.0
          %1836 = vmatprep.subr.mxu0 0.0
          %1837 = vmatpush1.msra.mxu0 0.0
          %1838 = vmatprep.subr.mxu0 0.0
          %1839 = vmatpush1.msra.mxu0 0.0
          %1840 = vmatprep.subr.mxu0 0.0
          %1841 = vmatpush1.msra.mxu0 0.0
          %1842 = vmatprep.subr.mxu0 0.0
          %1843 = vmatpush1.msra.mxu0 0.0
          %1844 = vmatprep.subr.mxu0 0.0
          %1845 = vmatpush1.msra.mxu0 0.0
          %1846 = vmatprep.subr.mxu0 0.0
          %1847 = vmatpush1.msra.mxu0 0.0
          %1848 = vmatprep.subr.mxu0 0.0
          %1849 = vmatpush1.msra.mxu0 0.0
          %1850 = vmatprep.subr.mxu0 0.0
          %1851 = vmatpush1.msra.mxu0 0.0
          %1852 = vmatprep.mubr.f32.mxu0 0.0
          %1853 = vmatmul.mubr.f32.gmra.mrb[0].mxu0 %v1732
          %v1854 = vpop.f32.mrb[0].mxu0
          %v1855 = vadd.f32 0.0, %v1854
          %v1856 = vpop.f32.mrb[0].mxu0
          %v1857 = vadd.f32 0.0, %v1856
          %1858 = vdwg.mxu0
          %1859 = vmatprep.subr.mxu0 0.0
          %1860 = vmatpush1.msra.mxu0 %v1742
          %1861 = vmatprep.subr.mxu0 0.0
          %1862 = vmatpush1.msra.mxu0 %v1745
          %1863 = vmatprep.subr.mxu0 0.0
          %1864 = vmatpush1.msra.mxu0 %v1748
          %1865 = vmatprep.subr.mxu0 0.0
          %1866 = vmatpush1.msra.mxu0 %v1751
          %1867 = vmatprep.subr.mxu0 0.0
          %1868 = vmatpush1.msra.mxu0 %v1754
          %1869 = vmatprep.subr.mxu0 0.0
          %1870 = vmatpush1.msra.mxu0 %v1757
          %1871 = vmatprep.subr.mxu0 0.0
          %1872 = vmatpush1.msra.mxu0 %v1760
          %1873 = vmatprep.subr.mxu0 0.0
          %1874 = vmatpush1.msra.mxu0 %v1763
          %1875 = vmatprep.subr.mxu0 0.0
          %1876 = vmatpush1.msra.mxu0 %v1766
          %1877 = vmatprep.subr.mxu0 0.0
          %1878 = vmatpush1.msra.mxu0 %v1769
          %1879 = vmatprep.subr.mxu0 0.0
          %1880 = vmatpush1.msra.mxu0 %v1772
          %1881 = vmatprep.subr.mxu0 0.0
          %1882 = vmatpush1.msra.mxu0 %v1775
          %1883 = vmatprep.subr.mxu0 0.0
          %1884 = vmatpush1.msra.mxu0 %v1778
          %1885 = vmatprep.subr.mxu0 0.0
          %1886 = vmatpush1.msra.mxu0 %v1781
          %1887 = vmatprep.subr.mxu0 0.0
          %1888 = vmatpush1.msra.mxu0 %v1784
          %1889 = vmatprep.subr.mxu0 0.0
          %1890 = vmatpush1.msra.mxu0 %v1787
          %1891 = vmatprep.subr.mxu0 0.0
          %1892 = vmatpush1.msra.mxu0 0.0
          %1893 = vmatprep.subr.mxu0 0.0
          %1894 = vmatpush1.msra.mxu0 0.0
          %1895 = vmatprep.subr.mxu0 0.0
          %1896 = vmatpush1.msra.mxu0 0.0
          %1897 = vmatprep.subr.mxu0 0.0
          %1898 = vmatpush1.msra.mxu0 0.0
          %1899 = vmatprep.subr.mxu0 0.0
          %1900 = vmatpush1.msra.mxu0 0.0
          %1901 = vmatprep.subr.mxu0 0.0
          %1902 = vmatpush1.msra.mxu0 0.0
          %1903 = vmatprep.subr.mxu0 0.0
          %1904 = vmatpush1.msra.mxu0 0.0
          %1905 = vmatprep.subr.mxu0 0.0
          %1906 = vmatpush1.msra.mxu0 0.0
          %1907 = vmatprep.subr.mxu0 0.0
          %1908 = vmatpush1.msra.mxu0 0.0
          %1909 = vmatprep.subr.mxu0 0.0
          %1910 = vmatpush1.msra.mxu0 0.0
          %1911 = vmatprep.subr.mxu0 0.0
          %1912 = vmatpush1.msra.mxu0 0.0
          %1913 = vmatprep.subr.mxu0 0.0
          %1914 = vmatpush1.msra.mxu0 0.0
          %1915 = vmatprep.subr.mxu0 0.0
          %1916 = vmatpush1.msra.mxu0 0.0
          %1917 = vmatprep.subr.mxu0 0.0
          %1918 = vmatpush1.msra.mxu0 0.0
          %1919 = vmatprep.subr.mxu0 0.0
          %1920 = vmatpush1.msra.mxu0 0.0
          %1921 = vmatprep.subr.mxu0 0.0
          %1922 = vmatpush1.msra.mxu0 0.0
          %1923 = vmatprep.mubr.f32.mxu0 0.0
          %1924 = vmatmul.mubr.f32.gmra.mrb[0].mxu0 %v1732
          %v1925 = vpop.f32.mrb[0].mxu0
          %v1926 = vadd.f32 0.0, %v1925
          %v1927 = vpop.f32.mrb[0].mxu0
          %1928 = vdwg.mxu0
          %v1929 = vadd.f32 %v1737, %v1855
          %v1930 = vxor.u32 %v1929, 2147483648
          %v1931 = vmul.f32 %v1930, 1.442695
          %v1932 = vpow.pop %v1931
          %v1933 = vadd.f32 %v1932, 1.0
          %v1934 = vrcp.pop %v1933
          %v1935 = vmul.f32 1.0, %v1934
          %v1936 = vadd.f32 %v1738, %v1857
          %v1937 = vxor.u32 %v1936, 2147483648
          %v1938 = vmul.f32 %v1937, 1.442695
          %v1939 = vpow.pop %v1938
          %v1940 = vadd.f32 %v1939, 1.0
          %v1941 = vrcp.pop %v1940
          %v1942 = vmul.f32 1.0, %v1941
          %v1943 = vld [vmem:[%s339] sm:$0x1]
          %v1945 = vlaneseq
          %v1946 = vshrl.u32 %v1945, 7
          %v1947 = vsub.s32 0, %v1946
          %v1948 = vrot.slane %v1943, %v1947
          %v1950 = vadd.f32 %v1926, %v1948
          %v1951 = vmul.f32 %v1935, %v1950
          %v1952 = vadd.f32 %v1739, %v1951
          %v1953 = vtanh.pop %v1952
          %v1954 = vsub.f32 1.0, %v1942
          %v1955 = vmul.f32 %v1954, %v1953
          %v1956 = vmul.f32 %v1942, %v1732
          %v1957 = vadd.f32 %v1955, %v1956
          %vm1958 = vcmp.gt.s32.totalorder %v344, 6
          %v1959 = vsel %vm1958, 1, 0
          %1960 = vset.pattern.permute.xlu0 0
          %1961 = vperm.xlu0 %1960, %v1959
          %v1962 = vpop.permute.xlu0 %1961
          %vm1963 = vcmp.eq.s32.totalorder %v1962, 1
          %v1964 = vsel %vm1963, %v1957, %v1732
          %v1965 = vsel %vm1963, %v1957, 0.0
          %s1966 = scalar_lea.vmem [#allocation7], 48
          %1967 = vst [vmem:[%s1966] sm:$0xff] %v1965
          %s1968 = scalar_lea.vmem %s283, 168 [#allocation2]
          %v1969 = vld [vmem:[%s1968] sm:$0xff]
          %v1970 = vld [vmem:[%s1968 + $0x8] sm:$0xff]
          %v1971 = vld [vmem:[%s1968 + $0x10] sm:$0xff]
          %v1972 = vld [vmem:[%s292] sm:$0xff]
          %v1973 = vld [vmem:[%s292 + $0x8] sm:$0xff]
          %v1974 = vld [vmem:[%s292 + $0x10] sm:$0xff]
          %v1975 = vld [vmem:[%s292 + $0x18] sm:$0xff]
          %v1976 = vld [vmem:[%s292 + $0x20] sm:$0xff]
          %v1977 = vld [vmem:[%s292 + $0x28] sm:$0xff]
          %v1978 = vld [vmem:[%s292 + $0x30] sm:$0xff]
          %v1979 = vld [vmem:[%s292 + $0x38] sm:$0xff]
          %v1980 = vld [vmem:[%s292 + $0x40] sm:$0xff]
          %v1981 = vld [vmem:[%s292 + $0x48] sm:$0xff]
          %v1982 = vld [vmem:[%s292 + $0x50] sm:$0xff]
          %v1983 = vld [vmem:[%s292 + $0x58] sm:$0xff]
          %v1984 = vld [vmem:[%s292 + $0x60] sm:$0xff]
          %v1985 = vld [vmem:[%s292 + $0x68] sm:$0xff]
          %v1986 = vld [vmem:[%s292 + $0x70] sm:$0xff]
          %v1987 = vld [vmem:[%s292 + $0x78] sm:$0xff]
          %v1988 = vld [vmem:[%s292 + $0x80] sm:$0xff]
          %v1989 = vld [vmem:[%s292 + $0x88] sm:$0xff]
          %v1990 = vld [vmem:[%s292 + $0x90] sm:$0xff]
          %v1991 = vld [vmem:[%s292 + $0x98] sm:$0xff]
          %v1992 = vld [vmem:[%s292 + $0xa0] sm:$0xff]
          %v1993 = vld [vmem:[%s292 + $0xa8] sm:$0xff]
          %v1994 = vld [vmem:[%s292 + $0xb0] sm:$0xff]
          %v1995 = vld [vmem:[%s292 + $0xb8] sm:$0xff]
          %v1996 = vld [vmem:[%s292 + $0xc0] sm:$0xff]
          %v1997 = vld [vmem:[%s292 + $0xc8] sm:$0xff]
          %v1998 = vld [vmem:[%s292 + $0xd0] sm:$0xff]
          %v1999 = vld [vmem:[%s292 + $0xd8] sm:$0xff]
          %v2000 = vld [vmem:[%s292 + $0xe0] sm:$0xff]
          %v2001 = vld [vmem:[%s292 + $0xe8] sm:$0xff]
          %v2002 = vld [vmem:[%s292 + $0xf0] sm:$0xff]
          %v2003 = vld [vmem:[%s292 + $0xf8] sm:$0xff]
          %v2004 = vld [vmem:[%s292 + $0x100] sm:$0xff]
          %v2005 = vld [vmem:[%s292 + $0x108] sm:$0xff]
          %v2006 = vld [vmem:[%s292 + $0x110] sm:$0xff]
          %v2007 = vld [vmem:[%s292 + $0x118] sm:$0xff]
          %v2008 = vld [vmem:[%s292 + $0x120] sm:$0xff]
          %v2009 = vld [vmem:[%s292 + $0x128] sm:$0xff]
          %v2010 = vld [vmem:[%s292 + $0x130] sm:$0xff]
          %v2011 = vld [vmem:[%s292 + $0x138] sm:$0xff]
          %v2012 = vld [vmem:[%s292 + $0x140] sm:$0xff]
          %v2013 = vld [vmem:[%s292 + $0x148] sm:$0xff]
          %v2014 = vld [vmem:[%s292 + $0x150] sm:$0xff]
          %v2015 = vld [vmem:[%s292 + $0x158] sm:$0xff]
          %v2016 = vld [vmem:[%s292 + $0x160] sm:$0xff]
          %v2017 = vld [vmem:[%s292 + $0x168] sm:$0xff]
          %v2018 = vld [vmem:[%s292 + $0x170] sm:$0xff]
          %v2019 = vld [vmem:[%s292 + $0x178] sm:$0xff]
          %2020 = vmatprep.subr.mxu0 %v1973
          %2021 = vmatpush1.msra.mxu0 %v1972
          %2022 = vmatprep.subr.mxu0 %v1976
          %2023 = vmatpush1.msra.mxu0 %v1975
          %2024 = vmatprep.subr.mxu0 %v1979
          %2025 = vmatpush1.msra.mxu0 %v1978
          %2026 = vmatprep.subr.mxu0 %v1982
          %2027 = vmatpush1.msra.mxu0 %v1981
          %2028 = vmatprep.subr.mxu0 %v1985
          %2029 = vmatpush1.msra.mxu0 %v1984
          %2030 = vmatprep.subr.mxu0 %v1988
          %2031 = vmatpush1.msra.mxu0 %v1987
          %2032 = vmatprep.subr.mxu0 %v1991
          %2033 = vmatpush1.msra.mxu0 %v1990
          %2034 = vmatprep.subr.mxu0 %v1994
          %2035 = vmatpush1.msra.mxu0 %v1993
          %2036 = vmatprep.subr.mxu0 %v1997
          %2037 = vmatpush1.msra.mxu0 %v1996
          %2038 = vmatprep.subr.mxu0 %v2000
          %2039 = vmatpush1.msra.mxu0 %v1999
          %2040 = vmatprep.subr.mxu0 %v2003
          %2041 = vmatpush1.msra.mxu0 %v2002
          %2042 = vmatprep.subr.mxu0 %v2006
          %2043 = vmatpush1.msra.mxu0 %v2005
          %2044 = vmatprep.subr.mxu0 %v2009
          %2045 = vmatpush1.msra.mxu0 %v2008
          %2046 = vmatprep.subr.mxu0 %v2012
          %2047 = vmatpush1.msra.mxu0 %v2011
          %2048 = vmatprep.subr.mxu0 %v2015
          %2049 = vmatpush1.msra.mxu0 %v2014
          %2050 = vmatprep.subr.mxu0 %v2018
          %2051 = vmatpush1.msra.mxu0 %v2017
          %2052 = vmatprep.subr.mxu0 0.0
          %2053 = vmatpush1.msra.mxu0 0.0
          %2054 = vmatprep.subr.mxu0 0.0
          %2055 = vmatpush1.msra.mxu0 0.0
          %2056 = vmatprep.subr.mxu0 0.0
          %2057 = vmatpush1.msra.mxu0 0.0
          %2058 = vmatprep.subr.mxu0 0.0
          %2059 = vmatpush1.msra.mxu0 0.0
          %2060 = vmatprep.subr.mxu0 0.0
          %2061 = vmatpush1.msra.mxu0 0.0
          %2062 = vmatprep.subr.mxu0 0.0
          %2063 = vmatpush1.msra.mxu0 0.0
          %2064 = vmatprep.subr.mxu0 0.0
          %2065 = vmatpush1.msra.mxu0 0.0
          %2066 = vmatprep.subr.mxu0 0.0
          %2067 = vmatpush1.msra.mxu0 0.0
          %2068 = vmatprep.subr.mxu0 0.0
          %2069 = vmatpush1.msra.mxu0 0.0
          %2070 = vmatprep.subr.mxu0 0.0
          %2071 = vmatpush1.msra.mxu0 0.0
          %2072 = vmatprep.subr.mxu0 0.0
          %2073 = vmatpush1.msra.mxu0 0.0
          %2074 = vmatprep.subr.mxu0 0.0
          %2075 = vmatpush1.msra.mxu0 0.0
          %2076 = vmatprep.subr.mxu0 0.0
          %2077 = vmatpush1.msra.mxu0 0.0
          %2078 = vmatprep.subr.mxu0 0.0
          %2079 = vmatpush1.msra.mxu0 0.0
          %2080 = vmatprep.subr.mxu0 0.0
          %2081 = vmatpush1.msra.mxu0 0.0
          %2082 = vmatprep.subr.mxu0 0.0
          %2083 = vmatpush1.msra.mxu0 0.0
          %2084 = vmatprep.mubr.f32.mxu0 0.0
          %2085 = vmatmul.mubr.f32.gmra.mrb[0].mxu0 %v1964
          %v2086 = vpop.f32.mrb[0].mxu0
          %v2087 = vadd.f32 0.0, %v2086
          %v2088 = vpop.f32.mrb[0].mxu0
          %v2089 = vadd.f32 0.0, %v2088
          %2090 = vdwg.mxu0
          %2091 = vmatprep.subr.mxu0 0.0
          %2092 = vmatpush1.msra.mxu0 %v1974
          %2093 = vmatprep.subr.mxu0 0.0
          %2094 = vmatpush1.msra.mxu0 %v1977
          %2095 = vmatprep.subr.mxu0 0.0
          %2096 = vmatpush1.msra.mxu0 %v1980
          %2097 = vmatprep.subr.mxu0 0.0
          %2098 = vmatpush1.msra.mxu0 %v1983
          %2099 = vmatprep.subr.mxu0 0.0
          %2100 = vmatpush1.msra.mxu0 %v1986
          %2101 = vmatprep.subr.mxu0 0.0
          %2102 = vmatpush1.msra.mxu0 %v1989
          %2103 = vmatprep.subr.mxu0 0.0
          %2104 = vmatpush1.msra.mxu0 %v1992
          %2105 = vmatprep.subr.mxu0 0.0
          %2106 = vmatpush1.msra.mxu0 %v1995
          %2107 = vmatprep.subr.mxu0 0.0
          %2108 = vmatpush1.msra.mxu0 %v1998
          %2109 = vmatprep.subr.mxu0 0.0
          %2110 = vmatpush1.msra.mxu0 %v2001
          %2111 = vmatprep.subr.mxu0 0.0
          %2112 = vmatpush1.msra.mxu0 %v2004
          %2113 = vmatprep.subr.mxu0 0.0
          %2114 = vmatpush1.msra.mxu0 %v2007
          %2115 = vmatprep.subr.mxu0 0.0
          %2116 = vmatpush1.msra.mxu0 %v2010
          %2117 = vmatprep.subr.mxu0 0.0
          %2118 = vmatpush1.msra.mxu0 %v2013
          %2119 = vmatprep.subr.mxu0 0.0
          %2120 = vmatpush1.msra.mxu0 %v2016
          %2121 = vmatprep.subr.mxu0 0.0
          %2122 = vmatpush1.msra.mxu0 %v2019
          %2123 = vmatprep.subr.mxu0 0.0
          %2124 = vmatpush1.msra.mxu0 0.0
          %2125 = vmatprep.subr.mxu0 0.0
          %2126 = vmatpush1.msra.mxu0 0.0
          %2127 = vmatprep.subr.mxu0 0.0
          %2128 = vmatpush1.msra.mxu0 0.0
          %2129 = vmatprep.subr.mxu0 0.0
          %2130 = vmatpush1.msra.mxu0 0.0
          %2131 = vmatprep.subr.mxu0 0.0
          %2132 = vmatpush1.msra.mxu0 0.0
          %2133 = vmatprep.subr.mxu0 0.0
          %2134 = vmatpush1.msra.mxu0 0.0
          %2135 = vmatprep.subr.mxu0 0.0
          %2136 = vmatpush1.msra.mxu0 0.0
          %2137 = vmatprep.subr.mxu0 0.0
          %2138 = vmatpush1.msra.mxu0 0.0
          %2139 = vmatprep.subr.mxu0 0.0
          %2140 = vmatpush1.msra.mxu0 0.0
          %2141 = vmatprep.subr.mxu0 0.0
          %2142 = vmatpush1.msra.mxu0 0.0
          %2143 = vmatprep.subr.mxu0 0.0
          %2144 = vmatpush1.msra.mxu0 0.0
          %2145 = vmatprep.subr.mxu0 0.0
          %2146 = vmatpush1.msra.mxu0 0.0
          %2147 = vmatprep.subr.mxu0 0.0
          %2148 = vmatpush1.msra.mxu0 0.0
          %2149 = vmatprep.subr.mxu0 0.0
          %2150 = vmatpush1.msra.mxu0 0.0
          %2151 = vmatprep.subr.mxu0 0.0
          %2152 = vmatpush1.msra.mxu0 0.0
          %2153 = vmatprep.subr.mxu0 0.0
          %2154 = vmatpush1.msra.mxu0 0.0
          %2155 = vmatprep.mubr.f32.mxu0 0.0
          %2156 = vmatmul.mubr.f32.gmra.mrb[0].mxu0 %v1964
          %v2157 = vpop.f32.mrb[0].mxu0
          %v2158 = vadd.f32 0.0, %v2157
          %v2159 = vpop.f32.mrb[0].mxu0
          %2160 = vdwg.mxu0
          %v2161 = vadd.f32 %v1969, %v2087
          %v2162 = vxor.u32 %v2161, 2147483648
          %v2163 = vmul.f32 %v2162, 1.442695
          %v2164 = vpow.pop %v2163
          %v2165 = vadd.f32 %v2164, 1.0
          %v2166 = vrcp.pop %v2165
          %v2167 = vmul.f32 1.0, %v2166
          %v2168 = vadd.f32 %v1970, %v2089
          %v2169 = vxor.u32 %v2168, 2147483648
          %v2170 = vmul.f32 %v2169, 1.442695
          %v2171 = vpow.pop %v2170
          %v2172 = vadd.f32 %v2171, 1.0
          %v2173 = vrcp.pop %v2172
          %v2174 = vmul.f32 1.0, %v2173
          %v2175 = vld [vmem:[%s339] sm:$0x1]
          %v2177 = vlaneseq
          %v2178 = vshrl.u32 %v2177, 7
          %v2179 = vsub.s32 0, %v2178
          %v2180 = vrot.slane %v2175, %v2179
          %v2182 = vadd.f32 %v2158, %v2180
          %v2183 = vmul.f32 %v2167, %v2182
          %v2184 = vadd.f32 %v1971, %v2183
          %v2185 = vtanh.pop %v2184
          %v2186 = vsub.f32 1.0, %v2174
          %v2187 = vmul.f32 %v2186, %v2185
          %v2188 = vmul.f32 %v2174, %v1964
          %v2189 = vadd.f32 %v2187, %v2188
          %vm2190 = vcmp.gt.s32.totalorder %v344, 7
          %v2191 = vsel %vm2190, 1, 0
          %2192 = vset.pattern.permute.xlu0 0
          %2193 = vperm.xlu0 %2192, %v2191
          %v2194 = vpop.permute.xlu0 %2193
          %vm2195 = vcmp.eq.s32.totalorder %v2194, 1
          %v2196 = vsel %vm2195, %v2189, %v1964
          %v2197 = vsel %vm2195, %v2189, 0.0
          %s2198 = scalar_lea.vmem [#allocation7], 56
          %2199 = vst [vmem:[%s2198] sm:$0xff] %v2197
          %2200 = vst [vmem:[%s332] sm:$0xff] %v2196
        $region52: #{tpu_custom_call.1} parent=39 // pred_fallthru
          _
        %p2201 = scmp.eq.s32.totalorder %s28, 1
        // Predicated region
        $region53: #{tpu_custom_call.1} parent=39 // pred_check
          %p2202 = pneg %p2201
        $region54: #{tpu_custom_call.1} parent=39 // pred_check_branch
          %2204 = sbr.rel (%p2202) target = $region56
        $region55: #{tpu_custom_call.1} parent=39 // pred_region
          %v2205 = vld [vmem:[%s0] sm:$0xff]
          %v2206 = vld [vmem:[%s336] sm:$0xff]
          %s2207 = scalar_lea.vmem %s283, 168 [#allocation2]
          %v2208 = vld [vmem:[%s2207] sm:$0xff]
          %v2209 = vld [vmem:[%s2207 + $0x8] sm:$0xff]
          %v2210 = vld [vmem:[%s2207 + $0x10] sm:$0xff]
          %v2211 = vld [vmem:[%s292] sm:$0xff]
          %v2212 = vld [vmem:[%s292 + $0x8] sm:$0xff]
          %v2213 = vld [vmem:[%s292 + $0x10] sm:$0xff]
          %v2214 = vld [vmem:[%s292 + $0x18] sm:$0xff]
          %v2215 = vld [vmem:[%s292 + $0x20] sm:$0xff]
          %v2216 = vld [vmem:[%s292 + $0x28] sm:$0xff]
          %v2217 = vld [vmem:[%s292 + $0x30] sm:$0xff]
          %v2218 = vld [vmem:[%s292 + $0x38] sm:$0xff]
          %v2219 = vld [vmem:[%s292 + $0x40] sm:$0xff]
          %v2220 = vld [vmem:[%s292 + $0x48] sm:$0xff]
          %v2221 = vld [vmem:[%s292 + $0x50] sm:$0xff]
          %v2222 = vld [vmem:[%s292 + $0x58] sm:$0xff]
          %v2223 = vld [vmem:[%s292 + $0x60] sm:$0xff]
          %v2224 = vld [vmem:[%s292 + $0x68] sm:$0xff]
          %v2225 = vld [vmem:[%s292 + $0x70] sm:$0xff]
          %v2226 = vld [vmem:[%s292 + $0x78] sm:$0xff]
          %v2227 = vld [vmem:[%s292 + $0x80] sm:$0xff]
          %v2228 = vld [vmem:[%s292 + $0x88] sm:$0xff]
          %v2229 = vld [vmem:[%s292 + $0x90] sm:$0xff]
          %v2230 = vld [vmem:[%s292 + $0x98] sm:$0xff]
          %v2231 = vld [vmem:[%s292 + $0xa0] sm:$0xff]
          %v2232 = vld [vmem:[%s292 + $0xa8] sm:$0xff]
          %v2233 = vld [vmem:[%s292 + $0xb0] sm:$0xff]
          %v2234 = vld [vmem:[%s292 + $0xb8] sm:$0xff]
          %v2235 = vld [vmem:[%s292 + $0xc0] sm:$0xff]
          %v2236 = vld [vmem:[%s292 + $0xc8] sm:$0xff]
          %v2237 = vld [vmem:[%s292 + $0xd0] sm:$0xff]
          %v2238 = vld [vmem:[%s292 + $0xd8] sm:$0xff]
          %v2239 = vld [vmem:[%s292 + $0xe0] sm:$0xff]
          %v2240 = vld [vmem:[%s292 + $0xe8] sm:$0xff]
          %v2241 = vld [vmem:[%s292 + $0xf0] sm:$0xff]
          %v2242 = vld [vmem:[%s292 + $0xf8] sm:$0xff]
          %v2243 = vld [vmem:[%s292 + $0x100] sm:$0xff]
          %v2244 = vld [vmem:[%s292 + $0x108] sm:$0xff]
          %v2245 = vld [vmem:[%s292 + $0x110] sm:$0xff]
          %v2246 = vld [vmem:[%s292 + $0x118] sm:$0xff]
          %v2247 = vld [vmem:[%s292 + $0x120] sm:$0xff]
          %v2248 = vld [vmem:[%s292 + $0x128] sm:$0xff]
          %v2249 = vld [vmem:[%s292 + $0x130] sm:$0xff]
          %v2250 = vld [vmem:[%s292 + $0x138] sm:$0xff]
          %v2251 = vld [vmem:[%s292 + $0x140] sm:$0xff]
          %v2252 = vld [vmem:[%s292 + $0x148] sm:$0xff]
          %v2253 = vld [vmem:[%s292 + $0x150] sm:$0xff]
          %v2254 = vld [vmem:[%s292 + $0x158] sm:$0xff]
          %v2255 = vld [vmem:[%s292 + $0x160] sm:$0xff]
          %v2256 = vld [vmem:[%s292 + $0x168] sm:$0xff]
          %v2257 = vld [vmem:[%s292 + $0x170] sm:$0xff]
          %v2258 = vld [vmem:[%s292 + $0x178] sm:$0xff]
          %2259 = vmatprep.subr.mxu0 %v2212
          %2260 = vmatpush1.msra.mxu0 %v2211
          %2261 = vmatprep.subr.mxu0 %v2215
          %2262 = vmatpush1.msra.mxu0 %v2214
          %2263 = vmatprep.subr.mxu0 %v2218
          %2264 = vmatpush1.msra.mxu0 %v2217
          %2265 = vmatprep.subr.mxu0 %v2221
          %2266 = vmatpush1.msra.mxu0 %v2220
          %2267 = vmatprep.subr.mxu0 %v2224
          %2268 = vmatpush1.msra.mxu0 %v2223
          %2269 = vmatprep.subr.mxu0 %v2227
          %2270 = vmatpush1.msra.mxu0 %v2226
          %2271 = vmatprep.subr.mxu0 %v2230
          %2272 = vmatpush1.msra.mxu0 %v2229
          %2273 = vmatprep.subr.mxu0 %v2233
          %2274 = vmatpush1.msra.mxu0 %v2232
          %2275 = vmatprep.subr.mxu0 %v2236
          %2276 = vmatpush1.msra.mxu0 %v2235
          %2277 = vmatprep.subr.mxu0 %v2239
          %2278 = vmatpush1.msra.mxu0 %v2238
          %2279 = vmatprep.subr.mxu0 %v2242
          %2280 = vmatpush1.msra.mxu0 %v2241
          %2281 = vmatprep.subr.mxu0 %v2245
          %2282 = vmatpush1.msra.mxu0 %v2244
          %2283 = vmatprep.subr.mxu0 %v2248
          %2284 = vmatpush1.msra.mxu0 %v2247
          %2285 = vmatprep.subr.mxu0 %v2251
          %2286 = vmatpush1.msra.mxu0 %v2250
          %2287 = vmatprep.subr.mxu0 %v2254
          %2288 = vmatpush1.msra.mxu0 %v2253
          %2289 = vmatprep.subr.mxu0 %v2257
          %2290 = vmatpush1.msra.mxu0 %v2256
          %2291 = vmatprep.subr.mxu0 0.0
          %2292 = vmatpush1.msra.mxu0 0.0
          %2293 = vmatprep.subr.mxu0 0.0
          %2294 = vmatpush1.msra.mxu0 0.0
          %2295 = vmatprep.subr.mxu0 0.0
          %2296 = vmatpush1.msra.mxu0 0.0
          %2297 = vmatprep.subr.mxu0 0.0
          %2298 = vmatpush1.msra.mxu0 0.0
          %2299 = vmatprep.subr.mxu0 0.0
          %2300 = vmatpush1.msra.mxu0 0.0
          %2301 = vmatprep.subr.mxu0 0.0
          %2302 = vmatpush1.msra.mxu0 0.0
          %2303 = vmatprep.subr.mxu0 0.0
          %2304 = vmatpush1.msra.mxu0 0.0
          %2305 = vmatprep.subr.mxu0 0.0
          %2306 = vmatpush1.msra.mxu0 0.0
          %2307 = vmatprep.subr.mxu0 0.0
          %2308 = vmatpush1.msra.mxu0 0.0
          %2309 = vmatprep.subr.mxu0 0.0
          %2310 = vmatpush1.msra.mxu0 0.0
          %2311 = vmatprep.subr.mxu0 0.0
          %2312 = vmatpush1.msra.mxu0 0.0
          %2313 = vmatprep.subr.mxu0 0.0
          %2314 = vmatpush1.msra.mxu0 0.0
          %2315 = vmatprep.subr.mxu0 0.0
          %2316 = vmatpush1.msra.mxu0 0.0
          %2317 = vmatprep.subr.mxu0 0.0
          %2318 = vmatpush1.msra.mxu0 0.0
          %2319 = vmatprep.subr.mxu0 0.0
          %2320 = vmatpush1.msra.mxu0 0.0
          %2321 = vmatprep.subr.mxu0 0.0
          %2322 = vmatpush1.msra.mxu0 0.0
          %2323 = vmatprep.mubr.f32.mxu0 0.0
          %2324 = vmatmul.mubr.f32.gmra.mrb[0].mxu0 %v2206
          %v2325 = vpop.f32.mrb[0].mxu0
          %v2326 = vadd.f32 0.0, %v2325
          %v2327 = vpop.f32.mrb[0].mxu0
          %v2328 = vadd.f32 0.0, %v2327
          %2329 = vdwg.mxu0
          %2330 = vmatprep.subr.mxu0 0.0
          %2331 = vmatpush1.msra.mxu0 %v2213
          %2332 = vmatprep.subr.mxu0 0.0
          %2333 = vmatpush1.msra.mxu0 %v2216
          %2334 = vmatprep.subr.mxu0 0.0
          %2335 = vmatpush1.msra.mxu0 %v2219
          %2336 = vmatprep.subr.mxu0 0.0
          %2337 = vmatpush1.msra.mxu0 %v2222
          %2338 = vmatprep.subr.mxu0 0.0
          %2339 = vmatpush1.msra.mxu0 %v2225
          %2340 = vmatprep.subr.mxu0 0.0
          %2341 = vmatpush1.msra.mxu0 %v2228
          %2342 = vmatprep.subr.mxu0 0.0
          %2343 = vmatpush1.msra.mxu0 %v2231
          %2344 = vmatprep.subr.mxu0 0.0
          %2345 = vmatpush1.msra.mxu0 %v2234
          %2346 = vmatprep.subr.mxu0 0.0
          %2347 = vmatpush1.msra.mxu0 %v2237
          %2348 = vmatprep.subr.mxu0 0.0
          %2349 = vmatpush1.msra.mxu0 %v2240
          %2350 = vmatprep.subr.mxu0 0.0
          %2351 = vmatpush1.msra.mxu0 %v2243
          %2352 = vmatprep.subr.mxu0 0.0
          %2353 = vmatpush1.msra.mxu0 %v2246
          %2354 = vmatprep.subr.mxu0 0.0
          %2355 = vmatpush1.msra.mxu0 %v2249
          %2356 = vmatprep.subr.mxu0 0.0
          %2357 = vmatpush1.msra.mxu0 %v2252
          %2358 = vmatprep.subr.mxu0 0.0
          %2359 = vmatpush1.msra.mxu0 %v2255
          %2360 = vmatprep.subr.mxu0 0.0
          %2361 = vmatpush1.msra.mxu0 %v2258
          %2362 = vmatprep.subr.mxu0 0.0
          %2363 = vmatpush1.msra.mxu0 0.0
          %2364 = vmatprep.subr.mxu0 0.0
          %2365 = vmatpush1.msra.mxu0 0.0
          %2366 = vmatprep.subr.mxu0 0.0
          %2367 = vmatpush1.msra.mxu0 0.0
          %2368 = vmatprep.subr.mxu0 0.0
          %2369 = vmatpush1.msra.mxu0 0.0
          %2370 = vmatprep.subr.mxu0 0.0
          %2371 = vmatpush1.msra.mxu0 0.0
          %2372 = vmatprep.subr.mxu0 0.0
          %2373 = vmatpush1.msra.mxu0 0.0
          %2374 = vmatprep.subr.mxu0 0.0
          %2375 = vmatpush1.msra.mxu0 0.0
          %2376 = vmatprep.subr.mxu0 0.0
          %2377 = vmatpush1.msra.mxu0 0.0
          %2378 = vmatprep.subr.mxu0 0.0
          %2379 = vmatpush1.msra.mxu0 0.0
          %2380 = vmatprep.subr.mxu0 0.0
          %2381 = vmatpush1.msra.mxu0 0.0
          %2382 = vmatprep.subr.mxu0 0.0
          %2383 = vmatpush1.msra.mxu0 0.0
          %2384 = vmatprep.subr.mxu0 0.0
          %2385 = vmatpush1.msra.mxu0 0.0
          %2386 = vmatprep.subr.mxu0 0.0
          %2387 = vmatpush1.msra.mxu0 0.0
          %2388 = vmatprep.subr.mxu0 0.0
          %2389 = vmatpush1.msra.mxu0 0.0
          %2390 = vmatprep.subr.mxu0 0.0
          %2391 = vmatpush1.msra.mxu0 0.0
          %2392 = vmatprep.subr.mxu0 0.0
          %2393 = vmatpush1.msra.mxu0 0.0
          %2394 = vmatprep.mubr.f32.mxu0 0.0
          %2395 = vmatmul.mubr.f32.gmra.mrb[0].mxu0 %v2206
          %v2396 = vpop.f32.mrb[0].mxu0
          %v2397 = vadd.f32 0.0, %v2396
          %v2398 = vpop.f32.mrb[0].mxu0
          %2399 = vdwg.mxu0
          %v2400 = vadd.f32 %v2208, %v2326
          %v2401 = vxor.u32 %v2400, 2147483648
          %v2402 = vmul.f32 %v2401, 1.442695
          %v2403 = vpow.pop %v2402
          %v2404 = vadd.f32 %v2403, 1.0
          %v2405 = vrcp.pop %v2404
          %v2406 = vmul.f32 1.0, %v2405
          %v2407 = vadd.f32 %v2209, %v2328
          %v2408 = vxor.u32 %v2407, 2147483648
          %v2409 = vmul.f32 %v2408, 1.442695
          %v2410 = vpow.pop %v2409
          %v2411 = vadd.f32 %v2410, 1.0
          %v2412 = vrcp.pop %v2411
          %v2413 = vmul.f32 1.0, %v2412
          %v2414 = vld [vmem:[%s339] sm:$0x1]
          %v2416 = vlaneseq
          %v2417 = vshrl.u32 %v2416, 7
          %v2418 = vsub.s32 0, %v2417
          %v2419 = vrot.slane %v2414, %v2418
          %v2421 = vadd.f32 %v2397, %v2419
          %v2422 = vmul.f32 %v2406, %v2421
          %v2423 = vadd.f32 %v2210, %v2422
          %v2424 = vtanh.pop %v2423
          %v2425 = vsub.f32 1.0, %v2413
          %v2426 = vmul.f32 %v2425, %v2424
          %v2427 = vmul.f32 %v2413, %v2206
          %v2428 = vadd.f32 %v2426, %v2427
          %vm2429 = vcmp.gt.s32.totalorder %v2205, 7
          %v2430 = vsel %vm2429, 1, 0
          %2431 = vset.pattern.permute.xlu0 0
          %2432 = vperm.xlu0 %2431, %v2430
          %v2433 = vpop.permute.xlu0 %2432
          %vm2434 = vcmp.eq.s32.totalorder %v2433, 1
          %v2435 = vsel %vm2434, %v2428, %v2206
          %v2436 = vsel %vm2434, %v2428, 0.0
          %s2437 = scalar_lea.vmem [#allocation7], 56
          %v2438 = vld [vmem:[%s2437] sm:$0xff]
          %v2439 = vadd.f32 %v2438, %v2436
          %2440 = vst [vmem:[%s2437] sm:$0xff] %v2439
          %s2441 = scalar_lea.vmem %s283, 144 [#allocation2]
          %v2442 = vld [vmem:[%s2441] sm:$0xff]
          %v2443 = vld [vmem:[%s2441 + $0x8] sm:$0xff]
          %v2444 = vld [vmem:[%s2441 + $0x10] sm:$0xff]
          %v2445 = vld [vmem:[%s292] sm:$0xff]
          %v2446 = vld [vmem:[%s292 + $0x8] sm:$0xff]
          %v2447 = vld [vmem:[%s292 + $0x10] sm:$0xff]
          %v2448 = vld [vmem:[%s292 + $0x18] sm:$0xff]
          %v2449 = vld [vmem:[%s292 + $0x20] sm:$0xff]
          %v2450 = vld [vmem:[%s292 + $0x28] sm:$0xff]
          %v2451 = vld [vmem:[%s292 + $0x30] sm:$0xff]
          %v2452 = vld [vmem:[%s292 + $0x38] sm:$0xff]
          %v2453 = vld [vmem:[%s292 + $0x40] sm:$0xff]
          %v2454 = vld [vmem:[%s292 + $0x48] sm:$0xff]
          %v2455 = vld [vmem:[%s292 + $0x50] sm:$0xff]
          %v2456 = vld [vmem:[%s292 + $0x58] sm:$0xff]
          %v2457 = vld [vmem:[%s292 + $0x60] sm:$0xff]
          %v2458 = vld [vmem:[%s292 + $0x68] sm:$0xff]
          %v2459 = vld [vmem:[%s292 + $0x70] sm:$0xff]
          %v2460 = vld [vmem:[%s292 + $0x78] sm:$0xff]
          %v2461 = vld [vmem:[%s292 + $0x80] sm:$0xff]
          %v2462 = vld [vmem:[%s292 + $0x88] sm:$0xff]
          %v2463 = vld [vmem:[%s292 + $0x90] sm:$0xff]
          %v2464 = vld [vmem:[%s292 + $0x98] sm:$0xff]
          %v2465 = vld [vmem:[%s292 + $0xa0] sm:$0xff]
          %v2466 = vld [vmem:[%s292 + $0xa8] sm:$0xff]
          %v2467 = vld [vmem:[%s292 + $0xb0] sm:$0xff]
          %v2468 = vld [vmem:[%s292 + $0xb8] sm:$0xff]
          %v2469 = vld [vmem:[%s292 + $0xc0] sm:$0xff]
          %v2470 = vld [vmem:[%s292 + $0xc8] sm:$0xff]
          %v2471 = vld [vmem:[%s292 + $0xd0] sm:$0xff]
          %v2472 = vld [vmem:[%s292 + $0xd8] sm:$0xff]
          %v2473 = vld [vmem:[%s292 + $0xe0] sm:$0xff]
          %v2474 = vld [vmem:[%s292 + $0xe8] sm:$0xff]
          %v2475 = vld [vmem:[%s292 + $0xf0] sm:$0xff]
          %v2476 = vld [vmem:[%s292 + $0xf8] sm:$0xff]
          %v2477 = vld [vmem:[%s292 + $0x100] sm:$0xff]
          %v2478 = vld [vmem:[%s292 + $0x108] sm:$0xff]
          %v2479 = vld [vmem:[%s292 + $0x110] sm:$0xff]
          %v2480 = vld [vmem:[%s292 + $0x118] sm:$0xff]
          %v2481 = vld [vmem:[%s292 + $0x120] sm:$0xff]
          %v2482 = vld [vmem:[%s292 + $0x128] sm:$0xff]
          %v2483 = vld [vmem:[%s292 + $0x130] sm:$0xff]
          %v2484 = vld [vmem:[%s292 + $0x138] sm:$0xff]
          %v2485 = vld [vmem:[%s292 + $0x140] sm:$0xff]
          %v2486 = vld [vmem:[%s292 + $0x148] sm:$0xff]
          %v2487 = vld [vmem:[%s292 + $0x150] sm:$0xff]
          %v2488 = vld [vmem:[%s292 + $0x158] sm:$0xff]
          %v2489 = vld [vmem:[%s292 + $0x160] sm:$0xff]
          %v2490 = vld [vmem:[%s292 + $0x168] sm:$0xff]
          %v2491 = vld [vmem:[%s292 + $0x170] sm:$0xff]
          %v2492 = vld [vmem:[%s292 + $0x178] sm:$0xff]
          %2493 = vmatprep.subr.mxu0 %v2446
          %2494 = vmatpush1.msra.mxu0 %v2445
          %2495 = vmatprep.subr.mxu0 %v2449
          %2496 = vmatpush1.msra.mxu0 %v2448
          %2497 = vmatprep.subr.mxu0 %v2452
          %2498 = vmatpush1.msra.mxu0 %v2451
          %2499 = vmatprep.subr.mxu0 %v2455
          %2500 = vmatpush1.msra.mxu0 %v2454
          %2501 = vmatprep.subr.mxu0 %v2458
          %2502 = vmatpush1.msra.mxu0 %v2457
          %2503 = vmatprep.subr.mxu0 %v2461
          %2504 = vmatpush1.msra.mxu0 %v2460
          %2505 = vmatprep.subr.mxu0 %v2464
          %2506 = vmatpush1.msra.mxu0 %v2463
          %2507 = vmatprep.subr.mxu0 %v2467
          %2508 = vmatpush1.msra.mxu0 %v2466
          %2509 = vmatprep.subr.mxu0 %v2470
          %2510 = vmatpush1.msra.mxu0 %v2469
          %2511 = vmatprep.subr.mxu0 %v2473
          %2512 = vmatpush1.msra.mxu0 %v2472
          %2513 = vmatprep.subr.mxu0 %v2476
          %2514 = vmatpush1.msra.mxu0 %v2475
          %2515 = vmatprep.subr.mxu0 %v2479
          %2516 = vmatpush1.msra.mxu0 %v2478
          %2517 = vmatprep.subr.mxu0 %v2482
          %2518 = vmatpush1.msra.mxu0 %v2481
          %2519 = vmatprep.subr.mxu0 %v2485
          %2520 = vmatpush1.msra.mxu0 %v2484
          %2521 = vmatprep.subr.mxu0 %v2488
          %2522 = vmatpush1.msra.mxu0 %v2487
          %2523 = vmatprep.subr.mxu0 %v2491
          %2524 = vmatpush1.msra.mxu0 %v2490
          %2525 = vmatprep.subr.mxu0 0.0
          %2526 = vmatpush1.msra.mxu0 0.0
          %2527 = vmatprep.subr.mxu0 0.0
          %2528 = vmatpush1.msra.mxu0 0.0
          %2529 = vmatprep.subr.mxu0 0.0
          %2530 = vmatpush1.msra.mxu0 0.0
          %2531 = vmatprep.subr.mxu0 0.0
          %2532 = vmatpush1.msra.mxu0 0.0
          %2533 = vmatprep.subr.mxu0 0.0
          %2534 = vmatpush1.msra.mxu0 0.0
          %2535 = vmatprep.subr.mxu0 0.0
          %2536 = vmatpush1.msra.mxu0 0.0
          %2537 = vmatprep.subr.mxu0 0.0
          %2538 = vmatpush1.msra.mxu0 0.0
          %2539 = vmatprep.subr.mxu0 0.0
          %2540 = vmatpush1.msra.mxu0 0.0
          %2541 = vmatprep.subr.mxu0 0.0
          %2542 = vmatpush1.msra.mxu0 0.0
          %2543 = vmatprep.subr.mxu0 0.0
          %2544 = vmatpush1.msra.mxu0 0.0
          %2545 = vmatprep.subr.mxu0 0.0
          %2546 = vmatpush1.msra.mxu0 0.0
          %2547 = vmatprep.subr.mxu0 0.0
          %2548 = vmatpush1.msra.mxu0 0.0
          %2549 = vmatprep.subr.mxu0 0.0
          %2550 = vmatpush1.msra.mxu0 0.0
          %2551 = vmatprep.subr.mxu0 0.0
          %2552 = vmatpush1.msra.mxu0 0.0
          %2553 = vmatprep.subr.mxu0 0.0
          %2554 = vmatpush1.msra.mxu0 0.0
          %2555 = vmatprep.subr.mxu0 0.0
          %2556 = vmatpush1.msra.mxu0 0.0
          %2557 = vmatprep.mubr.f32.mxu0 0.0
          %2558 = vmatmul.mubr.f32.gmra.mrb[0].mxu0 %v2435
          %v2559 = vpop.f32.mrb[0].mxu0
          %v2560 = vadd.f32 0.0, %v2559
          %v2561 = vpop.f32.mrb[0].mxu0
          %v2562 = vadd.f32 0.0, %v2561
          %2563 = vdwg.mxu0
          %2564 = vmatprep.subr.mxu0 0.0
          %2565 = vmatpush1.msra.mxu0 %v2447
          %2566 = vmatprep.subr.mxu0 0.0
          %2567 = vmatpush1.msra.mxu0 %v2450
          %2568 = vmatprep.subr.mxu0 0.0
          %2569 = vmatpush1.msra.mxu0 %v2453
          %2570 = vmatprep.subr.mxu0 0.0
          %2571 = vmatpush1.msra.mxu0 %v2456
          %2572 = vmatprep.subr.mxu0 0.0
          %2573 = vmatpush1.msra.mxu0 %v2459
          %2574 = vmatprep.subr.mxu0 0.0
          %2575 = vmatpush1.msra.mxu0 %v2462
          %2576 = vmatprep.subr.mxu0 0.0
          %2577 = vmatpush1.msra.mxu0 %v2465
          %2578 = vmatprep.subr.mxu0 0.0
          %2579 = vmatpush1.msra.mxu0 %v2468
          %2580 = vmatprep.subr.mxu0 0.0
          %2581 = vmatpush1.msra.mxu0 %v2471
          %2582 = vmatprep.subr.mxu0 0.0
          %2583 = vmatpush1.msra.mxu0 %v2474
          %2584 = vmatprep.subr.mxu0 0.0
          %2585 = vmatpush1.msra.mxu0 %v2477
          %2586 = vmatprep.subr.mxu0 0.0
          %2587 = vmatpush1.msra.mxu0 %v2480
          %2588 = vmatprep.subr.mxu0 0.0
          %2589 = vmatpush1.msra.mxu0 %v2483
          %2590 = vmatprep.subr.mxu0 0.0
          %2591 = vmatpush1.msra.mxu0 %v2486
          %2592 = vmatprep.subr.mxu0 0.0
          %2593 = vmatpush1.msra.mxu0 %v2489
          %2594 = vmatprep.subr.mxu0 0.0
          %2595 = vmatpush1.msra.mxu0 %v2492
          %2596 = vmatprep.subr.mxu0 0.0
          %2597 = vmatpush1.msra.mxu0 0.0
          %2598 = vmatprep.subr.mxu0 0.0
          %2599 = vmatpush1.msra.mxu0 0.0
          %2600 = vmatprep.subr.mxu0 0.0
          %2601 = vmatpush1.msra.mxu0 0.0
          %2602 = vmatprep.subr.mxu0 0.0
          %2603 = vmatpush1.msra.mxu0 0.0
          %2604 = vmatprep.subr.mxu0 0.0
          %2605 = vmatpush1.msra.mxu0 0.0
          %2606 = vmatprep.subr.mxu0 0.0
          %2607 = vmatpush1.msra.mxu0 0.0
          %2608 = vmatprep.subr.mxu0 0.0
          %2609 = vmatpush1.msra.mxu0 0.0
          %2610 = vmatprep.subr.mxu0 0.0
          %2611 = vmatpush1.msra.mxu0 0.0
          %2612 = vmatprep.subr.mxu0 0.0
          %2613 = vmatpush1.msra.mxu0 0.0
          %2614 = vmatprep.subr.mxu0 0.0
          %2615 = vmatpush1.msra.mxu0 0.0
          %2616 = vmatprep.subr.mxu0 0.0
          %2617 = vmatpush1.msra.mxu0 0.0
          %2618 = vmatprep.subr.mxu0 0.0
          %2619 = vmatpush1.msra.mxu0 0.0
          %2620 = vmatprep.subr.mxu0 0.0
          %2621 = vmatpush1.msra.mxu0 0.0
          %2622 = vmatprep.subr.mxu0 0.0
          %2623 = vmatpush1.msra.mxu0 0.0
          %2624 = vmatprep.subr.mxu0 0.0
          %2625 = vmatpush1.msra.mxu0 0.0
          %2626 = vmatprep.subr.mxu0 0.0
          %2627 = vmatpush1.msra.mxu0 0.0
          %2628 = vmatprep.mubr.f32.mxu0 0.0
          %2629 = vmatmul.mubr.f32.gmra.mrb[0].mxu0 %v2435
          %v2630 = vpop.f32.mrb[0].mxu0
          %v2631 = vadd.f32 0.0, %v2630
          %v2632 = vpop.f32.mrb[0].mxu0
          %2633 = vdwg.mxu0
          %v2634 = vadd.f32 %v2442, %v2560
          %v2635 = vxor.u32 %v2634, 2147483648
          %v2636 = vmul.f32 %v2635, 1.442695
          %v2637 = vpow.pop %v2636
          %v2638 = vadd.f32 %v2637, 1.0
          %v2639 = vrcp.pop %v2638
          %v2640 = vmul.f32 1.0, %v2639
          %v2641 = vadd.f32 %v2443, %v2562
          %v2642 = vxor.u32 %v2641, 2147483648
          %v2643 = vmul.f32 %v2642, 1.442695
          %v2644 = vpow.pop %v2643
          %v2645 = vadd.f32 %v2644, 1.0
          %v2646 = vrcp.pop %v2645
          %v2647 = vmul.f32 1.0, %v2646
          %v2648 = vld [vmem:[%s339] sm:$0x1]
          %v2650 = vlaneseq
          %v2651 = vshrl.u32 %v2650, 7
          %v2652 = vsub.s32 0, %v2651
          %v2653 = vrot.slane %v2648, %v2652
          %v2655 = vadd.f32 %v2631, %v2653
          %v2656 = vmul.f32 %v2640, %v2655
          %v2657 = vadd.f32 %v2444, %v2656
          %v2658 = vtanh.pop %v2657
          %v2659 = vsub.f32 1.0, %v2647
          %v2660 = vmul.f32 %v2659, %v2658
          %v2661 = vmul.f32 %v2647, %v2435
          %v2662 = vadd.f32 %v2660, %v2661
          %vm2663 = vcmp.gt.s32.totalorder %v2205, 6
          %v2664 = vsel %vm2663, 1, 0
          %2665 = vset.pattern.permute.xlu0 0
          %2666 = vperm.xlu0 %2665, %v2664
          %v2667 = vpop.permute.xlu0 %2666
          %vm2668 = vcmp.eq.s32.totalorder %v2667, 1
          %v2669 = vsel %vm2668, %v2662, %v2435
          %v2670 = vsel %vm2668, %v2662, 0.0
          %s2671 = scalar_lea.vmem [#allocation7], 48
          %v2672 = vld [vmem:[%s2671] sm:$0xff]
          %v2673 = vadd.f32 %v2672, %v2670
          %2674 = vst [vmem:[%s2671] sm:$0xff] %v2673
          %s2675 = scalar_lea.vmem %s283, 120 [#allocation2]
          %v2676 = vld [vmem:[%s2675] sm:$0xff]
          %v2677 = vld [vmem:[%s2675 + $0x8] sm:$0xff]
          %v2678 = vld [vmem:[%s2675 + $0x10] sm:$0xff]
          %v2679 = vld [vmem:[%s292] sm:$0xff]
          %v2680 = vld [vmem:[%s292 + $0x8] sm:$0xff]
          %v2681 = vld [vmem:[%s292 + $0x10] sm:$0xff]
          %v2682 = vld [vmem:[%s292 + $0x18] sm:$0xff]
          %v2683 = vld [vmem:[%s292 + $0x20] sm:$0xff]
          %v2684 = vld [vmem:[%s292 + $0x28] sm:$0xff]
          %v2685 = vld [vmem:[%s292 + $0x30] sm:$0xff]
          %v2686 = vld [vmem:[%s292 + $0x38] sm:$0xff]
          %v2687 = vld [vmem:[%s292 + $0x40] sm:$0xff]
          %v2688 = vld [vmem:[%s292 + $0x48] sm:$0xff]
          %v2689 = vld [vmem:[%s292 + $0x50] sm:$0xff]
          %v2690 = vld [vmem:[%s292 + $0x58] sm:$0xff]
          %v2691 = vld [vmem:[%s292 + $0x60] sm:$0xff]
          %v2692 = vld [vmem:[%s292 + $0x68] sm:$0xff]
          %v2693 = vld [vmem:[%s292 + $0x70] sm:$0xff]
          %v2694 = vld [vmem:[%s292 + $0x78] sm:$0xff]
          %v2695 = vld [vmem:[%s292 + $0x80] sm:$0xff]
          %v2696 = vld [vmem:[%s292 + $0x88] sm:$0xff]
          %v2697 = vld [vmem:[%s292 + $0x90] sm:$0xff]
          %v2698 = vld [vmem:[%s292 + $0x98] sm:$0xff]
          %v2699 = vld [vmem:[%s292 + $0xa0] sm:$0xff]
          %v2700 = vld [vmem:[%s292 + $0xa8] sm:$0xff]
          %v2701 = vld [vmem:[%s292 + $0xb0] sm:$0xff]
          %v2702 = vld [vmem:[%s292 + $0xb8] sm:$0xff]
          %v2703 = vld [vmem:[%s292 + $0xc0] sm:$0xff]
          %v2704 = vld [vmem:[%s292 + $0xc8] sm:$0xff]
          %v2705 = vld [vmem:[%s292 + $0xd0] sm:$0xff]
          %v2706 = vld [vmem:[%s292 + $0xd8] sm:$0xff]
          %v2707 = vld [vmem:[%s292 + $0xe0] sm:$0xff]
          %v2708 = vld [vmem:[%s292 + $0xe8] sm:$0xff]
          %v2709 = vld [vmem:[%s292 + $0xf0] sm:$0xff]
          %v2710 = vld [vmem:[%s292 + $0xf8] sm:$0xff]
          %v2711 = vld [vmem:[%s292 + $0x100] sm:$0xff]
          %v2712 = vld [vmem:[%s292 + $0x108] sm:$0xff]
          %v2713 = vld [vmem:[%s292 + $0x110] sm:$0xff]
          %v2714 = vld [vmem:[%s292 + $0x118] sm:$0xff]
          %v2715 = vld [vmem:[%s292 + $0x120] sm:$0xff]
          %v2716 = vld [vmem:[%s292 + $0x128] sm:$0xff]
          %v2717 = vld [vmem:[%s292 + $0x130] sm:$0xff]
          %v2718 = vld [vmem:[%s292 + $0x138] sm:$0xff]
          %v2719 = vld [vmem:[%s292 + $0x140] sm:$0xff]
          %v2720 = vld [vmem:[%s292 + $0x148] sm:$0xff]
          %v2721 = vld [vmem:[%s292 + $0x150] sm:$0xff]
          %v2722 = vld [vmem:[%s292 + $0x158] sm:$0xff]
          %v2723 = vld [vmem:[%s292 + $0x160] sm:$0xff]
          %v2724 = vld [vmem:[%s292 + $0x168] sm:$0xff]
          %v2725 = vld [vmem:[%s292 + $0x170] sm:$0xff]
          %v2726 = vld [vmem:[%s292 + $0x178] sm:$0xff]
          %2727 = vmatprep.subr.mxu0 %v2680
          %2728 = vmatpush1.msra.mxu0 %v2679
          %2729 = vmatprep.subr.mxu0 %v2683
          %2730 = vmatpush1.msra.mxu0 %v2682
          %2731 = vmatprep.subr.mxu0 %v2686
          %2732 = vmatpush1.msra.mxu0 %v2685
          %2733 = vmatprep.subr.mxu0 %v2689
          %2734 = vmatpush1.msra.mxu0 %v2688
          %2735 = vmatprep.subr.mxu0 %v2692
          %2736 = vmatpush1.msra.mxu0 %v2691
          %2737 = vmatprep.subr.mxu0 %v2695
          %2738 = vmatpush1.msra.mxu0 %v2694
          %2739 = vmatprep.subr.mxu0 %v2698
          %2740 = vmatpush1.msra.mxu0 %v2697
          %2741 = vmatprep.subr.mxu0 %v2701
          %2742 = vmatpush1.msra.mxu0 %v2700
          %2743 = vmatprep.subr.mxu0 %v2704
          %2744 = vmatpush1.msra.mxu0 %v2703
          %2745 = vmatprep.subr.mxu0 %v2707
          %2746 = vmatpush1.msra.mxu0 %v2706
          %2747 = vmatprep.subr.mxu0 %v2710
          %2748 = vmatpush1.msra.mxu0 %v2709
          %2749 = vmatprep.subr.mxu0 %v2713
          %2750 = vmatpush1.msra.mxu0 %v2712
          %2751 = vmatprep.subr.mxu0 %v2716
          %2752 = vmatpush1.msra.mxu0 %v2715
          %2753 = vmatprep.subr.mxu0 %v2719
          %2754 = vmatpush1.msra.mxu0 %v2718
          %2755 = vmatprep.subr.mxu0 %v2722
          %2756 = vmatpush1.msra.mxu0 %v2721
          %2757 = vmatprep.subr.mxu0 %v2725
          %2758 = vmatpush1.msra.mxu0 %v2724
          %2759 = vmatprep.subr.mxu0 0.0
          %2760 = vmatpush1.msra.mxu0 0.0
          %2761 = vmatprep.subr.mxu0 0.0
          %2762 = vmatpush1.msra.mxu0 0.0
          %2763 = vmatprep.subr.mxu0 0.0
          %2764 = vmatpush1.msra.mxu0 0.0
          %2765 = vmatprep.subr.mxu0 0.0
          %2766 = vmatpush1.msra.mxu0 0.0
          %2767 = vmatprep.subr.mxu0 0.0
          %2768 = vmatpush1.msra.mxu0 0.0
          %2769 = vmatprep.subr.mxu0 0.0
          %2770 = vmatpush1.msra.mxu0 0.0
          %2771 = vmatprep.subr.mxu0 0.0
          %2772 = vmatpush1.msra.mxu0 0.0
          %2773 = vmatprep.subr.mxu0 0.0
          %2774 = vmatpush1.msra.mxu0 0.0
          %2775 = vmatprep.subr.mxu0 0.0
          %2776 = vmatpush1.msra.mxu0 0.0
          %2777 = vmatprep.subr.mxu0 0.0
          %2778 = vmatpush1.msra.mxu0 0.0
          %2779 = vmatprep.subr.mxu0 0.0
          %2780 = vmatpush1.msra.mxu0 0.0
          %2781 = vmatprep.subr.mxu0 0.0
          %2782 = vmatpush1.msra.mxu0 0.0
          %2783 = vmatprep.subr.mxu0 0.0
          %2784 = vmatpush1.msra.mxu0 0.0
          %2785 = vmatprep.subr.mxu0 0.0
          %2786 = vmatpush1.msra.mxu0 0.0
          %2787 = vmatprep.subr.mxu0 0.0
          %2788 = vmatpush1.msra.mxu0 0.0
          %2789 = vmatprep.subr.mxu0 0.0
          %2790 = vmatpush1.msra.mxu0 0.0
          %2791 = vmatprep.mubr.f32.mxu0 0.0
          %2792 = vmatmul.mubr.f32.gmra.mrb[0].mxu0 %v2669
          %v2793 = vpop.f32.mrb[0].mxu0
          %v2794 = vadd.f32 0.0, %v2793
          %v2795 = vpop.f32.mrb[0].mxu0
          %v2796 = vadd.f32 0.0, %v2795
          %2797 = vdwg.mxu0
          %2798 = vmatprep.subr.mxu0 0.0
          %2799 = vmatpush1.msra.mxu0 %v2681
          %2800 = vmatprep.subr.mxu0 0.0
          %2801 = vmatpush1.msra.mxu0 %v2684
          %2802 = vmatprep.subr.mxu0 0.0
          %2803 = vmatpush1.msra.mxu0 %v2687
          %2804 = vmatprep.subr.mxu0 0.0
          %2805 = vmatpush1.msra.mxu0 %v2690
          %2806 = vmatprep.subr.mxu0 0.0
          %2807 = vmatpush1.msra.mxu0 %v2693
          %2808 = vmatprep.subr.mxu0 0.0
          %2809 = vmatpush1.msra.mxu0 %v2696
          %2810 = vmatprep.subr.mxu0 0.0
          %2811 = vmatpush1.msra.mxu0 %v2699
          %2812 = vmatprep.subr.mxu0 0.0
          %2813 = vmatpush1.msra.mxu0 %v2702
          %2814 = vmatprep.subr.mxu0 0.0
          %2815 = vmatpush1.msra.mxu0 %v2705
          %2816 = vmatprep.subr.mxu0 0.0
          %2817 = vmatpush1.msra.mxu0 %v2708
          %2818 = vmatprep.subr.mxu0 0.0
          %2819 = vmatpush1.msra.mxu0 %v2711
          %2820 = vmatprep.subr.mxu0 0.0
          %2821 = vmatpush1.msra.mxu0 %v2714
          %2822 = vmatprep.subr.mxu0 0.0
          %2823 = vmatpush1.msra.mxu0 %v2717
          %2824 = vmatprep.subr.mxu0 0.0
          %2825 = vmatpush1.msra.mxu0 %v2720
          %2826 = vmatprep.subr.mxu0 0.0
          %2827 = vmatpush1.msra.mxu0 %v2723
          %2828 = vmatprep.subr.mxu0 0.0
          %2829 = vmatpush1.msra.mxu0 %v2726
          %2830 = vmatprep.subr.mxu0 0.0
          %2831 = vmatpush1.msra.mxu0 0.0
          %2832 = vmatprep.subr.mxu0 0.0
          %2833 = vmatpush1.msra.mxu0 0.0
          %2834 = vmatprep.subr.mxu0 0.0
          %2835 = vmatpush1.msra.mxu0 0.0
          %2836 = vmatprep.subr.mxu0 0.0
          %2837 = vmatpush1.msra.mxu0 0.0
          %2838 = vmatprep.subr.mxu0 0.0
          %2839 = vmatpush1.msra.mxu0 0.0
          %2840 = vmatprep.subr.mxu0 0.0
          %2841 = vmatpush1.msra.mxu0 0.0
          %2842 = vmatprep.subr.mxu0 0.0
          %2843 = vmatpush1.msra.mxu0 0.0
          %2844 = vmatprep.subr.mxu0 0.0
          %2845 = vmatpush1.msra.mxu0 0.0
          %2846 = vmatprep.subr.mxu0 0.0
          %2847 = vmatpush1.msra.mxu0 0.0
          %2848 = vmatprep.subr.mxu0 0.0
          %2849 = vmatpush1.msra.mxu0 0.0
          %2850 = vmatprep.subr.mxu0 0.0
          %2851 = vmatpush1.msra.mxu0 0.0
          %2852 = vmatprep.subr.mxu0 0.0
          %2853 = vmatpush1.msra.mxu0 0.0
          %2854 = vmatprep.subr.mxu0 0.0
          %2855 = vmatpush1.msra.mxu0 0.0
          %2856 = vmatprep.subr.mxu0 0.0
          %2857 = vmatpush1.msra.mxu0 0.0
          %2858 = vmatprep.subr.mxu0 0.0
          %2859 = vmatpush1.msra.mxu0 0.0
          %2860 = vmatprep.subr.mxu0 0.0
          %2861 = vmatpush1.msra.mxu0 0.0
          %2862 = vmatprep.mubr.f32.mxu0 0.0
          %2863 = vmatmul.mubr.f32.gmra.mrb[0].mxu0 %v2669
          %v2864 = vpop.f32.mrb[0].mxu0
          %v2865 = vadd.f32 0.0, %v2864
          %v2866 = vpop.f32.mrb[0].mxu0
          %2867 = vdwg.mxu0
          %v2868 = vadd.f32 %v2676, %v2794
          %v2869 = vxor.u32 %v2868, 2147483648
          %v2870 = vmul.f32 %v2869, 1.442695
          %v2871 = vpow.pop %v2870
          %v2872 = vadd.f32 %v2871, 1.0
          %v2873 = vrcp.pop %v2872
          %v2874 = vmul.f32 1.0, %v2873
          %v2875 = vadd.f32 %v2677, %v2796
          %v2876 = vxor.u32 %v2875, 2147483648
          %v2877 = vmul.f32 %v2876, 1.442695
          %v2878 = vpow.pop %v2877
          %v2879 = vadd.f32 %v2878, 1.0
          %v2880 = vrcp.pop %v2879
          %v2881 = vmul.f32 1.0, %v2880
          %v2882 = vld [vmem:[%s339] sm:$0x1]
          %v2884 = vlaneseq
          %v2885 = vshrl.u32 %v2884, 7
          %v2886 = vsub.s32 0, %v2885
          %v2887 = vrot.slane %v2882, %v2886
          %v2889 = vadd.f32 %v2865, %v2887
          %v2890 = vmul.f32 %v2874, %v2889
          %v2891 = vadd.f32 %v2678, %v2890
          %v2892 = vtanh.pop %v2891
          %v2893 = vsub.f32 1.0, %v2881
          %v2894 = vmul.f32 %v2893, %v2892
          %v2895 = vmul.f32 %v2881, %v2669
          %v2896 = vadd.f32 %v2894, %v2895
          %vm2897 = vcmp.gt.s32.totalorder %v2205, 5
          %v2898 = vsel %vm2897, 1, 0
          %2899 = vset.pattern.permute.xlu0 0
          %2900 = vperm.xlu0 %2899, %v2898
          %v2901 = vpop.permute.xlu0 %2900
          %vm2902 = vcmp.eq.s32.totalorder %v2901, 1
          %v2903 = vsel %vm2902, %v2896, %v2669
          %v2904 = vsel %vm2902, %v2896, 0.0
          %s2905 = scalar_lea.vmem [#allocation7], 40
          %v2906 = vld [vmem:[%s2905] sm:$0xff]
          %v2907 = vadd.f32 %v2906, %v2904
          %2908 = vst [vmem:[%s2905] sm:$0xff] %v2907
          %s2909 = scalar_lea.vmem %s283, 96 [#allocation2]
          %v2910 = vld [vmem:[%s2909] sm:$0xff]
          %v2911 = vld [vmem:[%s2909 + $0x8] sm:$0xff]
          %v2912 = vld [vmem:[%s2909 + $0x10] sm:$0xff]
          %v2913 = vld [vmem:[%s292] sm:$0xff]
          %v2914 = vld [vmem:[%s292 + $0x8] sm:$0xff]
          %v2915 = vld [vmem:[%s292 + $0x10] sm:$0xff]
          %v2916 = vld [vmem:[%s292 + $0x18] sm:$0xff]
          %v2917 = vld [vmem:[%s292 + $0x20] sm:$0xff]
          %v2918 = vld [vmem:[%s292 + $0x28] sm:$0xff]
          %v2919 = vld [vmem:[%s292 + $0x30] sm:$0xff]
          %v2920 = vld [vmem:[%s292 + $0x38] sm:$0xff]
          %v2921 = vld [vmem:[%s292 + $0x40] sm:$0xff]
          %v2922 = vld [vmem:[%s292 + $0x48] sm:$0xff]
          %v2923 = vld [vmem:[%s292 + $0x50] sm:$0xff]
          %v2924 = vld [vmem:[%s292 + $0x58] sm:$0xff]
          %v2925 = vld [vmem:[%s292 + $0x60] sm:$0xff]
          %v2926 = vld [vmem:[%s292 + $0x68] sm:$0xff]
          %v2927 = vld [vmem:[%s292 + $0x70] sm:$0xff]
          %v2928 = vld [vmem:[%s292 + $0x78] sm:$0xff]
          %v2929 = vld [vmem:[%s292 + $0x80] sm:$0xff]
          %v2930 = vld [vmem:[%s292 + $0x88] sm:$0xff]
          %v2931 = vld [vmem:[%s292 + $0x90] sm:$0xff]
          %v2932 = vld [vmem:[%s292 + $0x98] sm:$0xff]
          %v2933 = vld [vmem:[%s292 + $0xa0] sm:$0xff]
          %v2934 = vld [vmem:[%s292 + $0xa8] sm:$0xff]
          %v2935 = vld [vmem:[%s292 + $0xb0] sm:$0xff]
          %v2936 = vld [vmem:[%s292 + $0xb8] sm:$0xff]
          %v2937 = vld [vmem:[%s292 + $0xc0] sm:$0xff]
          %v2938 = vld [vmem:[%s292 + $0xc8] sm:$0xff]
          %v2939 = vld [vmem:[%s292 + $0xd0] sm:$0xff]
          %v2940 = vld [vmem:[%s292 + $0xd8] sm:$0xff]
          %v2941 = vld [vmem:[%s292 + $0xe0] sm:$0xff]
          %v2942 = vld [vmem:[%s292 + $0xe8] sm:$0xff]
          %v2943 = vld [vmem:[%s292 + $0xf0] sm:$0xff]
          %v2944 = vld [vmem:[%s292 + $0xf8] sm:$0xff]
          %v2945 = vld [vmem:[%s292 + $0x100] sm:$0xff]
          %v2946 = vld [vmem:[%s292 + $0x108] sm:$0xff]
          %v2947 = vld [vmem:[%s292 + $0x110] sm:$0xff]
          %v2948 = vld [vmem:[%s292 + $0x118] sm:$0xff]
          %v2949 = vld [vmem:[%s292 + $0x120] sm:$0xff]
          %v2950 = vld [vmem:[%s292 + $0x128] sm:$0xff]
          %v2951 = vld [vmem:[%s292 + $0x130] sm:$0xff]
          %v2952 = vld [vmem:[%s292 + $0x138] sm:$0xff]
          %v2953 = vld [vmem:[%s292 + $0x140] sm:$0xff]
          %v2954 = vld [vmem:[%s292 + $0x148] sm:$0xff]
          %v2955 = vld [vmem:[%s292 + $0x150] sm:$0xff]
          %v2956 = vld [vmem:[%s292 + $0x158] sm:$0xff]
          %v2957 = vld [vmem:[%s292 + $0x160] sm:$0xff]
          %v2958 = vld [vmem:[%s292 + $0x168] sm:$0xff]
          %v2959 = vld [vmem:[%s292 + $0x170] sm:$0xff]
          %v2960 = vld [vmem:[%s292 + $0x178] sm:$0xff]
          %2961 = vmatprep.subr.mxu0 %v2914
          %2962 = vmatpush1.msra.mxu0 %v2913
          %2963 = vmatprep.subr.mxu0 %v2917
          %2964 = vmatpush1.msra.mxu0 %v2916
          %2965 = vmatprep.subr.mxu0 %v2920
          %2966 = vmatpush1.msra.mxu0 %v2919
          %2967 = vmatprep.subr.mxu0 %v2923
          %2968 = vmatpush1.msra.mxu0 %v2922
          %2969 = vmatprep.subr.mxu0 %v2926
          %2970 = vmatpush1.msra.mxu0 %v2925
          %2971 = vmatprep.subr.mxu0 %v2929
          %2972 = vmatpush1.msra.mxu0 %v2928
          %2973 = vmatprep.subr.mxu0 %v2932
          %2974 = vmatpush1.msra.mxu0 %v2931
          %2975 = vmatprep.subr.mxu0 %v2935
          %2976 = vmatpush1.msra.mxu0 %v2934
          %2977 = vmatprep.subr.mxu0 %v2938
          %2978 = vmatpush1.msra.mxu0 %v2937
          %2979 = vmatprep.subr.mxu0 %v2941
          %2980 = vmatpush1.msra.mxu0 %v2940
          %2981 = vmatprep.subr.mxu0 %v2944
          %2982 = vmatpush1.msra.mxu0 %v2943
          %2983 = vmatprep.subr.mxu0 %v2947
          %2984 = vmatpush1.msra.mxu0 %v2946
          %2985 = vmatprep.subr.mxu0 %v2950
          %2986 = vmatpush1.msra.mxu0 %v2949
          %2987 = vmatprep.subr.mxu0 %v2953
          %2988 = vmatpush1.msra.mxu0 %v2952
          %2989 = vmatprep.subr.mxu0 %v2956
          %2990 = vmatpush1.msra.mxu0 %v2955
          %2991 = vmatprep.subr.mxu0 %v2959
          %2992 = vmatpush1.msra.mxu0 %v2958
          %2993 = vmatprep.subr.mxu0 0.0
          %2994 = vmatpush1.msra.mxu0 0.0
          %2995 = vmatprep.subr.mxu0 0.0
          %2996 = vmatpush1.msra.mxu0 0.0
          %2997 = vmatprep.subr.mxu0 0.0
          %2998 = vmatpush1.msra.mxu0 0.0
          %2999 = vmatprep.subr.mxu0 0.0
          %3000 = vmatpush1.msra.mxu0 0.0
          %3001 = vmatprep.subr.mxu0 0.0
          %3002 = vmatpush1.msra.mxu0 0.0
          %3003 = vmatprep.subr.mxu0 0.0
          %3004 = vmatpush1.msra.mxu0 0.0
          %3005 = vmatprep.subr.mxu0 0.0
          %3006 = vmatpush1.msra.mxu0 0.0
          %3007 = vmatprep.subr.mxu0 0.0
          %3008 = vmatpush1.msra.mxu0 0.0
          %3009 = vmatprep.subr.mxu0 0.0
          %3010 = vmatpush1.msra.mxu0 0.0
          %3011 = vmatprep.subr.mxu0 0.0
          %3012 = vmatpush1.msra.mxu0 0.0
          %3013 = vmatprep.subr.mxu0 0.0
          %3014 = vmatpush1.msra.mxu0 0.0
          %3015 = vmatprep.subr.mxu0 0.0
          %3016 = vmatpush1.msra.mxu0 0.0
          %3017 = vmatprep.subr.mxu0 0.0
          %3018 = vmatpush1.msra.mxu0 0.0
          %3019 = vmatprep.subr.mxu0 0.0
          %3020 = vmatpush1.msra.mxu0 0.0
          %3021 = vmatprep.subr.mxu0 0.0
          %3022 = vmatpush1.msra.mxu0 0.0
          %3023 = vmatprep.subr.mxu0 0.0
          %3024 = vmatpush1.msra.mxu0 0.0
          %3025 = vmatprep.mubr.f32.mxu0 0.0
          %3026 = vmatmul.mubr.f32.gmra.mrb[0].mxu0 %v2903
          %v3027 = vpop.f32.mrb[0].mxu0
          %v3028 = vadd.f32 0.0, %v3027
          %v3029 = vpop.f32.mrb[0].mxu0
          %v3030 = vadd.f32 0.0, %v3029
          %3031 = vdwg.mxu0
          %3032 = vmatprep.subr.mxu0 0.0
          %3033 = vmatpush1.msra.mxu0 %v2915
          %3034 = vmatprep.subr.mxu0 0.0
          %3035 = vmatpush1.msra.mxu0 %v2918
          %3036 = vmatprep.subr.mxu0 0.0
          %3037 = vmatpush1.msra.mxu0 %v2921
          %3038 = vmatprep.subr.mxu0 0.0
          %3039 = vmatpush1.msra.mxu0 %v2924
          %3040 = vmatprep.subr.mxu0 0.0
          %3041 = vmatpush1.msra.mxu0 %v2927
          %3042 = vmatprep.subr.mxu0 0.0
          %3043 = vmatpush1.msra.mxu0 %v2930
          %3044 = vmatprep.subr.mxu0 0.0
          %3045 = vmatpush1.msra.mxu0 %v2933
          %3046 = vmatprep.subr.mxu0 0.0
          %3047 = vmatpush1.msra.mxu0 %v2936
          %3048 = vmatprep.subr.mxu0 0.0
          %3049 = vmatpush1.msra.mxu0 %v2939
          %3050 = vmatprep.subr.mxu0 0.0
          %3051 = vmatpush1.msra.mxu0 %v2942
          %3052 = vmatprep.subr.mxu0 0.0
          %3053 = vmatpush1.msra.mxu0 %v2945
          %3054 = vmatprep.subr.mxu0 0.0
          %3055 = vmatpush1.msra.mxu0 %v2948
          %3056 = vmatprep.subr.mxu0 0.0
          %3057 = vmatpush1.msra.mxu0 %v2951
          %3058 = vmatprep.subr.mxu0 0.0
          %3059 = vmatpush1.msra.mxu0 %v2954
          %3060 = vmatprep.subr.mxu0 0.0
          %3061 = vmatpush1.msra.mxu0 %v2957
          %3062 = vmatprep.subr.mxu0 0.0
          %3063 = vmatpush1.msra.mxu0 %v2960
          %3064 = vmatprep.subr.mxu0 0.0
          %3065 = vmatpush1.msra.mxu0 0.0
          %3066 = vmatprep.subr.mxu0 0.0
          %3067 = vmatpush1.msra.mxu0 0.0
          %3068 = vmatprep.subr.mxu0 0.0
          %3069 = vmatpush1.msra.mxu0 0.0
          %3070 = vmatprep.subr.mxu0 0.0
          %3071 = vmatpush1.msra.mxu0 0.0
          %3072 = vmatprep.subr.mxu0 0.0
          %3073 = vmatpush1.msra.mxu0 0.0
          %3074 = vmatprep.subr.mxu0 0.0
          %3075 = vmatpush1.msra.mxu0 0.0
          %3076 = vmatprep.subr.mxu0 0.0
          %3077 = vmatpush1.msra.mxu0 0.0
          %3078 = vmatprep.subr.mxu0 0.0
          %3079 = vmatpush1.msra.mxu0 0.0
          %3080 = vmatprep.subr.mxu0 0.0
          %3081 = vmatpush1.msra.mxu0 0.0
          %3082 = vmatprep.subr.mxu0 0.0
          %3083 = vmatpush1.msra.mxu0 0.0
          %3084 = vmatprep.subr.mxu0 0.0
          %3085 = vmatpush1.msra.mxu0 0.0
          %3086 = vmatprep.subr.mxu0 0.0
          %3087 = vmatpush1.msra.mxu0 0.0
          %3088 = vmatprep.subr.mxu0 0.0
          %3089 = vmatpush1.msra.mxu0 0.0
          %3090 = vmatprep.subr.mxu0 0.0
          %3091 = vmatpush1.msra.mxu0 0.0
          %3092 = vmatprep.subr.mxu0 0.0
          %3093 = vmatpush1.msra.mxu0 0.0
          %3094 = vmatprep.subr.mxu0 0.0
          %3095 = vmatpush1.msra.mxu0 0.0
          %3096 = vmatprep.mubr.f32.mxu0 0.0
          %3097 = vmatmul.mubr.f32.gmra.mrb[0].mxu0 %v2903
          %v3098 = vpop.f32.mrb[0].mxu0
          %v3099 = vadd.f32 0.0, %v3098
          %v3100 = vpop.f32.mrb[0].mxu0
          %3101 = vdwg.mxu0
          %v3102 = vadd.f32 %v2910, %v3028
          %v3103 = vxor.u32 %v3102, 2147483648
          %v3104 = vmul.f32 %v3103, 1.442695
          %v3105 = vpow.pop %v3104
          %v3106 = vadd.f32 %v3105, 1.0
          %v3107 = vrcp.pop %v3106
          %v3108 = vmul.f32 1.0, %v3107
          %v3109 = vadd.f32 %v2911, %v3030
          %v3110 = vxor.u32 %v3109, 2147483648
          %v3111 = vmul.f32 %v3110, 1.442695
          %v3112 = vpow.pop %v3111
          %v3113 = vadd.f32 %v3112, 1.0
          %v3114 = vrcp.pop %v3113
          %v3115 = vmul.f32 1.0, %v3114
          %v3116 = vld [vmem:[%s339] sm:$0x1]
          %v3118 = vlaneseq
          %v3119 = vshrl.u32 %v3118, 7
          %v3120 = vsub.s32 0, %v3119
          %v3121 = vrot.slane %v3116, %v3120
          %v3123 = vadd.f32 %v3099, %v3121
          %v3124 = vmul.f32 %v3108, %v3123
          %v3125 = vadd.f32 %v2912, %v3124
          %v3126 = vtanh.pop %v3125
          %v3127 = vsub.f32 1.0, %v3115
          %v3128 = vmul.f32 %v3127, %v3126
          %v3129 = vmul.f32 %v3115, %v2903
          %v3130 = vadd.f32 %v3128, %v3129
          %vm3131 = vcmp.gt.s32.totalorder %v2205, 4
          %v3132 = vsel %vm3131, 1, 0
          %3133 = vset.pattern.permute.xlu0 0
          %3134 = vperm.xlu0 %3133, %v3132
          %v3135 = vpop.permute.xlu0 %3134
          %vm3136 = vcmp.eq.s32.totalorder %v3135, 1
          %v3137 = vsel %vm3136, %v3130, %v2903
          %v3138 = vsel %vm3136, %v3130, 0.0
          %s3139 = scalar_lea.vmem [#allocation7], 32
          %v3140 = vld [vmem:[%s3139] sm:$0xff]
          %v3141 = vadd.f32 %v3140, %v3138
          %3142 = vst [vmem:[%s3139] sm:$0xff] %v3141
          %s3143 = scalar_lea.vmem %s283, 72 [#allocation2]
          %v3144 = vld [vmem:[%s3143] sm:$0xff]
          %v3145 = vld [vmem:[%s3143 + $0x8] sm:$0xff]
          %v3146 = vld [vmem:[%s3143 + $0x10] sm:$0xff]
          %v3147 = vld [vmem:[%s292] sm:$0xff]
          %v3148 = vld [vmem:[%s292 + $0x8] sm:$0xff]
          %v3149 = vld [vmem:[%s292 + $0x10] sm:$0xff]
          %v3150 = vld [vmem:[%s292 + $0x18] sm:$0xff]
          %v3151 = vld [vmem:[%s292 + $0x20] sm:$0xff]
          %v3152 = vld [vmem:[%s292 + $0x28] sm:$0xff]
          %v3153 = vld [vmem:[%s292 + $0x30] sm:$0xff]
          %v3154 = vld [vmem:[%s292 + $0x38] sm:$0xff]
          %v3155 = vld [vmem:[%s292 + $0x40] sm:$0xff]
          %v3156 = vld [vmem:[%s292 + $0x48] sm:$0xff]
          %v3157 = vld [vmem:[%s292 + $0x50] sm:$0xff]
          %v3158 = vld [vmem:[%s292 + $0x58] sm:$0xff]
          %v3159 = vld [vmem:[%s292 + $0x60] sm:$0xff]
          %v3160 = vld [vmem:[%s292 + $0x68] sm:$0xff]
          %v3161 = vld [vmem:[%s292 + $0x70] sm:$0xff]
          %v3162 = vld [vmem:[%s292 + $0x78] sm:$0xff]
          %v3163 = vld [vmem:[%s292 + $0x80] sm:$0xff]
          %v3164 = vld [vmem:[%s292 + $0x88] sm:$0xff]
          %v3165 = vld [vmem:[%s292 + $0x90] sm:$0xff]
          %v3166 = vld [vmem:[%s292 + $0x98] sm:$0xff]
          %v3167 = vld [vmem:[%s292 + $0xa0] sm:$0xff]
          %v3168 = vld [vmem:[%s292 + $0xa8] sm:$0xff]
          %v3169 = vld [vmem:[%s292 + $0xb0] sm:$0xff]
          %v3170 = vld [vmem:[%s292 + $0xb8] sm:$0xff]
          %v3171 = vld [vmem:[%s292 + $0xc0] sm:$0xff]
          %v3172 = vld [vmem:[%s292 + $0xc8] sm:$0xff]
          %v3173 = vld [vmem:[%s292 + $0xd0] sm:$0xff]
          %v3174 = vld [vmem:[%s292 + $0xd8] sm:$0xff]
          %v3175 = vld [vmem:[%s292 + $0xe0] sm:$0xff]
          %v3176 = vld [vmem:[%s292 + $0xe8] sm:$0xff]
          %v3177 = vld [vmem:[%s292 + $0xf0] sm:$0xff]
          %v3178 = vld [vmem:[%s292 + $0xf8] sm:$0xff]
          %v3179 = vld [vmem:[%s292 + $0x100] sm:$0xff]
          %v3180 = vld [vmem:[%s292 + $0x108] sm:$0xff]
          %v3181 = vld [vmem:[%s292 + $0x110] sm:$0xff]
          %v3182 = vld [vmem:[%s292 + $0x118] sm:$0xff]
          %v3183 = vld [vmem:[%s292 + $0x120] sm:$0xff]
          %v3184 = vld [vmem:[%s292 + $0x128] sm:$0xff]
          %v3185 = vld [vmem:[%s292 + $0x130] sm:$0xff]
          %v3186 = vld [vmem:[%s292 + $0x138] sm:$0xff]
          %v3187 = vld [vmem:[%s292 + $0x140] sm:$0xff]
          %v3188 = vld [vmem:[%s292 + $0x148] sm:$0xff]
          %v3189 = vld [vmem:[%s292 + $0x150] sm:$0xff]
          %v3190 = vld [vmem:[%s292 + $0x158] sm:$0xff]
          %v3191 = vld [vmem:[%s292 + $0x160] sm:$0xff]
          %v3192 = vld [vmem:[%s292 + $0x168] sm:$0xff]
          %v3193 = vld [vmem:[%s292 + $0x170] sm:$0xff]
          %v3194 = vld [vmem:[%s292 + $0x178] sm:$0xff]
          %3195 = vmatprep.subr.mxu0 %v3148
          %3196 = vmatpush1.msra.mxu0 %v3147
          %3197 = vmatprep.subr.mxu0 %v3151
          %3198 = vmatpush1.msra.mxu0 %v3150
          %3199 = vmatprep.subr.mxu0 %v3154
          %3200 = vmatpush1.msra.mxu0 %v3153
          %3201 = vmatprep.subr.mxu0 %v3157
          %3202 = vmatpush1.msra.mxu0 %v3156
          %3203 = vmatprep.subr.mxu0 %v3160
          %3204 = vmatpush1.msra.mxu0 %v3159
          %3205 = vmatprep.subr.mxu0 %v3163
          %3206 = vmatpush1.msra.mxu0 %v3162
          %3207 = vmatprep.subr.mxu0 %v3166
          %3208 = vmatpush1.msra.mxu0 %v3165
          %3209 = vmatprep.subr.mxu0 %v3169
          %3210 = vmatpush1.msra.mxu0 %v3168
          %3211 = vmatprep.subr.mxu0 %v3172
          %3212 = vmatpush1.msra.mxu0 %v3171
          %3213 = vmatprep.subr.mxu0 %v3175
          %3214 = vmatpush1.msra.mxu0 %v3174
          %3215 = vmatprep.subr.mxu0 %v3178
          %3216 = vmatpush1.msra.mxu0 %v3177
          %3217 = vmatprep.subr.mxu0 %v3181
          %3218 = vmatpush1.msra.mxu0 %v3180
          %3219 = vmatprep.subr.mxu0 %v3184
          %3220 = vmatpush1.msra.mxu0 %v3183
          %3221 = vmatprep.subr.mxu0 %v3187
          %3222 = vmatpush1.msra.mxu0 %v3186
          %3223 = vmatprep.subr.mxu0 %v3190
          %3224 = vmatpush1.msra.mxu0 %v3189
          %3225 = vmatprep.subr.mxu0 %v3193
          %3226 = vmatpush1.msra.mxu0 %v3192
          %3227 = vmatprep.subr.mxu0 0.0
          %3228 = vmatpush1.msra.mxu0 0.0
          %3229 = vmatprep.subr.mxu0 0.0
          %3230 = vmatpush1.msra.mxu0 0.0
          %3231 = vmatprep.subr.mxu0 0.0
          %3232 = vmatpush1.msra.mxu0 0.0
          %3233 = vmatprep.subr.mxu0 0.0
          %3234 = vmatpush1.msra.mxu0 0.0
          %3235 = vmatprep.subr.mxu0 0.0
          %3236 = vmatpush1.msra.mxu0 0.0
          %3237 = vmatprep.subr.mxu0 0.0
          %3238 = vmatpush1.msra.mxu0 0.0
          %3239 = vmatprep.subr.mxu0 0.0
          %3240 = vmatpush1.msra.mxu0 0.0
          %3241 = vmatprep.subr.mxu0 0.0
          %3242 = vmatpush1.msra.mxu0 0.0
          %3243 = vmatprep.subr.mxu0 0.0
          %3244 = vmatpush1.msra.mxu0 0.0
          %3245 = vmatprep.subr.mxu0 0.0
          %3246 = vmatpush1.msra.mxu0 0.0
          %3247 = vmatprep.subr.mxu0 0.0
          %3248 = vmatpush1.msra.mxu0 0.0
          %3249 = vmatprep.subr.mxu0 0.0
          %3250 = vmatpush1.msra.mxu0 0.0
          %3251 = vmatprep.subr.mxu0 0.0
          %3252 = vmatpush1.msra.mxu0 0.0
          %3253 = vmatprep.subr.mxu0 0.0
          %3254 = vmatpush1.msra.mxu0 0.0
          %3255 = vmatprep.subr.mxu0 0.0
          %3256 = vmatpush1.msra.mxu0 0.0
          %3257 = vmatprep.subr.mxu0 0.0
          %3258 = vmatpush1.msra.mxu0 0.0
          %3259 = vmatprep.mubr.f32.mxu0 0.0
          %3260 = vmatmul.mubr.f32.gmra.mrb[0].mxu0 %v3137
          %v3261 = vpop.f32.mrb[0].mxu0
          %v3262 = vadd.f32 0.0, %v3261
          %v3263 = vpop.f32.mrb[0].mxu0
          %v3264 = vadd.f32 0.0, %v3263
          %3265 = vdwg.mxu0
          %3266 = vmatprep.subr.mxu0 0.0
          %3267 = vmatpush1.msra.mxu0 %v3149
          %3268 = vmatprep.subr.mxu0 0.0
          %3269 = vmatpush1.msra.mxu0 %v3152
          %3270 = vmatprep.subr.mxu0 0.0
          %3271 = vmatpush1.msra.mxu0 %v3155
          %3272 = vmatprep.subr.mxu0 0.0
          %3273 = vmatpush1.msra.mxu0 %v3158
          %3274 = vmatprep.subr.mxu0 0.0
          %3275 = vmatpush1.msra.mxu0 %v3161
          %3276 = vmatprep.subr.mxu0 0.0
          %3277 = vmatpush1.msra.mxu0 %v3164
          %3278 = vmatprep.subr.mxu0 0.0
          %3279 = vmatpush1.msra.mxu0 %v3167
          %3280 = vmatprep.subr.mxu0 0.0
          %3281 = vmatpush1.msra.mxu0 %v3170
          %3282 = vmatprep.subr.mxu0 0.0
          %3283 = vmatpush1.msra.mxu0 %v3173
          %3284 = vmatprep.subr.mxu0 0.0
          %3285 = vmatpush1.msra.mxu0 %v3176
          %3286 = vmatprep.subr.mxu0 0.0
          %3287 = vmatpush1.msra.mxu0 %v3179
          %3288 = vmatprep.subr.mxu0 0.0
          %3289 = vmatpush1.msra.mxu0 %v3182
          %3290 = vmatprep.subr.mxu0 0.0
          %3291 = vmatpush1.msra.mxu0 %v3185
          %3292 = vmatprep.subr.mxu0 0.0
          %3293 = vmatpush1.msra.mxu0 %v3188
          %3294 = vmatprep.subr.mxu0 0.0
          %3295 = vmatpush1.msra.mxu0 %v3191
          %3296 = vmatprep.subr.mxu0 0.0
          %3297 = vmatpush1.msra.mxu0 %v3194
          %3298 = vmatprep.subr.mxu0 0.0
          %3299 = vmatpush1.msra.mxu0 0.0
          %3300 = vmatprep.subr.mxu0 0.0
          %3301 = vmatpush1.msra.mxu0 0.0
          %3302 = vmatprep.subr.mxu0 0.0
          %3303 = vmatpush1.msra.mxu0 0.0
          %3304 = vmatprep.subr.mxu0 0.0
          %3305 = vmatpush1.msra.mxu0 0.0
          %3306 = vmatprep.subr.mxu0 0.0
          %3307 = vmatpush1.msra.mxu0 0.0
          %3308 = vmatprep.subr.mxu0 0.0
          %3309 = vmatpush1.msra.mxu0 0.0
          %3310 = vmatprep.subr.mxu0 0.0
          %3311 = vmatpush1.msra.mxu0 0.0
          %3312 = vmatprep.subr.mxu0 0.0
          %3313 = vmatpush1.msra.mxu0 0.0
          %3314 = vmatprep.subr.mxu0 0.0
          %3315 = vmatpush1.msra.mxu0 0.0
          %3316 = vmatprep.subr.mxu0 0.0
          %3317 = vmatpush1.msra.mxu0 0.0
          %3318 = vmatprep.subr.mxu0 0.0
          %3319 = vmatpush1.msra.mxu0 0.0
          %3320 = vmatprep.subr.mxu0 0.0
          %3321 = vmatpush1.msra.mxu0 0.0
          %3322 = vmatprep.subr.mxu0 0.0
          %3323 = vmatpush1.msra.mxu0 0.0
          %3324 = vmatprep.subr.mxu0 0.0
          %3325 = vmatpush1.msra.mxu0 0.0
          %3326 = vmatprep.subr.mxu0 0.0
          %3327 = vmatpush1.msra.mxu0 0.0
          %3328 = vmatprep.subr.mxu0 0.0
          %3329 = vmatpush1.msra.mxu0 0.0
          %3330 = vmatprep.mubr.f32.mxu0 0.0
          %3331 = vmatmul.mubr.f32.gmra.mrb[0].mxu0 %v3137
          %v3332 = vpop.f32.mrb[0].mxu0
          %v3333 = vadd.f32 0.0, %v3332
          %v3334 = vpop.f32.mrb[0].mxu0
          %3335 = vdwg.mxu0
          %v3336 = vadd.f32 %v3144, %v3262
          %v3337 = vxor.u32 %v3336, 2147483648
          %v3338 = vmul.f32 %v3337, 1.442695
          %v3339 = vpow.pop %v3338
          %v3340 = vadd.f32 %v3339, 1.0
          %v3341 = vrcp.pop %v3340
          %v3342 = vmul.f32 1.0, %v3341
          %v3343 = vadd.f32 %v3145, %v3264
          %v3344 = vxor.u32 %v3343, 2147483648
          %v3345 = vmul.f32 %v3344, 1.442695
          %v3346 = vpow.pop %v3345
          %v3347 = vadd.f32 %v3346, 1.0
          %v3348 = vrcp.pop %v3347
          %v3349 = vmul.f32 1.0, %v3348
          %v3350 = vld [vmem:[%s339] sm:$0x1]
          %v3352 = vlaneseq
          %v3353 = vshrl.u32 %v3352, 7
          %v3354 = vsub.s32 0, %v3353
          %v3355 = vrot.slane %v3350, %v3354
          %v3357 = vadd.f32 %v3333, %v3355
          %v3358 = vmul.f32 %v3342, %v3357
          %v3359 = vadd.f32 %v3146, %v3358
          %v3360 = vtanh.pop %v3359
          %v3361 = vsub.f32 1.0, %v3349
          %v3362 = vmul.f32 %v3361, %v3360
          %v3363 = vmul.f32 %v3349, %v3137
          %v3364 = vadd.f32 %v3362, %v3363
          %vm3365 = vcmp.gt.s32.totalorder %v2205, 3
          %v3366 = vsel %vm3365, 1, 0
          %3367 = vset.pattern.permute.xlu0 0
          %3368 = vperm.xlu0 %3367, %v3366
          %v3369 = vpop.permute.xlu0 %3368
          %vm3370 = vcmp.eq.s32.totalorder %v3369, 1
          %v3371 = vsel %vm3370, %v3364, %v3137
          %v3372 = vsel %vm3370, %v3364, 0.0
          %s3373 = scalar_lea.vmem [#allocation7], 24
          %v3374 = vld [vmem:[%s3373] sm:$0xff]
          %v3375 = vadd.f32 %v3374, %v3372
          %3376 = vst [vmem:[%s3373] sm:$0xff] %v3375
          %s3377 = scalar_lea.vmem %s283, 48 [#allocation2]
          %v3378 = vld [vmem:[%s3377] sm:$0xff]
          %v3379 = vld [vmem:[%s3377 + $0x8] sm:$0xff]
          %v3380 = vld [vmem:[%s3377 + $0x10] sm:$0xff]
          %v3381 = vld [vmem:[%s292] sm:$0xff]
          %v3382 = vld [vmem:[%s292 + $0x8] sm:$0xff]
          %v3383 = vld [vmem:[%s292 + $0x10] sm:$0xff]
          %v3384 = vld [vmem:[%s292 + $0x18] sm:$0xff]
          %v3385 = vld [vmem:[%s292 + $0x20] sm:$0xff]
          %v3386 = vld [vmem:[%s292 + $0x28] sm:$0xff]
          %v3387 = vld [vmem:[%s292 + $0x30] sm:$0xff]
          %v3388 = vld [vmem:[%s292 + $0x38] sm:$0xff]
          %v3389 = vld [vmem:[%s292 + $0x40] sm:$0xff]
          %v3390 = vld [vmem:[%s292 + $0x48] sm:$0xff]
          %v3391 = vld [vmem:[%s292 + $0x50] sm:$0xff]
          %v3392 = vld [vmem:[%s292 + $0x58] sm:$0xff]
          %v3393 = vld [vmem:[%s292 + $0x60] sm:$0xff]
          %v3394 = vld [vmem:[%s292 + $0x68] sm:$0xff]
          %v3395 = vld [vmem:[%s292 + $0x70] sm:$0xff]
          %v3396 = vld [vmem:[%s292 + $0x78] sm:$0xff]
          %v3397 = vld [vmem:[%s292 + $0x80] sm:$0xff]
          %v3398 = vld [vmem:[%s292 + $0x88] sm:$0xff]
          %v3399 = vld [vmem:[%s292 + $0x90] sm:$0xff]
          %v3400 = vld [vmem:[%s292 + $0x98] sm:$0xff]
          %v3401 = vld [vmem:[%s292 + $0xa0] sm:$0xff]
          %v3402 = vld [vmem:[%s292 + $0xa8] sm:$0xff]
          %v3403 = vld [vmem:[%s292 + $0xb0] sm:$0xff]
          %v3404 = vld [vmem:[%s292 + $0xb8] sm:$0xff]
          %v3405 = vld [vmem:[%s292 + $0xc0] sm:$0xff]
          %v3406 = vld [vmem:[%s292 + $0xc8] sm:$0xff]
          %v3407 = vld [vmem:[%s292 + $0xd0] sm:$0xff]
          %v3408 = vld [vmem:[%s292 + $0xd8] sm:$0xff]
          %v3409 = vld [vmem:[%s292 + $0xe0] sm:$0xff]
          %v3410 = vld [vmem:[%s292 + $0xe8] sm:$0xff]
          %v3411 = vld [vmem:[%s292 + $0xf0] sm:$0xff]
          %v3412 = vld [vmem:[%s292 + $0xf8] sm:$0xff]
          %v3413 = vld [vmem:[%s292 + $0x100] sm:$0xff]
          %v3414 = vld [vmem:[%s292 + $0x108] sm:$0xff]
          %v3415 = vld [vmem:[%s292 + $0x110] sm:$0xff]
          %v3416 = vld [vmem:[%s292 + $0x118] sm:$0xff]
          %v3417 = vld [vmem:[%s292 + $0x120] sm:$0xff]
          %v3418 = vld [vmem:[%s292 + $0x128] sm:$0xff]
          %v3419 = vld [vmem:[%s292 + $0x130] sm:$0xff]
          %v3420 = vld [vmem:[%s292 + $0x138] sm:$0xff]
          %v3421 = vld [vmem:[%s292 + $0x140] sm:$0xff]
          %v3422 = vld [vmem:[%s292 + $0x148] sm:$0xff]
          %v3423 = vld [vmem:[%s292 + $0x150] sm:$0xff]
          %v3424 = vld [vmem:[%s292 + $0x158] sm:$0xff]
          %v3425 = vld [vmem:[%s292 + $0x160] sm:$0xff]
          %v3426 = vld [vmem:[%s292 + $0x168] sm:$0xff]
          %v3427 = vld [vmem:[%s292 + $0x170] sm:$0xff]
          %v3428 = vld [vmem:[%s292 + $0x178] sm:$0xff]
          %3429 = vmatprep.subr.mxu0 %v3382
          %3430 = vmatpush1.msra.mxu0 %v3381
          %3431 = vmatprep.subr.mxu0 %v3385
          %3432 = vmatpush1.msra.mxu0 %v3384
          %3433 = vmatprep.subr.mxu0 %v3388
          %3434 = vmatpush1.msra.mxu0 %v3387
          %3435 = vmatprep.subr.mxu0 %v3391
          %3436 = vmatpush1.msra.mxu0 %v3390
          %3437 = vmatprep.subr.mxu0 %v3394
          %3438 = vmatpush1.msra.mxu0 %v3393
          %3439 = vmatprep.subr.mxu0 %v3397
          %3440 = vmatpush1.msra.mxu0 %v3396
          %3441 = vmatprep.subr.mxu0 %v3400
          %3442 = vmatpush1.msra.mxu0 %v3399
          %3443 = vmatprep.subr.mxu0 %v3403
          %3444 = vmatpush1.msra.mxu0 %v3402
          %3445 = vmatprep.subr.mxu0 %v3406
          %3446 = vmatpush1.msra.mxu0 %v3405
          %3447 = vmatprep.subr.mxu0 %v3409
          %3448 = vmatpush1.msra.mxu0 %v3408
          %3449 = vmatprep.subr.mxu0 %v3412
          %3450 = vmatpush1.msra.mxu0 %v3411
          %3451 = vmatprep.subr.mxu0 %v3415
          %3452 = vmatpush1.msra.mxu0 %v3414
          %3453 = vmatprep.subr.mxu0 %v3418
          %3454 = vmatpush1.msra.mxu0 %v3417
          %3455 = vmatprep.subr.mxu0 %v3421
          %3456 = vmatpush1.msra.mxu0 %v3420
          %3457 = vmatprep.subr.mxu0 %v3424
          %3458 = vmatpush1.msra.mxu0 %v3423
          %3459 = vmatprep.subr.mxu0 %v3427
          %3460 = vmatpush1.msra.mxu0 %v3426
          %3461 = vmatprep.subr.mxu0 0.0
          %3462 = vmatpush1.msra.mxu0 0.0
          %3463 = vmatprep.subr.mxu0 0.0
          %3464 = vmatpush1.msra.mxu0 0.0
          %3465 = vmatprep.subr.mxu0 0.0
          %3466 = vmatpush1.msra.mxu0 0.0
          %3467 = vmatprep.subr.mxu0 0.0
          %3468 = vmatpush1.msra.mxu0 0.0
          %3469 = vmatprep.subr.mxu0 0.0
          %3470 = vmatpush1.msra.mxu0 0.0
          %3471 = vmatprep.subr.mxu0 0.0
          %3472 = vmatpush1.msra.mxu0 0.0
          %3473 = vmatprep.subr.mxu0 0.0
          %3474 = vmatpush1.msra.mxu0 0.0
          %3475 = vmatprep.subr.mxu0 0.0
          %3476 = vmatpush1.msra.mxu0 0.0
          %3477 = vmatprep.subr.mxu0 0.0
          %3478 = vmatpush1.msra.mxu0 0.0
          %3479 = vmatprep.subr.mxu0 0.0
          %3480 = vmatpush1.msra.mxu0 0.0
          %3481 = vmatprep.subr.mxu0 0.0
          %3482 = vmatpush1.msra.mxu0 0.0
          %3483 = vmatprep.subr.mxu0 0.0
          %3484 = vmatpush1.msra.mxu0 0.0
          %3485 = vmatprep.subr.mxu0 0.0
          %3486 = vmatpush1.msra.mxu0 0.0
          %3487 = vmatprep.subr.mxu0 0.0
          %3488 = vmatpush1.msra.mxu0 0.0
          %3489 = vmatprep.subr.mxu0 0.0
          %3490 = vmatpush1.msra.mxu0 0.0
          %3491 = vmatprep.subr.mxu0 0.0
          %3492 = vmatpush1.msra.mxu0 0.0
          %3493 = vmatprep.mubr.f32.mxu0 0.0
          %3494 = vmatmul.mubr.f32.gmra.mrb[0].mxu0 %v3371
          %v3495 = vpop.f32.mrb[0].mxu0
          %v3496 = vadd.f32 0.0, %v3495
          %v3497 = vpop.f32.mrb[0].mxu0
          %v3498 = vadd.f32 0.0, %v3497
          %3499 = vdwg.mxu0
          %3500 = vmatprep.subr.mxu0 0.0
          %3501 = vmatpush1.msra.mxu0 %v3383
          %3502 = vmatprep.subr.mxu0 0.0
          %3503 = vmatpush1.msra.mxu0 %v3386
          %3504 = vmatprep.subr.mxu0 0.0
          %3505 = vmatpush1.msra.mxu0 %v3389
          %3506 = vmatprep.subr.mxu0 0.0
          %3507 = vmatpush1.msra.mxu0 %v3392
          %3508 = vmatprep.subr.mxu0 0.0
          %3509 = vmatpush1.msra.mxu0 %v3395
          %3510 = vmatprep.subr.mxu0 0.0
          %3511 = vmatpush1.msra.mxu0 %v3398
          %3512 = vmatprep.subr.mxu0 0.0
          %3513 = vmatpush1.msra.mxu0 %v3401
          %3514 = vmatprep.subr.mxu0 0.0
          %3515 = vmatpush1.msra.mxu0 %v3404
          %3516 = vmatprep.subr.mxu0 0.0
          %3517 = vmatpush1.msra.mxu0 %v3407
          %3518 = vmatprep.subr.mxu0 0.0
          %3519 = vmatpush1.msra.mxu0 %v3410
          %3520 = vmatprep.subr.mxu0 0.0
          %3521 = vmatpush1.msra.mxu0 %v3413
          %3522 = vmatprep.subr.mxu0 0.0
          %3523 = vmatpush1.msra.mxu0 %v3416
          %3524 = vmatprep.subr.mxu0 0.0
          %3525 = vmatpush1.msra.mxu0 %v3419
          %3526 = vmatprep.subr.mxu0 0.0
          %3527 = vmatpush1.msra.mxu0 %v3422
          %3528 = vmatprep.subr.mxu0 0.0
          %3529 = vmatpush1.msra.mxu0 %v3425
          %3530 = vmatprep.subr.mxu0 0.0
          %3531 = vmatpush1.msra.mxu0 %v3428
          %3532 = vmatprep.subr.mxu0 0.0
          %3533 = vmatpush1.msra.mxu0 0.0
          %3534 = vmatprep.subr.mxu0 0.0
          %3535 = vmatpush1.msra.mxu0 0.0
          %3536 = vmatprep.subr.mxu0 0.0
          %3537 = vmatpush1.msra.mxu0 0.0
          %3538 = vmatprep.subr.mxu0 0.0
          %3539 = vmatpush1.msra.mxu0 0.0
          %3540 = vmatprep.subr.mxu0 0.0
          %3541 = vmatpush1.msra.mxu0 0.0
          %3542 = vmatprep.subr.mxu0 0.0
          %3543 = vmatpush1.msra.mxu0 0.0
          %3544 = vmatprep.subr.mxu0 0.0
          %3545 = vmatpush1.msra.mxu0 0.0
          %3546 = vmatprep.subr.mxu0 0.0
          %3547 = vmatpush1.msra.mxu0 0.0
          %3548 = vmatprep.subr.mxu0 0.0
          %3549 = vmatpush1.msra.mxu0 0.0
          %3550 = vmatprep.subr.mxu0 0.0
          %3551 = vmatpush1.msra.mxu0 0.0
          %3552 = vmatprep.subr.mxu0 0.0
          %3553 = vmatpush1.msra.mxu0 0.0
          %3554 = vmatprep.subr.mxu0 0.0
          %3555 = vmatpush1.msra.mxu0 0.0
          %3556 = vmatprep.subr.mxu0 0.0
          %3557 = vmatpush1.msra.mxu0 0.0
          %3558 = vmatprep.subr.mxu0 0.0
          %3559 = vmatpush1.msra.mxu0 0.0
          %3560 = vmatprep.subr.mxu0 0.0
          %3561 = vmatpush1.msra.mxu0 0.0
          %3562 = vmatprep.subr.mxu0 0.0
          %3563 = vmatpush1.msra.mxu0 0.0
          %3564 = vmatprep.mubr.f32.mxu0 0.0
          %3565 = vmatmul.mubr.f32.gmra.mrb[0].mxu0 %v3371
          %v3566 = vpop.f32.mrb[0].mxu0
          %v3567 = vadd.f32 0.0, %v3566
          %v3568 = vpop.f32.mrb[0].mxu0
          %3569 = vdwg.mxu0
          %v3570 = vadd.f32 %v3378, %v3496
          %v3571 = vxor.u32 %v3570, 2147483648
          %v3572 = vmul.f32 %v3571, 1.442695
          %v3573 = vpow.pop %v3572
          %v3574 = vadd.f32 %v3573, 1.0
          %v3575 = vrcp.pop %v3574
          %v3576 = vmul.f32 1.0, %v3575
          %v3577 = vadd.f32 %v3379, %v3498
          %v3578 = vxor.u32 %v3577, 2147483648
          %v3579 = vmul.f32 %v3578, 1.442695
          %v3580 = vpow.pop %v3579
          %v3581 = vadd.f32 %v3580, 1.0
          %v3582 = vrcp.pop %v3581
          %v3583 = vmul.f32 1.0, %v3582
          %v3584 = vld [vmem:[%s339] sm:$0x1]
          %v3586 = vlaneseq
          %v3587 = vshrl.u32 %v3586, 7
          %v3588 = vsub.s32 0, %v3587
          %v3589 = vrot.slane %v3584, %v3588
          %v3591 = vadd.f32 %v3567, %v3589
          %v3592 = vmul.f32 %v3576, %v3591
          %v3593 = vadd.f32 %v3380, %v3592
          %v3594 = vtanh.pop %v3593
          %v3595 = vsub.f32 1.0, %v3583
          %v3596 = vmul.f32 %v3595, %v3594
          %v3597 = vmul.f32 %v3583, %v3371
          %v3598 = vadd.f32 %v3596, %v3597
          %vm3599 = vcmp.gt.s32.totalorder %v2205, 2
          %v3600 = vsel %vm3599, 1, 0
          %3601 = vset.pattern.permute.xlu0 0
          %3602 = vperm.xlu0 %3601, %v3600
          %v3603 = vpop.permute.xlu0 %3602
          %vm3604 = vcmp.eq.s32.totalorder %v3603, 1
          %v3605 = vsel %vm3604, %v3598, %v3371
          %v3606 = vsel %vm3604, %v3598, 0.0
          %s3607 = scalar_lea.vmem [#allocation7], 16
          %v3608 = vld [vmem:[%s3607] sm:$0xff]
          %v3609 = vadd.f32 %v3608, %v3606
          %3610 = vst [vmem:[%s3607] sm:$0xff] %v3609
          %s3611 = scalar_lea.vmem %s283, 24 [#allocation2]
          %v3612 = vld [vmem:[%s3611] sm:$0xff]
          %v3613 = vld [vmem:[%s3611 + $0x8] sm:$0xff]
          %v3614 = vld [vmem:[%s3611 + $0x10] sm:$0xff]
          %v3615 = vld [vmem:[%s292] sm:$0xff]
          %v3616 = vld [vmem:[%s292 + $0x8] sm:$0xff]
          %v3617 = vld [vmem:[%s292 + $0x10] sm:$0xff]
          %v3618 = vld [vmem:[%s292 + $0x18] sm:$0xff]
          %v3619 = vld [vmem:[%s292 + $0x20] sm:$0xff]
          %v3620 = vld [vmem:[%s292 + $0x28] sm:$0xff]
          %v3621 = vld [vmem:[%s292 + $0x30] sm:$0xff]
          %v3622 = vld [vmem:[%s292 + $0x38] sm:$0xff]
          %v3623 = vld [vmem:[%s292 + $0x40] sm:$0xff]
          %v3624 = vld [vmem:[%s292 + $0x48] sm:$0xff]
          %v3625 = vld [vmem:[%s292 + $0x50] sm:$0xff]
          %v3626 = vld [vmem:[%s292 + $0x58] sm:$0xff]
          %v3627 = vld [vmem:[%s292 + $0x60] sm:$0xff]
          %v3628 = vld [vmem:[%s292 + $0x68] sm:$0xff]
          %v3629 = vld [vmem:[%s292 + $0x70] sm:$0xff]
          %v3630 = vld [vmem:[%s292 + $0x78] sm:$0xff]
          %v3631 = vld [vmem:[%s292 + $0x80] sm:$0xff]
          %v3632 = vld [vmem:[%s292 + $0x88] sm:$0xff]
          %v3633 = vld [vmem:[%s292 + $0x90] sm:$0xff]
          %v3634 = vld [vmem:[%s292 + $0x98] sm:$0xff]
          %v3635 = vld [vmem:[%s292 + $0xa0] sm:$0xff]
          %v3636 = vld [vmem:[%s292 + $0xa8] sm:$0xff]
          %v3637 = vld [vmem:[%s292 + $0xb0] sm:$0xff]
          %v3638 = vld [vmem:[%s292 + $0xb8] sm:$0xff]
          %v3639 = vld [vmem:[%s292 + $0xc0] sm:$0xff]
          %v3640 = vld [vmem:[%s292 + $0xc8] sm:$0xff]
          %v3641 = vld [vmem:[%s292 + $0xd0] sm:$0xff]
          %v3642 = vld [vmem:[%s292 + $0xd8] sm:$0xff]
          %v3643 = vld [vmem:[%s292 + $0xe0] sm:$0xff]
          %v3644 = vld [vmem:[%s292 + $0xe8] sm:$0xff]
          %v3645 = vld [vmem:[%s292 + $0xf0] sm:$0xff]
          %v3646 = vld [vmem:[%s292 + $0xf8] sm:$0xff]
          %v3647 = vld [vmem:[%s292 + $0x100] sm:$0xff]
          %v3648 = vld [vmem:[%s292 + $0x108] sm:$0xff]
          %v3649 = vld [vmem:[%s292 + $0x110] sm:$0xff]
          %v3650 = vld [vmem:[%s292 + $0x118] sm:$0xff]
          %v3651 = vld [vmem:[%s292 + $0x120] sm:$0xff]
          %v3652 = vld [vmem:[%s292 + $0x128] sm:$0xff]
          %v3653 = vld [vmem:[%s292 + $0x130] sm:$0xff]
          %v3654 = vld [vmem:[%s292 + $0x138] sm:$0xff]
          %v3655 = vld [vmem:[%s292 + $0x140] sm:$0xff]
          %v3656 = vld [vmem:[%s292 + $0x148] sm:$0xff]
          %v3657 = vld [vmem:[%s292 + $0x150] sm:$0xff]
          %v3658 = vld [vmem:[%s292 + $0x158] sm:$0xff]
          %v3659 = vld [vmem:[%s292 + $0x160] sm:$0xff]
          %v3660 = vld [vmem:[%s292 + $0x168] sm:$0xff]
          %v3661 = vld [vmem:[%s292 + $0x170] sm:$0xff]
          %v3662 = vld [vmem:[%s292 + $0x178] sm:$0xff]
          %3663 = vmatprep.subr.mxu0 %v3616
          %3664 = vmatpush1.msra.mxu0 %v3615
          %3665 = vmatprep.subr.mxu0 %v3619
          %3666 = vmatpush1.msra.mxu0 %v3618
          %3667 = vmatprep.subr.mxu0 %v3622
          %3668 = vmatpush1.msra.mxu0 %v3621
          %3669 = vmatprep.subr.mxu0 %v3625
          %3670 = vmatpush1.msra.mxu0 %v3624
          %3671 = vmatprep.subr.mxu0 %v3628
          %3672 = vmatpush1.msra.mxu0 %v3627
          %3673 = vmatprep.subr.mxu0 %v3631
          %3674 = vmatpush1.msra.mxu0 %v3630
          %3675 = vmatprep.subr.mxu0 %v3634
          %3676 = vmatpush1.msra.mxu0 %v3633
          %3677 = vmatprep.subr.mxu0 %v3637
          %3678 = vmatpush1.msra.mxu0 %v3636
          %3679 = vmatprep.subr.mxu0 %v3640
          %3680 = vmatpush1.msra.mxu0 %v3639
          %3681 = vmatprep.subr.mxu0 %v3643
          %3682 = vmatpush1.msra.mxu0 %v3642
          %3683 = vmatprep.subr.mxu0 %v3646
          %3684 = vmatpush1.msra.mxu0 %v3645
          %3685 = vmatprep.subr.mxu0 %v3649
          %3686 = vmatpush1.msra.mxu0 %v3648
          %3687 = vmatprep.subr.mxu0 %v3652
          %3688 = vmatpush1.msra.mxu0 %v3651
          %3689 = vmatprep.subr.mxu0 %v3655
          %3690 = vmatpush1.msra.mxu0 %v3654
          %3691 = vmatprep.subr.mxu0 %v3658
          %3692 = vmatpush1.msra.mxu0 %v3657
          %3693 = vmatprep.subr.mxu0 %v3661
          %3694 = vmatpush1.msra.mxu0 %v3660
          %3695 = vmatprep.subr.mxu0 0.0
          %3696 = vmatpush1.msra.mxu0 0.0
          %3697 = vmatprep.subr.mxu0 0.0
          %3698 = vmatpush1.msra.mxu0 0.0
          %3699 = vmatprep.subr.mxu0 0.0
          %3700 = vmatpush1.msra.mxu0 0.0
          %3701 = vmatprep.subr.mxu0 0.0
          %3702 = vmatpush1.msra.mxu0 0.0
          %3703 = vmatprep.subr.mxu0 0.0
          %3704 = vmatpush1.msra.mxu0 0.0
          %3705 = vmatprep.subr.mxu0 0.0
          %3706 = vmatpush1.msra.mxu0 0.0
          %3707 = vmatprep.subr.mxu0 0.0
          %3708 = vmatpush1.msra.mxu0 0.0
          %3709 = vmatprep.subr.mxu0 0.0
          %3710 = vmatpush1.msra.mxu0 0.0
          %3711 = vmatprep.subr.mxu0 0.0
          %3712 = vmatpush1.msra.mxu0 0.0
          %3713 = vmatprep.subr.mxu0 0.0
          %3714 = vmatpush1.msra.mxu0 0.0
          %3715 = vmatprep.subr.mxu0 0.0
          %3716 = vmatpush1.msra.mxu0 0.0
          %3717 = vmatprep.subr.mxu0 0.0
          %3718 = vmatpush1.msra.mxu0 0.0
          %3719 = vmatprep.subr.mxu0 0.0
          %3720 = vmatpush1.msra.mxu0 0.0
          %3721 = vmatprep.subr.mxu0 0.0
          %3722 = vmatpush1.msra.mxu0 0.0
          %3723 = vmatprep.subr.mxu0 0.0
          %3724 = vmatpush1.msra.mxu0 0.0
          %3725 = vmatprep.subr.mxu0 0.0
          %3726 = vmatpush1.msra.mxu0 0.0
          %3727 = vmatprep.mubr.f32.mxu0 0.0
          %3728 = vmatmul.mubr.f32.gmra.mrb[0].mxu0 %v3605
          %v3729 = vpop.f32.mrb[0].mxu0
          %v3730 = vadd.f32 0.0, %v3729
          %v3731 = vpop.f32.mrb[0].mxu0
          %v3732 = vadd.f32 0.0, %v3731
          %3733 = vdwg.mxu0
          %3734 = vmatprep.subr.mxu0 0.0
          %3735 = vmatpush1.msra.mxu0 %v3617
          %3736 = vmatprep.subr.mxu0 0.0
          %3737 = vmatpush1.msra.mxu0 %v3620
          %3738 = vmatprep.subr.mxu0 0.0
          %3739 = vmatpush1.msra.mxu0 %v3623
          %3740 = vmatprep.subr.mxu0 0.0
          %3741 = vmatpush1.msra.mxu0 %v3626
          %3742 = vmatprep.subr.mxu0 0.0
          %3743 = vmatpush1.msra.mxu0 %v3629
          %3744 = vmatprep.subr.mxu0 0.0
          %3745 = vmatpush1.msra.mxu0 %v3632
          %3746 = vmatprep.subr.mxu0 0.0
          %3747 = vmatpush1.msra.mxu0 %v3635
          %3748 = vmatprep.subr.mxu0 0.0
          %3749 = vmatpush1.msra.mxu0 %v3638
          %3750 = vmatprep.subr.mxu0 0.0
          %3751 = vmatpush1.msra.mxu0 %v3641
          %3752 = vmatprep.subr.mxu0 0.0
          %3753 = vmatpush1.msra.mxu0 %v3644
          %3754 = vmatprep.subr.mxu0 0.0
          %3755 = vmatpush1.msra.mxu0 %v3647
          %3756 = vmatprep.subr.mxu0 0.0
          %3757 = vmatpush1.msra.mxu0 %v3650
          %3758 = vmatprep.subr.mxu0 0.0
          %3759 = vmatpush1.msra.mxu0 %v3653
          %3760 = vmatprep.subr.mxu0 0.0
          %3761 = vmatpush1.msra.mxu0 %v3656
          %3762 = vmatprep.subr.mxu0 0.0
          %3763 = vmatpush1.msra.mxu0 %v3659
          %3764 = vmatprep.subr.mxu0 0.0
          %3765 = vmatpush1.msra.mxu0 %v3662
          %3766 = vmatprep.subr.mxu0 0.0
          %3767 = vmatpush1.msra.mxu0 0.0
          %3768 = vmatprep.subr.mxu0 0.0
          %3769 = vmatpush1.msra.mxu0 0.0
          %3770 = vmatprep.subr.mxu0 0.0
          %3771 = vmatpush1.msra.mxu0 0.0
          %3772 = vmatprep.subr.mxu0 0.0
          %3773 = vmatpush1.msra.mxu0 0.0
          %3774 = vmatprep.subr.mxu0 0.0
          %3775 = vmatpush1.msra.mxu0 0.0
          %3776 = vmatprep.subr.mxu0 0.0
          %3777 = vmatpush1.msra.mxu0 0.0
          %3778 = vmatprep.subr.mxu0 0.0
          %3779 = vmatpush1.msra.mxu0 0.0
          %3780 = vmatprep.subr.mxu0 0.0
          %3781 = vmatpush1.msra.mxu0 0.0
          %3782 = vmatprep.subr.mxu0 0.0
          %3783 = vmatpush1.msra.mxu0 0.0
          %3784 = vmatprep.subr.mxu0 0.0
          %3785 = vmatpush1.msra.mxu0 0.0
          %3786 = vmatprep.subr.mxu0 0.0
          %3787 = vmatpush1.msra.mxu0 0.0
          %3788 = vmatprep.subr.mxu0 0.0
          %3789 = vmatpush1.msra.mxu0 0.0
          %3790 = vmatprep.subr.mxu0 0.0
          %3791 = vmatpush1.msra.mxu0 0.0
          %3792 = vmatprep.subr.mxu0 0.0
          %3793 = vmatpush1.msra.mxu0 0.0
          %3794 = vmatprep.subr.mxu0 0.0
          %3795 = vmatpush1.msra.mxu0 0.0
          %3796 = vmatprep.subr.mxu0 0.0
          %3797 = vmatpush1.msra.mxu0 0.0
          %3798 = vmatprep.mubr.f32.mxu0 0.0
          %3799 = vmatmul.mubr.f32.gmra.mrb[0].mxu0 %v3605
          %v3800 = vpop.f32.mrb[0].mxu0
          %v3801 = vadd.f32 0.0, %v3800
          %v3802 = vpop.f32.mrb[0].mxu0
          %3803 = vdwg.mxu0
          %v3804 = vadd.f32 %v3612, %v3730
          %v3805 = vxor.u32 %v3804, 2147483648
          %v3806 = vmul.f32 %v3805, 1.442695
          %v3807 = vpow.pop %v3806
          %v3808 = vadd.f32 %v3807, 1.0
          %v3809 = vrcp.pop %v3808
          %v3810 = vmul.f32 1.0, %v3809
          %v3811 = vadd.f32 %v3613, %v3732
          %v3812 = vxor.u32 %v3811, 2147483648
          %v3813 = vmul.f32 %v3812, 1.442695
          %v3814 = vpow.pop %v3813
          %v3815 = vadd.f32 %v3814, 1.0
          %v3816 = vrcp.pop %v3815
          %v3817 = vmul.f32 1.0, %v3816
          %v3818 = vld [vmem:[%s339] sm:$0x1]
          %v3820 = vlaneseq
          %v3821 = vshrl.u32 %v3820, 7
          %v3822 = vsub.s32 0, %v3821
          %v3823 = vrot.slane %v3818, %v3822
          %v3825 = vadd.f32 %v3801, %v3823
          %v3826 = vmul.f32 %v3810, %v3825
          %v3827 = vadd.f32 %v3614, %v3826
          %v3828 = vtanh.pop %v3827
          %v3829 = vsub.f32 1.0, %v3817
          %v3830 = vmul.f32 %v3829, %v3828
          %v3831 = vmul.f32 %v3817, %v3605
          %v3832 = vadd.f32 %v3830, %v3831
          %vm3833 = vcmp.gt.s32.totalorder %v2205, 1
          %v3834 = vsel %vm3833, 1, 0
          %3835 = vset.pattern.permute.xlu0 0
          %3836 = vperm.xlu0 %3835, %v3834
          %v3837 = vpop.permute.xlu0 %3836
          %vm3838 = vcmp.eq.s32.totalorder %v3837, 1
          %v3839 = vsel %vm3838, %v3832, %v3605
          %v3840 = vsel %vm3838, %v3832, 0.0
          %s3841 = scalar_lea.vmem [#allocation7], 8
          %v3842 = vld [vmem:[%s3841] sm:$0xff]
          %v3843 = vadd.f32 %v3842, %v3840
          %3844 = vst [vmem:[%s3841] sm:$0xff] %v3843
          %v3845 = vld [vmem:[%s283] sm:$0xff]
          %v3846 = vld [vmem:[%s283 + $0x8] sm:$0xff]
          %v3847 = vld [vmem:[%s283 + $0x10] sm:$0xff]
          %v3848 = vld [vmem:[%s292] sm:$0xff]
          %v3849 = vld [vmem:[%s292 + $0x8] sm:$0xff]
          %v3850 = vld [vmem:[%s292 + $0x10] sm:$0xff]
          %v3851 = vld [vmem:[%s292 + $0x18] sm:$0xff]
          %v3852 = vld [vmem:[%s292 + $0x20] sm:$0xff]
          %v3853 = vld [vmem:[%s292 + $0x28] sm:$0xff]
          %v3854 = vld [vmem:[%s292 + $0x30] sm:$0xff]
          %v3855 = vld [vmem:[%s292 + $0x38] sm:$0xff]
          %v3856 = vld [vmem:[%s292 + $0x40] sm:$0xff]
          %v3857 = vld [vmem:[%s292 + $0x48] sm:$0xff]
          %v3858 = vld [vmem:[%s292 + $0x50] sm:$0xff]
          %v3859 = vld [vmem:[%s292 + $0x58] sm:$0xff]
          %v3860 = vld [vmem:[%s292 + $0x60] sm:$0xff]
          %v3861 = vld [vmem:[%s292 + $0x68] sm:$0xff]
          %v3862 = vld [vmem:[%s292 + $0x70] sm:$0xff]
          %v3863 = vld [vmem:[%s292 + $0x78] sm:$0xff]
          %v3864 = vld [vmem:[%s292 + $0x80] sm:$0xff]
          %v3865 = vld [vmem:[%s292 + $0x88] sm:$0xff]
          %v3866 = vld [vmem:[%s292 + $0x90] sm:$0xff]
          %v3867 = vld [vmem:[%s292 + $0x98] sm:$0xff]
          %v3868 = vld [vmem:[%s292 + $0xa0] sm:$0xff]
          %v3869 = vld [vmem:[%s292 + $0xa8] sm:$0xff]
          %v3870 = vld [vmem:[%s292 + $0xb0] sm:$0xff]
          %v3871 = vld [vmem:[%s292 + $0xb8] sm:$0xff]
          %v3872 = vld [vmem:[%s292 + $0xc0] sm:$0xff]
          %v3873 = vld [vmem:[%s292 + $0xc8] sm:$0xff]
          %v3874 = vld [vmem:[%s292 + $0xd0] sm:$0xff]
          %v3875 = vld [vmem:[%s292 + $0xd8] sm:$0xff]
          %v3876 = vld [vmem:[%s292 + $0xe0] sm:$0xff]
          %v3877 = vld [vmem:[%s292 + $0xe8] sm:$0xff]
          %v3878 = vld [vmem:[%s292 + $0xf0] sm:$0xff]
          %v3879 = vld [vmem:[%s292 + $0xf8] sm:$0xff]
          %v3880 = vld [vmem:[%s292 + $0x100] sm:$0xff]
          %v3881 = vld [vmem:[%s292 + $0x108] sm:$0xff]
          %v3882 = vld [vmem:[%s292 + $0x110] sm:$0xff]
          %v3883 = vld [vmem:[%s292 + $0x118] sm:$0xff]
          %v3884 = vld [vmem:[%s292 + $0x120] sm:$0xff]
          %v3885 = vld [vmem:[%s292 + $0x128] sm:$0xff]
          %v3886 = vld [vmem:[%s292 + $0x130] sm:$0xff]
          %v3887 = vld [vmem:[%s292 + $0x138] sm:$0xff]
          %v3888 = vld [vmem:[%s292 + $0x140] sm:$0xff]
          %v3889 = vld [vmem:[%s292 + $0x148] sm:$0xff]
          %v3890 = vld [vmem:[%s292 + $0x150] sm:$0xff]
          %v3891 = vld [vmem:[%s292 + $0x158] sm:$0xff]
          %v3892 = vld [vmem:[%s292 + $0x160] sm:$0xff]
          %v3893 = vld [vmem:[%s292 + $0x168] sm:$0xff]
          %v3894 = vld [vmem:[%s292 + $0x170] sm:$0xff]
          %v3895 = vld [vmem:[%s292 + $0x178] sm:$0xff]
          %3896 = vmatprep.subr.mxu0 %v3849
          %3897 = vmatpush1.msra.mxu0 %v3848
          %3898 = vmatprep.subr.mxu0 %v3852
          %3899 = vmatpush1.msra.mxu0 %v3851
          %3900 = vmatprep.subr.mxu0 %v3855
          %3901 = vmatpush1.msra.mxu0 %v3854
          %3902 = vmatprep.subr.mxu0 %v3858
          %3903 = vmatpush1.msra.mxu0 %v3857
          %3904 = vmatprep.subr.mxu0 %v3861
          %3905 = vmatpush1.msra.mxu0 %v3860
          %3906 = vmatprep.subr.mxu0 %v3864
          %3907 = vmatpush1.msra.mxu0 %v3863
          %3908 = vmatprep.subr.mxu0 %v3867
          %3909 = vmatpush1.msra.mxu0 %v3866
          %3910 = vmatprep.subr.mxu0 %v3870
          %3911 = vmatpush1.msra.mxu0 %v3869
          %3912 = vmatprep.subr.mxu0 %v3873
          %3913 = vmatpush1.msra.mxu0 %v3872
          %3914 = vmatprep.subr.mxu0 %v3876
          %3915 = vmatpush1.msra.mxu0 %v3875
          %3916 = vmatprep.subr.mxu0 %v3879
          %3917 = vmatpush1.msra.mxu0 %v3878
          %3918 = vmatprep.subr.mxu0 %v3882
          %3919 = vmatpush1.msra.mxu0 %v3881
          %3920 = vmatprep.subr.mxu0 %v3885
          %3921 = vmatpush1.msra.mxu0 %v3884
          %3922 = vmatprep.subr.mxu0 %v3888
          %3923 = vmatpush1.msra.mxu0 %v3887
          %3924 = vmatprep.subr.mxu0 %v3891
          %3925 = vmatpush1.msra.mxu0 %v3890
          %3926 = vmatprep.subr.mxu0 %v3894
          %3927 = vmatpush1.msra.mxu0 %v3893
          %3928 = vmatprep.subr.mxu0 0.0
          %3929 = vmatpush1.msra.mxu0 0.0
          %3930 = vmatprep.subr.mxu0 0.0
          %3931 = vmatpush1.msra.mxu0 0.0
          %3932 = vmatprep.subr.mxu0 0.0
          %3933 = vmatpush1.msra.mxu0 0.0
          %3934 = vmatprep.subr.mxu0 0.0
          %3935 = vmatpush1.msra.mxu0 0.0
          %3936 = vmatprep.subr.mxu0 0.0
          %3937 = vmatpush1.msra.mxu0 0.0
          %3938 = vmatprep.subr.mxu0 0.0
          %3939 = vmatpush1.msra.mxu0 0.0
          %3940 = vmatprep.subr.mxu0 0.0
          %3941 = vmatpush1.msra.mxu0 0.0
          %3942 = vmatprep.subr.mxu0 0.0
          %3943 = vmatpush1.msra.mxu0 0.0
          %3944 = vmatprep.subr.mxu0 0.0
          %3945 = vmatpush1.msra.mxu0 0.0
          %3946 = vmatprep.subr.mxu0 0.0
          %3947 = vmatpush1.msra.mxu0 0.0
          %3948 = vmatprep.subr.mxu0 0.0
          %3949 = vmatpush1.msra.mxu0 0.0
          %3950 = vmatprep.subr.mxu0 0.0
          %3951 = vmatpush1.msra.mxu0 0.0
          %3952 = vmatprep.subr.mxu0 0.0
          %3953 = vmatpush1.msra.mxu0 0.0
          %3954 = vmatprep.subr.mxu0 0.0
          %3955 = vmatpush1.msra.mxu0 0.0
          %3956 = vmatprep.subr.mxu0 0.0
          %3957 = vmatpush1.msra.mxu0 0.0
          %3958 = vmatprep.subr.mxu0 0.0
          %3959 = vmatpush1.msra.mxu0 0.0
          %3960 = vmatprep.mubr.f32.mxu0 0.0
          %3961 = vmatmul.mubr.f32.gmra.mrb[0].mxu0 %v3839
          %v3962 = vpop.f32.mrb[0].mxu0
          %v3963 = vadd.f32 0.0, %v3962
          %v3964 = vpop.f32.mrb[0].mxu0
          %v3965 = vadd.f32 0.0, %v3964
          %3966 = vdwg.mxu0
          %3967 = vmatprep.subr.mxu0 0.0
          %3968 = vmatpush1.msra.mxu0 %v3850
          %3969 = vmatprep.subr.mxu0 0.0
          %3970 = vmatpush1.msra.mxu0 %v3853
          %3971 = vmatprep.subr.mxu0 0.0
          %3972 = vmatpush1.msra.mxu0 %v3856
          %3973 = vmatprep.subr.mxu0 0.0
          %3974 = vmatpush1.msra.mxu0 %v3859
          %3975 = vmatprep.subr.mxu0 0.0
          %3976 = vmatpush1.msra.mxu0 %v3862
          %3977 = vmatprep.subr.mxu0 0.0
          %3978 = vmatpush1.msra.mxu0 %v3865
          %3979 = vmatprep.subr.mxu0 0.0
          %3980 = vmatpush1.msra.mxu0 %v3868
          %3981 = vmatprep.subr.mxu0 0.0
          %3982 = vmatpush1.msra.mxu0 %v3871
          %3983 = vmatprep.subr.mxu0 0.0
          %3984 = vmatpush1.msra.mxu0 %v3874
          %3985 = vmatprep.subr.mxu0 0.0
          %3986 = vmatpush1.msra.mxu0 %v3877
          %3987 = vmatprep.subr.mxu0 0.0
          %3988 = vmatpush1.msra.mxu0 %v3880
          %3989 = vmatprep.subr.mxu0 0.0
          %3990 = vmatpush1.msra.mxu0 %v3883
          %3991 = vmatprep.subr.mxu0 0.0
          %3992 = vmatpush1.msra.mxu0 %v3886
          %3993 = vmatprep.subr.mxu0 0.0
          %3994 = vmatpush1.msra.mxu0 %v3889
          %3995 = vmatprep.subr.mxu0 0.0
          %3996 = vmatpush1.msra.mxu0 %v3892
          %3997 = vmatprep.subr.mxu0 0.0
          %3998 = vmatpush1.msra.mxu0 %v3895
          %3999 = vmatprep.subr.mxu0 0.0
          %4000 = vmatpush1.msra.mxu0 0.0
          %4001 = vmatprep.subr.mxu0 0.0
          %4002 = vmatpush1.msra.mxu0 0.0
          %4003 = vmatprep.subr.mxu0 0.0
          %4004 = vmatpush1.msra.mxu0 0.0
          %4005 = vmatprep.subr.mxu0 0.0
          %4006 = vmatpush1.msra.mxu0 0.0
          %4007 = vmatprep.subr.mxu0 0.0
          %4008 = vmatpush1.msra.mxu0 0.0
          %4009 = vmatprep.subr.mxu0 0.0
          %4010 = vmatpush1.msra.mxu0 0.0
          %4011 = vmatprep.subr.mxu0 0.0
          %4012 = vmatpush1.msra.mxu0 0.0
          %4013 = vmatprep.subr.mxu0 0.0
          %4014 = vmatpush1.msra.mxu0 0.0
          %4015 = vmatprep.subr.mxu0 0.0
          %4016 = vmatpush1.msra.mxu0 0.0
          %4017 = vmatprep.subr.mxu0 0.0
          %4018 = vmatpush1.msra.mxu0 0.0
          %4019 = vmatprep.subr.mxu0 0.0
          %4020 = vmatpush1.msra.mxu0 0.0
          %4021 = vmatprep.subr.mxu0 0.0
          %4022 = vmatpush1.msra.mxu0 0.0
          %4023 = vmatprep.subr.mxu0 0.0
          %4024 = vmatpush1.msra.mxu0 0.0
          %4025 = vmatprep.subr.mxu0 0.0
          %4026 = vmatpush1.msra.mxu0 0.0
          %4027 = vmatprep.subr.mxu0 0.0
          %4028 = vmatpush1.msra.mxu0 0.0
          %4029 = vmatprep.subr.mxu0 0.0
          %4030 = vmatpush1.msra.mxu0 0.0
          %4031 = vmatprep.mubr.f32.mxu0 0.0
          %4032 = vmatmul.mubr.f32.gmra.mrb[0].mxu0 %v3839
          %v4033 = vpop.f32.mrb[0].mxu0
          %v4034 = vadd.f32 0.0, %v4033
          %v4035 = vpop.f32.mrb[0].mxu0
          %4036 = vdwg.mxu0
          %v4037 = vadd.f32 %v3845, %v3963
          %v4038 = vxor.u32 %v4037, 2147483648
          %v4039 = vmul.f32 %v4038, 1.442695
          %v4040 = vpow.pop %v4039
          %v4041 = vadd.f32 %v4040, 1.0
          %v4042 = vrcp.pop %v4041
          %v4043 = vmul.f32 1.0, %v4042
          %v4044 = vadd.f32 %v3846, %v3965
          %v4045 = vxor.u32 %v4044, 2147483648
          %v4046 = vmul.f32 %v4045, 1.442695
          %v4047 = vpow.pop %v4046
          %v4048 = vadd.f32 %v4047, 1.0
          %v4049 = vrcp.pop %v4048
          %v4050 = vmul.f32 1.0, %v4049
          %v4051 = vld [vmem:[%s339] sm:$0x1]
          %v4053 = vlaneseq
          %v4054 = vshrl.u32 %v4053, 7
          %v4055 = vsub.s32 0, %v4054
          %v4056 = vrot.slane %v4051, %v4055
          %v4058 = vadd.f32 %v4034, %v4056
          %v4059 = vmul.f32 %v4043, %v4058
          %v4060 = vadd.f32 %v3847, %v4059
          %v4061 = vtanh.pop %v4060
          %v4062 = vsub.f32 1.0, %v4050
          %v4063 = vmul.f32 %v4062, %v4061
          %v4064 = vmul.f32 %v4050, %v3839
          %v4065 = vadd.f32 %v4063, %v4064
          %vm4066 = vcmp.gt.s32.totalorder %v2205, 0
          %v4067 = vsel %vm4066, 1, 0
          %4068 = vset.pattern.permute.xlu0 0
          %4069 = vperm.xlu0 %4068, %v4067
          %v4070 = vpop.permute.xlu0 %4069
          %vm4071 = vcmp.eq.s32.totalorder %v4070, 1
          %v4072 = vsel %vm4071, %v4065, %v3839
          %v4073 = vsel %vm4071, %v4065, 0.0
          %v4074 = vld [vmem:[#allocation7] sm:$0xff]
          %v4075 = vadd.f32 %v4074, %v4073
          %4076 = vst [vmem:[#allocation7] sm:$0xff] %v4075
          %4077 = vst [vmem:[%s332] sm:$0xff] %v4072
        $region56: #{tpu_custom_call.1} parent=39 // pred_fallthru
          _
        %s4078 = sand.u32 %s182, 1
        %s4079 = scalar_lea.sflag [#allocation9], %s4078
        %s4080 = sand.u32 %s182, 1
        %s4081 = smul.addr %s4080, 8
        %s4082 = scalar_lea.vmem [#allocation8], %s4081
        // Predicated region
        $region57: #{tpu_custom_call.1} parent=39 // pred_check
          %p4083 = pneg %p166
        $region58: #{tpu_custom_call.1} parent=39 // pred_check_branch
          %4085 = sbr.rel (%p4083) target = $region60
        $region59: #{tpu_custom_call.1} parent=39 // pred_region
          %s4087 = ssub.s32 1024, 1024
          %4088 = vsyncadd [#allocation4], %s4087
          %s4089 = sshll.u32 [#allocation7], 4
          %s4090 = int_to_ptr.vmem [resolvable:$true] %s4089
          %4095 = dma.vmem_to_hbm [thread:$0]  %s4090, 1024, %s5, [#allocation4], 128, 128, 8
        $region60: #{tpu_custom_call.1} parent=39 // pred_fallthru
          _
        // Predicated region
        $region61: #{tpu_custom_call.1} parent=39 // pred_check
          %p4096 = pneg %p192
        $region62: #{tpu_custom_call.1} parent=39 // pred_check_branch
          %4098 = sbr.rel (%p4096) target = $region64
        $region63: #{tpu_custom_call.1} parent=39 // pred_region
          %s4100 = ssub.s32 128, 128
          %4101 = vsyncadd %s4079, %s4100
          %s4102 = smul.addr %s28, 128
          %s4103 = scalar_lea.hbm %s6, %s4102
          %s4105 = sshll.u32 %s4082, 4
          %s4106 = int_to_ptr.vmem [resolvable:$true] %s4105
          %4108 = dma.vmem_to_hbm [thread:$0]  %s4106, 128, %s4103, %s4079
        $region64: #{tpu_custom_call.1} parent=39 // pred_fallthru
          _
        // Predicated region
        $region65: #{tpu_custom_call.1} parent=39 // pred_check
          %p4109 = pneg %p166
        $region66: #{tpu_custom_call.1} parent=39 // pred_check_branch
          %4111 = sbr.rel (%p4109) target = $region68
        $region67: #{tpu_custom_call.1} parent=39 // pred_region
          %4112 = dma.done [#allocation4], 1024
        $region68: #{tpu_custom_call.1} parent=39 // pred_fallthru
          _
      $region40: #{tpu_custom_call.1} parent=5 // pred_fallthru
        _
      %p4113 = scmp.le.s32.totalorder 2, %s23
      // Predicated region
      $region69: #{tpu_custom_call.1} parent=5 // pred_check
        %p4114 = pneg %p4113
      $region70: #{tpu_custom_call.1} parent=5 // pred_check_branch
        %4116 = sbr.rel (%p4114) target = $region72
      $region71: #{tpu_custom_call.1} parent=5 // pred_region
        %s4117 = ssub.s32 %s23, 2
        // Predicated region
        $region73: #{tpu_custom_call.1} parent=71 // pred_check
          %p4118 = pneg %p198
        $region74: #{tpu_custom_call.1} parent=71 // pred_check_branch
          %4120 = sbr.rel (%p4118) target = $region76
        $region75: #{tpu_custom_call.1} parent=71 // pred_region
          %s4121 = sand.u32 %s183, 1
          %s4122 = scalar_lea.sflag [#allocation9], %s4121
          %s4123 = sand.u32 %s183, 1
          %s4124 = smul.addr %s4123, 8
          %s4125 = scalar_lea.vmem [#allocation8], %s4124
          %4126 = dma.done %s4122, 128
        $region76: #{tpu_custom_call.1} parent=71 // pred_fallthru
          _
      $region72: #{tpu_custom_call.1} parent=5 // pred_fallthru
        _
    $region6: #{tpu_custom_call.1} parent=1 // loop_footer
      %s27 = sadd.s32 1, %s23
    $region7: #{tpu_custom_call.1} parent=1 // loop_footer_branch
      %22 = sbr.rel target = $region3
    $region8: #{tpu_custom_call.1} parent=1 // loop_exit
      _
    %4127 = vsyncpa [#allocation3], 1
    %s4128 = scalar_lea.sflag [#allocation3], 1
    %4129 = vsyncpa %s4128, 1
    %4130 = vsyncpa [#allocation6], 1
    %s4131 = scalar_lea.sflag [#allocation6], 1
    %4132 = vsyncpa %s4131, 1
    %4133 = vsyncpa [#allocation4], 1
    %s4134 = scalar_lea.sflag [#allocation4], 1
    %4135 = vsyncpa %s4134, 1
    %4136 = vsyncpa [#allocation9], 1
    %s4137 = scalar_lea.sflag [#allocation9], 1
    %4138 = vsyncpa %s4137, 1

</llo_original>
